<compile_context>
chip_gen: v7x
topology: tpu7x:2x2x1
jax: 0.10.0
libtpu: 0.0.40
codegen_flags: <defaults>
</compile_context>

<pallas_src>
import functools

import jax
import jax.numpy as jnp
from jax.experimental import pallas as pl
from jax.experimental.pallas import tpu as pltpu


# ----------------------------- Fused kernel -------------------------------- #
def _fused_kernel(*refs, T, B, H, Vp, num_layers, dot_dtype):
    n_in = 4 + 3 * num_layers + 2
    in_refs = refs[:n_in]
    logits_ref, hn_ref, cn_ref = refs[n_in:n_in + 3]
    (hist_sc,) = refs[n_in + 3:]

    tok_ref, emb_ref, h0_ref, c0_ref = in_refs[:4]
    layer_refs = [tuple(in_refs[4 + 3 * l: 4 + 3 * (l + 1)]) for l in range(num_layers)]
    wd_ref, bd_ref = in_refs[4 + 3 * num_layers:]

    TB = T * B
    H2 = 2 * H            # per-gate block (fwd|rev)
    G = 4 * H2            # total combined gate width (8H)

    # Lane masks (built once): reverse-direction lanes in gate width and output width.
    lane_g = jax.lax.broadcasted_iota(jnp.int32, (B, G), dimension=1)
    rev_g = (lane_g % H2) >= H
    lane_h = jax.lax.broadcasted_iota(jnp.int32, (B, H2), dimension=1)
    rev_h = lane_h >= H

    # Embedding lookup as a lane-dense one-hot MXU matmul (V padded to Vp, mult. of 128).
    vocab_iota = jax.lax.broadcasted_iota(jnp.int32, (TB, Vp), dimension=1)
    onehot = (vocab_iota == tok_ref[...]).astype(dot_dtype)
    layer_x = jnp.dot(onehot, emb_ref[...],
                      preferred_element_type=jnp.float32)          # (TB, E) f32

    for l in range(num_layers):
        wih_ref, whh_ref, b_ref = layer_refs[l]
        last_layer = (l == num_layers - 1)

        # Hoisted input->gates projection for both directions (+ bias), once per layer.
        gxraw = jnp.dot(layer_x.astype(dot_dtype), wih_ref[...],
                        preferred_element_type=jnp.float32) + b_ref[...]   # (TB, G) f32

        # Hoisted fwd/rev time swizzle: step t uses fwd gates from time t and rev gates
        # from time T-1-t.  Held as values -> no scratch traffic in the recurrence.
        gx_steps = [
            jnp.where(rev_g,
                      gxraw[(T - 1 - t) * B:(T - t) * B, :],
                      gxraw[t * B:(t + 1) * B, :])
            for t in range(T)
        ]

        whh = whh_ref[...]          # (2H, 8H) block-structured, dot_dtype
        hs = h0_ref[l]              # (B, 2H) = [h_fwd | h_rev], f32
        cs = c0_ref[l]              # (B, 2H), f32

        outs = []
        for t in range(T):          # static unroll; switch to lax.fori_loop(unroll=True) if T grows
            gates = gx_steps[t] + jnp.dot(hs.astype(dot_dtype), whh,
                                          preferred_element_type=jnp.float32)  # (B, 8H)
            # One EUP pass: i/f/o columns were pre-scaled by 0.5 offline, so
            # sigmoid(orig) = 0.5*tanh(gates) + 0.5; g column is plain tanh.
            th = jnp.tanh(gates)
            i_g = 0.5 * th[:, 0 * H2:1 * H2] + 0.5
            f_g = 0.5 * th[:, 1 * H2:2 * H2] + 0.5
            g_g = th[:, 2 * H2:3 * H2]
            o_g = 0.5 * th[:, 3 * H2:4 * H2] + 0.5

            cs = f_g * cs + i_g * g_g
            hs = o_g * jnp.tanh(cs)
            outs.append(hs)

        # Final states, written once per layer.
        hn_ref[l] = hs
        cn_ref[l] = cs

        # Hoisted post-loop writeback: time-align the reverse half (rev step t produced
        # time T-1-t) and store one whole (B,2H) slab per position, seq-major
        # (row = pos*B + b), for the next layer / the dense.
        for t in range(T):
            hist_sc[t * B:(t + 1) * B, :] = jnp.where(rev_h, outs[T - 1 - t], outs[t])

        if not last_layer:
            layer_x = hist_sc[...]                  # (TB, 2H) input to the next layer

    # Final dense with the x.view(bs, -1) permutation folded in: flat row r, position p
    # equals seq-major row r*T + p, so accumulate T (B,2H)x(2H,Vp) matmuls over strided
    # row slices of hist_sc.  (Faithfully reproduces the module's view(bs,-1) quirk.)
    acc = bd_ref[...] + jnp.dot(
        hist_sc[pl.ds(0, B, stride=T), :].astype(dot_dtype),
        wd_ref[0:H2, :], preferred_element_type=jnp.float32)
    for p in range(1, T):
        acc = acc + jnp.dot(
            hist_sc[pl.ds(p, B, stride=T), :].astype(dot_dtype),
            wd_ref[p * H2:(p + 1) * H2, :], preferred_element_type=jnp.float32)
    logits_ref[...] = acc


# ----------------------------- Weight packing -------------------------------- #
def _interleave_gates(wf, wb, H):
    """(K, 4H) fwd + (K, 4H) rev -> (K, 8H) gate-major: [i_f i_b f_f f_b g_f g_b o_f o_b]."""
    K = wf.shape[0]
    return jnp.stack([wf.reshape(K, 4, H), wb.reshape(K, 4, H)], axis=2).reshape(K, 8 * H)


def fuse_params(params, hidden, num_layers=2, dot_dtype=jnp.bfloat16):
    """Pack per-direction LSTM weights into the fused kernel layout (done once, offline).

    - gate-major interleave so one combined state [h_f|h_b] drives both directions;
    - i/f/o columns scaled by 0.5 (sigmoid-via-tanh trick);
    - matmul weights stored in dot_dtype (bf16 by default), biases kept f32;
    - vocab dimension padded to a multiple of 128 lanes.
    """
    H = hidden
    emb = params["embedding"]
    V, E = emb.shape
    Vp = max(128, ((V + 127) // 128) * 128)

    emb_p = jnp.zeros((Vp, E), jnp.float32).at[:V].set(emb).astype(dot_dtype)
    wd = params["dense_w_t"]                                    # (T*2H, V)
    wd_p = jnp.zeros((wd.shape[0], Vp), jnp.float32).at[:, :V].set(wd).astype(dot_dtype)
    bd_p = jnp.zeros((1, Vp), jnp.float32).at[:, :V].set(params["dense_b"].reshape(1, -1))

    fused = {"embedding": emb_p, "dense_w_t": wd_p, "dense_b": bd_p,
             "layers": [], "V": V, "Vp": Vp, "dot_dtype": dot_dtype}

    # sigmoid(x) = 0.5*tanh(x/2)+0.5  ->  scale i/f/o columns by 0.5 (g block untouched).
    col = jnp.arange(8 * H)
    g_block = (col >= 4 * H) & (col < 6 * H)
    scale = jnp.where(g_block, 1.0, 0.5).astype(jnp.float32)

    zero = jnp.zeros((H, 4 * H), jnp.float32)
    for l in range(num_layers):
        wih_f, whh_f, b_f = params["lstm"][(l, 0)]
        wih_b, whh_b, b_b = params["lstm"][(l, 1)]
        wih_comb = _interleave_gates(wih_f, wih_b, H) * scale                     # (In, 8H)
        whh_comb = _interleave_gates(jnp.concatenate([whh_f, zero], axis=0),
                                     jnp.concatenate([zero, whh_b], axis=0), H) * scale
        b_comb = _interleave_gates(b_f, b_b, H) * scale                           # (1, 8H)
        fused["layers"].append((wih_comb.astype(dot_dtype),
                                whh_comb.astype(dot_dtype),
                                b_comb))                                          # bias f32
    return fused


# ----------------------------- Wrapper -------------------------------------- #
def poetry_generator_forward(fused, x_tokens, previous_state, *, bs, hidden, num_layers=2):
    """Mirrors PoetryGenerator.forward in training mode (inter-layer dropout omitted)."""
    H = hidden
    L = num_layers
    h0, c0 = previous_state                              # (2L, bs, H)
    T = x_tokens.size // bs                               # mirrors x.view(-1, bs, embs)
    V, Vp = fused["V"], fused["Vp"]
    dot_dtype = fused["dot_dtype"]

    tok = x_tokens.reshape(T * bs, 1).astype(jnp.int32)

    # Pack per-direction initial states into per-layer [h_f | h_b] (tiny glue).
    def pack(s):
        return s.reshape(L, 2, bs, H).transpose(0, 2, 1, 3).reshape(L, bs, 2 * H)

    def unpack(s):
        return s.reshape(L, bs, 2, H).transpose(0, 2, 1, 3).reshape(2 * L, bs, H)

    args = [tok, fused["embedding"], pack(h0), pack(c0)]
    for (wih, whh, b) in fused["layers"]:
        args += [wih, whh, b]
    args += [fused["dense_w_t"], fused["dense_b"]]

    kernel = functools.partial(_fused_kernel, T=T, B=bs, H=H, Vp=Vp,
                               num_layers=L, dot_dtype=dot_dtype)
    vmem_specs = [pl.BlockSpec(memory_space=pltpu.MemorySpace.VMEM) for _ in args]

    logits_p, hn_pk, cn_pk = pl.pallas_call(
        kernel,
        out_shape=(jax.ShapeDtypeStruct((bs, Vp), jnp.float32),
                   jax.ShapeDtypeStruct((L, bs, 2 * H), jnp.float32),
                   jax.ShapeDtypeStruct((L, bs, 2 * H), jnp.float32)),
        in_specs=vmem_specs,
        out_specs=(pl.BlockSpec(memory_space=pltpu.MemorySpace.VMEM),
                   pl.BlockSpec(memory_space=pltpu.MemorySpace.VMEM),
                   pl.BlockSpec(memory_space=pltpu.MemorySpace.VMEM)),
        scratch_shapes=[pltpu.VMEM((T * bs, 2 * H), jnp.float32)],   # seq-major layer output
    )(*args)

    return logits_p[:, :V], (unpack(hn_pk), unpack(cn_pk))


# ----------------------------- Parameter init ------------------------------ #
def init_params(key, vocab_size, embs, hidden, seq_length, num_layers=2):
    params = {"lstm": {}}
    key, k = jax.random.split(key)
    params["embedding"] = jax.random.uniform(k, (vocab_size, embs), jnp.float32, -1.0, 1.0)
    for l in range(num_layers):
        in_sz = embs if l == 0 else 2 * hidden
        for d in range(2):
            key, k1, k2, k3, k4 = jax.random.split(key, 5)
            s = 0.1
            w_ih = jax.random.uniform(k1, (4 * hidden, in_sz), jnp.float32, -s, s)
            w_hh = jax.random.uniform(k2, (4 * hidden, hidden), jnp.float32, -s, s)
            b_ih = jax.random.uniform(k3, (4 * hidden,), jnp.float32, -s, s)
            b_hh = jax.random.uniform(k4, (4 * hidden,), jnp.float32, -s, s)
            params["lstm"][(l, d)] = (w_ih.T, w_hh.T, (b_ih + b_hh).reshape(1, 4 * hidden))
    key, k1, k2 = jax.random.split(key, 3)
    d_in = 2 * hidden * seq_length
    s = 0.05
    params["dense_w_t"] = jax.random.uniform(k1, (d_in, vocab_size), jnp.float32, -s, s)
    params["dense_b"] = jax.random.uniform(k2, (vocab_size,), jnp.float32, -s, s)
    return params


# ----------------------------- Pure-JAX reference --------------------------- #
def _ref_lstm_dir(x, h0, c0, w_ih_t, w_hh_t, b, dot_dtype):
    H = h0.shape[-1]
    wih = w_ih_t.astype(dot_dtype)
    whh = w_hh_t.astype(dot_dtype)

    def step(carry, x_t):
        h, c = carry
        gates = (jnp.dot(x_t.astype(dot_dtype), wih, preferred_element_type=jnp.float32)
                 + jnp.dot(h.astype(dot_dtype), whh, preferred_element_type=jnp.float32)
                 + b)
        i = jax.nn.sigmoid(gates[:, :H])
        f = jax.nn.sigmoid(gates[:, H:2 * H])
        g = jnp.tanh(gates[:, 2 * H:3 * H])
        o = jax.nn.sigmoid(gates[:, 3 * H:])
        c = f * c + i * g
        h = o * jnp.tanh(c)
        return (h, c), h

    (hN, cN), out = jax.lax.scan(step, (h0, c0), x)
    return out, hN, cN


def _ref_forward(params, x_tokens, previous_state, *, bs, num_layers=2,
                 dot_dtype=jnp.float32):
    """Pure-JAX reference mirroring PoetryGenerator.forward with the same matmul-operand
    precision policy as the kernel (f32 math, operands cast to dot_dtype at dot sites)."""
    h0_all, c0_all = previous_state
    emb = params["embedding"].astype(dot_dtype).astype(jnp.float32)
    layer_in = emb[x_tokens].reshape(-1, bs, emb.shape[-1])
    h_f, c_f = [], []
    for l in range(num_layers):
        outs = []
        for d in range(2):
            idx = 2 * l + d
            w_ih_t, w_hh_t, b = params["lstm"][(l, d)]
            inp = layer_in if d == 0 else jnp.flip(layer_in, axis=0)
            out, hN, cN = _ref_lstm_dir(inp, h0_all[idx], c0_all[idx],
                                        w_ih_t, w_hh_t, b, dot_dtype)
            if d == 1:
                out = jnp.flip(out, axis=0)
            outs.append(out)
            h_f.append(hN)
            c_f.append(cN)
        layer_in = jnp.concatenate(outs, axis=-1)
    flat = layer_in.reshape(bs, -1)
    logits = (jnp.dot(flat.astype(dot_dtype), params["dense_w_t"].astype(dot_dtype),
                      preferred_element_type=jnp.float32) + params["dense_b"])
    return logits, (jnp.stack(h_f, 0), jnp.stack(c_f, 0))


# ----------------------------------- main ----------------------------------- #
if __name__ == "__main__":
    vocab_size, embs, hidden, seq_len, bs, layers = 32, 16, 32, 9, 2, 2
    seq_length = seq_len - 1

    key = jax.random.PRNGKey(0)
    key, kp, kx = jax.random.split(key, 3)
    params = init_params(kp, vocab_size, embs, hidden, seq_length, layers)

    # Token ids, sequence-major like nn.LSTM's default layout.
    x_tokens = jax.random.randint(kx, (seq_length, bs), 0, vocab_size, jnp.int32)

    # set_hidden_states(): zeros of shape (num_layers*2, bs, hidden)
    h0 = jnp.zeros((layers * 2, bs, hidden), jnp.float32)
    c0 = jnp.zeros((layers * 2, bs, hidden), jnp.float32)

    # --- 1) f32-operand build: exactness check vs. PyTorch-f32 semantics reference ---
    fused_f32 = fuse_params(params, hidden, layers, dot_dtype=jnp.float32)
    logits32, (h32, c32) = poetry_generator_forward(
        fused_f32, x_tokens, (h0, c0), bs=bs, hidden=hidden, num_layers=layers)
    jax.block_until_ready((logits32, h32, c32))

    ref_logits, (ref_h, ref_c) = _ref_forward(params, x_tokens, (h0, c0),
                                              bs=bs, num_layers=layers,
                                              dot_dtype=jnp.float32)
    assert logits32.shape == (bs, vocab_size)
    assert h32.shape == (layers * 2, bs, hidden)
    assert c32.shape == (layers * 2, bs, hidden)
    assert jnp.allclose(logits32, ref_logits, rtol=1e-3, atol=1e-3)
    assert jnp.allclose(h32, ref_h, rtol=1e-3, atol=1e-3)
    assert jnp.allclose(c32, ref_c, rtol=1e-3, atol=1e-3)

    # --- 2) bf16-operand build (perf config): check vs. precision-matched reference ---
    fused_bf16 = fuse_params(params, hidden, layers, dot_dtype=jnp.bfloat16)
    logits_bf, (h_bf, c_bf) = poetry_generator_forward(
        fused_bf16, x_tokens, (h0, c0), bs=bs, hidden=hidden, num_layers=layers)
    jax.block_until_ready((logits_bf, h_bf, c_bf))

    ref_logits_bf, (ref_h_bf, ref_c_bf) = _ref_forward(params, x_tokens, (h0, c0),
                                                       bs=bs, num_layers=layers,
                                                       dot_dtype=jnp.bfloat16)
    assert jnp.allclose(logits_bf, ref_logits_bf, rtol=5e-3, atol=5e-3)
    assert jnp.allclose(h_bf, ref_h_bf, rtol=5e-3, atol=5e-3)
    assert jnp.allclose(c_bf, ref_c_bf, rtol=5e-3, atol=5e-3)

    print("KERNEL_OK")
</pallas_src>

<mosaic_0001>
module attributes {stable_mosaic.version = 11 : i64} {
  func.func @_fused_kernel(%arg0: memref<16x1xi32, #tpu.memory_space<vmem>>, %arg1: memref<128x16xf32, #tpu.memory_space<vmem>>, %arg2: memref<2x2x64xf32, #tpu.memory_space<vmem>>, %arg3: memref<2x2x64xf32, #tpu.memory_space<vmem>>, %arg4: memref<16x256xf32, #tpu.memory_space<vmem>>, %arg5: memref<64x256xf32, #tpu.memory_space<vmem>>, %arg6: memref<1x256xf32, #tpu.memory_space<vmem>>, %arg7: memref<64x256xf32, #tpu.memory_space<vmem>>, %arg8: memref<64x256xf32, #tpu.memory_space<vmem>>, %arg9: memref<1x256xf32, #tpu.memory_space<vmem>>, %arg10: memref<512x128xf32, #tpu.memory_space<vmem>>, %arg11: memref<1x128xf32, #tpu.memory_space<vmem>>, %arg12: memref<2x128xf32, #tpu.memory_space<vmem>>, %arg13: memref<2x2x64xf32, #tpu.memory_space<vmem>>, %arg14: memref<2x2x64xf32, #tpu.memory_space<vmem>>, %arg15: memref<16x64xf32, #tpu.memory_space<vmem>>) attributes {dimension_semantics = [], scalar_prefetch = 0 : i64, scratch_operands = 1 : i64, tpu.core_type = #tpu.core_type<tc>} {
    %0 = tpu.iota {dimensions = array<i32: 1>} : vector<2x256xi32>
    %c64_i32 = arith.constant 64 : i32
    %c0_i32 = arith.constant 0 : i32
    %1 = arith.cmpi eq, %c64_i32, %c0_i32 : i32
    %c1_i32 = arith.constant 1 : i32
    %2 = arith.select %1, %c1_i32, %c64_i32 : i32
    %3 = vector.broadcast %2 : i32 to vector<2x256xi32>
    %4 = arith.remsi %0, %3 : vector<2x256xi32>
    %c0_i32_0 = arith.constant 0 : i32
    %5 = vector.broadcast %c0_i32_0 : i32 to vector<2x256xi32>
    %6 = arith.cmpi ne, %4, %5 : vector<2x256xi32>
    %c0_i32_1 = arith.constant 0 : i32
    %7 = vector.broadcast %c0_i32_1 : i32 to vector<2x256xi32>
    %8 = arith.cmpi slt, %4, %7 : vector<2x256xi32>
    %c0_i32_2 = arith.constant 0 : i32
    %9 = arith.cmpi slt, %2, %c0_i32_2 : i32
    %10 = vector.broadcast %9 : i1 to vector<2x256xi1>
    %11 = vector.broadcast %10 : vector<2x256xi1> to vector<2x256xi1>
    %12 = arith.xori %8, %11 : vector<2x256xi1>
    %13 = arith.andi %12, %6 : vector<2x256xi1>
    %14 = vector.broadcast %2 : i32 to vector<2x256xi32>
    %15 = arith.addi %4, %14 : vector<2x256xi32>
    %16 = arith.select %13, %15, %4 : vector<2x256xi1>, vector<2x256xi32>
    %c32_i32 = arith.constant 32 : i32
    %17 = vector.broadcast %c32_i32 : i32 to vector<2x256xi32>
    %18 = arith.cmpi sge, %16, %17 : vector<2x256xi32>
    %19 = tpu.iota {dimensions = array<i32: 1>} : vector<2x64xi32>
    %c32_i32_3 = arith.constant 32 : i32
    %20 = vector.broadcast %c32_i32_3 : i32 to vector<2x64xi32>
    %21 = arith.cmpi sge, %19, %20 : vector<2x64xi32>
    %22 = tpu.iota {dimensions = array<i32: 1>} : vector<16x128xi32>
    %c0 = arith.constant 0 : index
    %c0_4 = arith.constant 0 : index
    %23 = vector.load %arg0[%c0, %c0_4] : memref<16x1xi32, #tpu.memory_space<vmem>>, vector<16x1xi32>
    %24 = vector.broadcast %23 : vector<16x1xi32> to vector<16x128xi32>
    %25 = arith.cmpi eq, %22, %24 : vector<16x128xi32>
    %26 = arith.extui %25 : vector<16x128xi1> to vector<16x128xi32>
    %27 = arith.sitofp %26 : vector<16x128xi32> to vector<16x128xf32>
    %c0_5 = arith.constant 0 : index
    %c0_6 = arith.constant 0 : index
    %28 = vector.load %arg1[%c0_5, %c0_6] : memref<128x16xf32, #tpu.memory_space<vmem>>, vector<128x16xf32>
    %cst = arith.constant dense<0.000000e+00> : vector<16x16xf32>
    %29 = tpu.matmul %27, %28, %cst {dimension_numbers = #tpu.dot_dimension_numbers<[1], [0], [0], [1], [0, 0, 1, 1], [], []>} : vector<16x128xf32>, vector<128x16xf32>, vector<16x16xf32> -> vector<16x16xf32>
    %c0_7 = arith.constant 0 : index
    %c0_8 = arith.constant 0 : index
    %30 = vector.load %arg4[%c0_7, %c0_8] : memref<16x256xf32, #tpu.memory_space<vmem>>, vector<16x256xf32>
    %cst_9 = arith.constant dense<0.000000e+00> : vector<16x256xf32>
    %31 = tpu.matmul %29, %30, %cst_9 {dimension_numbers = #tpu.dot_dimension_numbers<[1], [0], [0], [1], [0, 0, 1, 1], [], []>} : vector<16x16xf32>, vector<16x256xf32>, vector<16x256xf32> -> vector<16x256xf32>
    %c0_10 = arith.constant 0 : index
    %c0_11 = arith.constant 0 : index
    %32 = vector.load %arg6[%c0_10, %c0_11] : memref<1x256xf32, #tpu.memory_space<vmem>>, vector<1x256xf32>
    %33 = vector.broadcast %32 : vector<1x256xf32> to vector<16x256xf32>
    %34 = arith.addf %31, %33 : vector<16x256xf32>
    %35 = vector.extract_strided_slice %34 {offsets = [14, 0], sizes = [2, 256], strides = [1, 1]} : vector<16x256xf32> to vector<2x256xf32>
    %36 = vector.extract_strided_slice %34 {offsets = [0, 0], sizes = [2, 256], strides = [1, 1]} : vector<16x256xf32> to vector<2x256xf32>
    %37 = arith.select %18, %35, %36 : vector<2x256xi1>, vector<2x256xf32>
    %38 = vector.extract_strided_slice %34 {offsets = [12, 0], sizes = [2, 256], strides = [1, 1]} : vector<16x256xf32> to vector<2x256xf32>
    %39 = vector.extract_strided_slice %34 {offsets = [2, 0], sizes = [2, 256], strides = [1, 1]} : vector<16x256xf32> to vector<2x256xf32>
    %40 = arith.select %18, %38, %39 : vector<2x256xi1>, vector<2x256xf32>
    %41 = vector.extract_strided_slice %34 {offsets = [10, 0], sizes = [2, 256], strides = [1, 1]} : vector<16x256xf32> to vector<2x256xf32>
    %42 = vector.extract_strided_slice %34 {offsets = [4, 0], sizes = [2, 256], strides = [1, 1]} : vector<16x256xf32> to vector<2x256xf32>
    %43 = arith.select %18, %41, %42 : vector<2x256xi1>, vector<2x256xf32>
    %44 = vector.extract_strided_slice %34 {offsets = [8, 0], sizes = [2, 256], strides = [1, 1]} : vector<16x256xf32> to vector<2x256xf32>
    %45 = vector.extract_strided_slice %34 {offsets = [6, 0], sizes = [2, 256], strides = [1, 1]} : vector<16x256xf32> to vector<2x256xf32>
    %46 = arith.select %18, %44, %45 : vector<2x256xi1>, vector<2x256xf32>
    %47 = vector.extract_strided_slice %34 {offsets = [6, 0], sizes = [2, 256], strides = [1, 1]} : vector<16x256xf32> to vector<2x256xf32>
    %48 = vector.extract_strided_slice %34 {offsets = [8, 0], sizes = [2, 256], strides = [1, 1]} : vector<16x256xf32> to vector<2x256xf32>
    %49 = arith.select %18, %47, %48 : vector<2x256xi1>, vector<2x256xf32>
    %50 = vector.extract_strided_slice %34 {offsets = [4, 0], sizes = [2, 256], strides = [1, 1]} : vector<16x256xf32> to vector<2x256xf32>
    %51 = vector.extract_strided_slice %34 {offsets = [10, 0], sizes = [2, 256], strides = [1, 1]} : vector<16x256xf32> to vector<2x256xf32>
    %52 = arith.select %18, %50, %51 : vector<2x256xi1>, vector<2x256xf32>
    %53 = vector.extract_strided_slice %34 {offsets = [2, 0], sizes = [2, 256], strides = [1, 1]} : vector<16x256xf32> to vector<2x256xf32>
    %54 = vector.extract_strided_slice %34 {offsets = [12, 0], sizes = [2, 256], strides = [1, 1]} : vector<16x256xf32> to vector<2x256xf32>
    %55 = arith.select %18, %53, %54 : vector<2x256xi1>, vector<2x256xf32>
    %56 = vector.extract_strided_slice %34 {offsets = [0, 0], sizes = [2, 256], strides = [1, 1]} : vector<16x256xf32> to vector<2x256xf32>
    %57 = vector.extract_strided_slice %34 {offsets = [14, 0], sizes = [2, 256], strides = [1, 1]} : vector<16x256xf32> to vector<2x256xf32>
    %58 = arith.select %18, %56, %57 : vector<2x256xi1>, vector<2x256xf32>
    %c0_12 = arith.constant 0 : index
    %c0_13 = arith.constant 0 : index
    %59 = vector.load %arg5[%c0_12, %c0_13] : memref<64x256xf32, #tpu.memory_space<vmem>>, vector<64x256xf32>
    %c0_14 = arith.constant 0 : index
    %c0_15 = arith.constant 0 : index
    %c0_16 = arith.constant 0 : index
    %60 = vector.load %arg2[%c0_14, %c0_15, %c0_16] : memref<2x2x64xf32, #tpu.memory_space<vmem>>, vector<1x2x64xf32>
    %61 = vector.shape_cast %60 : vector<1x2x64xf32> to vector<2x64xf32>
    %c0_17 = arith.constant 0 : index
    %c0_18 = arith.constant 0 : index
    %c0_19 = arith.constant 0 : index
    %62 = vector.load %arg3[%c0_17, %c0_18, %c0_19] : memref<2x2x64xf32, #tpu.memory_space<vmem>>, vector<1x2x64xf32>
    %63 = vector.shape_cast %62 : vector<1x2x64xf32> to vector<2x64xf32>
    %cst_20 = arith.constant dense<0.000000e+00> : vector<2x256xf32>
    %64 = tpu.matmul %61, %59, %cst_20 {dimension_numbers = #tpu.dot_dimension_numbers<[1], [0], [0], [1], [0, 0, 1, 1], [], []>} : vector<2x64xf32>, vector<64x256xf32>, vector<2x256xf32> -> vector<2x256xf32>
    %65 = arith.addf %37, %64 : vector<2x256xf32>
    %66 = math.tanh %65 : vector<2x256xf32>
    %67 = vector.extract_strided_slice %66 {offsets = [0, 0], sizes = [2, 64], strides = [1, 1]} : vector<2x256xf32> to vector<2x64xf32>
    %cst_21 = arith.constant 5.000000e-01 : f32
    %68 = vector.broadcast %cst_21 : f32 to vector<2x64xf32>
    %69 = arith.mulf %68, %67 : vector<2x64xf32>
    %cst_22 = arith.constant 5.000000e-01 : f32
    %70 = vector.broadcast %cst_22 : f32 to vector<2x64xf32>
    %71 = arith.addf %69, %70 : vector<2x64xf32>
    %72 = vector.extract_strided_slice %66 {offsets = [0, 64], sizes = [2, 64], strides = [1, 1]} : vector<2x256xf32> to vector<2x64xf32>
    %cst_23 = arith.constant 5.000000e-01 : f32
    %73 = vector.broadcast %cst_23 : f32 to vector<2x64xf32>
    %74 = arith.mulf %73, %72 : vector<2x64xf32>
    %cst_24 = arith.constant 5.000000e-01 : f32
    %75 = vector.broadcast %cst_24 : f32 to vector<2x64xf32>
    %76 = arith.addf %74, %75 : vector<2x64xf32>
    %77 = vector.extract_strided_slice %66 {offsets = [0, 128], sizes = [2, 64], strides = [1, 1]} : vector<2x256xf32> to vector<2x64xf32>
    %78 = vector.extract_strided_slice %66 {offsets = [0, 192], sizes = [2, 64], strides = [1, 1]} : vector<2x256xf32> to vector<2x64xf32>
    %cst_25 = arith.constant 5.000000e-01 : f32
    %79 = vector.broadcast %cst_25 : f32 to vector<2x64xf32>
    %80 = arith.mulf %79, %78 : vector<2x64xf32>
    %cst_26 = arith.constant 5.000000e-01 : f32
    %81 = vector.broadcast %cst_26 : f32 to vector<2x64xf32>
    %82 = arith.addf %80, %81 : vector<2x64xf32>
    %83 = arith.mulf %76, %63 : vector<2x64xf32>
    %84 = arith.mulf %71, %77 : vector<2x64xf32>
    %85 = arith.addf %83, %84 : vector<2x64xf32>
    %86 = math.tanh %85 : vector<2x64xf32>
    %87 = arith.mulf %82, %86 : vector<2x64xf32>
    %cst_27 = arith.constant dense<0.000000e+00> : vector<2x256xf32>
    %88 = tpu.matmul %87, %59, %cst_27 {dimension_numbers = #tpu.dot_dimension_numbers<[1], [0], [0], [1], [0, 0, 1, 1], [], []>} : vector<2x64xf32>, vector<64x256xf32>, vector<2x256xf32> -> vector<2x256xf32>
    %89 = arith.addf %40, %88 : vector<2x256xf32>
    %90 = math.tanh %89 : vector<2x256xf32>
    %91 = vector.extract_strided_slice %90 {offsets = [0, 0], sizes = [2, 64], strides = [1, 1]} : vector<2x256xf32> to vector<2x64xf32>
    %cst_28 = arith.constant 5.000000e-01 : f32
    %92 = vector.broadcast %cst_28 : f32 to vector<2x64xf32>
    %93 = arith.mulf %92, %91 : vector<2x64xf32>
    %cst_29 = arith.constant 5.000000e-01 : f32
    %94 = vector.broadcast %cst_29 : f32 to vector<2x64xf32>
    %95 = arith.addf %93, %94 : vector<2x64xf32>
    %96 = vector.extract_strided_slice %90 {offsets = [0, 64], sizes = [2, 64], strides = [1, 1]} : vector<2x256xf32> to vector<2x64xf32>
    %cst_30 = arith.constant 5.000000e-01 : f32
    %97 = vector.broadcast %cst_30 : f32 to vector<2x64xf32>
    %98 = arith.mulf %97, %96 : vector<2x64xf32>
    %cst_31 = arith.constant 5.000000e-01 : f32
    %99 = vector.broadcast %cst_31 : f32 to vector<2x64xf32>
    %100 = arith.addf %98, %99 : vector<2x64xf32>
    %101 = vector.extract_strided_slice %90 {offsets = [0, 128], sizes = [2, 64], strides = [1, 1]} : vector<2x256xf32> to vector<2x64xf32>
    %102 = vector.extract_strided_slice %90 {offsets = [0, 192], sizes = [2, 64], strides = [1, 1]} : vector<2x256xf32> to vector<2x64xf32>
    %cst_32 = arith.constant 5.000000e-01 : f32
    %103 = vector.broadcast %cst_32 : f32 to vector<2x64xf32>
    %104 = arith.mulf %103, %102 : vector<2x64xf32>
    %cst_33 = arith.constant 5.000000e-01 : f32
    %105 = vector.broadcast %cst_33 : f32 to vector<2x64xf32>
    %106 = arith.addf %104, %105 : vector<2x64xf32>
    %107 = arith.mulf %100, %85 : vector<2x64xf32>
    %108 = arith.mulf %95, %101 : vector<2x64xf32>
    %109 = arith.addf %107, %108 : vector<2x64xf32>
    %110 = math.tanh %109 : vector<2x64xf32>
    %111 = arith.mulf %106, %110 : vector<2x64xf32>
    %cst_34 = arith.constant dense<0.000000e+00> : vector<2x256xf32>
    %112 = tpu.matmul %111, %59, %cst_34 {dimension_numbers = #tpu.dot_dimension_numbers<[1], [0], [0], [1], [0, 0, 1, 1], [], []>} : vector<2x64xf32>, vector<64x256xf32>, vector<2x256xf32> -> vector<2x256xf32>
    %113 = arith.addf %43, %112 : vector<2x256xf32>
    %114 = math.tanh %113 : vector<2x256xf32>
    %115 = vector.extract_strided_slice %114 {offsets = [0, 0], sizes = [2, 64], strides = [1, 1]} : vector<2x256xf32> to vector<2x64xf32>
    %cst_35 = arith.constant 5.000000e-01 : f32
    %116 = vector.broadcast %cst_35 : f32 to vector<2x64xf32>
    %117 = arith.mulf %116, %115 : vector<2x64xf32>
    %cst_36 = arith.constant 5.000000e-01 : f32
    %118 = vector.broadcast %cst_36 : f32 to vector<2x64xf32>
    %119 = arith.addf %117, %118 : vector<2x64xf32>
    %120 = vector.extract_strided_slice %114 {offsets = [0, 64], sizes = [2, 64], strides = [1, 1]} : vector<2x256xf32> to vector<2x64xf32>
    %cst_37 = arith.constant 5.000000e-01 : f32
    %121 = vector.broadcast %cst_37 : f32 to vector<2x64xf32>
    %122 = arith.mulf %121, %120 : vector<2x64xf32>
    %cst_38 = arith.constant 5.000000e-01 : f32
    %123 = vector.broadcast %cst_38 : f32 to vector<2x64xf32>
    %124 = arith.addf %122, %123 : vector<2x64xf32>
    %125 = vector.extract_strided_slice %114 {offsets = [0, 128], sizes = [2, 64], strides = [1, 1]} : vector<2x256xf32> to vector<2x64xf32>
    %126 = vector.extract_strided_slice %114 {offsets = [0, 192], sizes = [2, 64], strides = [1, 1]} : vector<2x256xf32> to vector<2x64xf32>
    %cst_39 = arith.constant 5.000000e-01 : f32
    %127 = vector.broadcast %cst_39 : f32 to vector<2x64xf32>
    %128 = arith.mulf %127, %126 : vector<2x64xf32>
    %cst_40 = arith.constant 5.000000e-01 : f32
    %129 = vector.broadcast %cst_40 : f32 to vector<2x64xf32>
    %130 = arith.addf %128, %129 : vector<2x64xf32>
    %131 = arith.mulf %124, %109 : vector<2x64xf32>
    %132 = arith.mulf %119, %125 : vector<2x64xf32>
    %133 = arith.addf %131, %132 : vector<2x64xf32>
    %134 = math.tanh %133 : vector<2x64xf32>
    %135 = arith.mulf %130, %134 : vector<2x64xf32>
    %cst_41 = arith.constant dense<0.000000e+00> : vector<2x256xf32>
    %136 = tpu.matmul %135, %59, %cst_41 {dimension_numbers = #tpu.dot_dimension_numbers<[1], [0], [0], [1], [0, 0, 1, 1], [], []>} : vector<2x64xf32>, vector<64x256xf32>, vector<2x256xf32> -> vector<2x256xf32>
    %137 = arith.addf %46, %136 : vector<2x256xf32>
    %138 = math.tanh %137 : vector<2x256xf32>
    %139 = vector.extract_strided_slice %138 {offsets = [0, 0], sizes = [2, 64], strides = [1, 1]} : vector<2x256xf32> to vector<2x64xf32>
    %cst_42 = arith.constant 5.000000e-01 : f32
    %140 = vector.broadcast %cst_42 : f32 to vector<2x64xf32>
    %141 = arith.mulf %140, %139 : vector<2x64xf32>
    %cst_43 = arith.constant 5.000000e-01 : f32
    %142 = vector.broadcast %cst_43 : f32 to vector<2x64xf32>
    %143 = arith.addf %141, %142 : vector<2x64xf32>
    %144 = vector.extract_strided_slice %138 {offsets = [0, 64], sizes = [2, 64], strides = [1, 1]} : vector<2x256xf32> to vector<2x64xf32>
    %cst_44 = arith.constant 5.000000e-01 : f32
    %145 = vector.broadcast %cst_44 : f32 to vector<2x64xf32>
    %146 = arith.mulf %145, %144 : vector<2x64xf32>
    %cst_45 = arith.constant 5.000000e-01 : f32
    %147 = vector.broadcast %cst_45 : f32 to vector<2x64xf32>
    %148 = arith.addf %146, %147 : vector<2x64xf32>
    %149 = vector.extract_strided_slice %138 {offsets = [0, 128], sizes = [2, 64], strides = [1, 1]} : vector<2x256xf32> to vector<2x64xf32>
    %150 = vector.extract_strided_slice %138 {offsets = [0, 192], sizes = [2, 64], strides = [1, 1]} : vector<2x256xf32> to vector<2x64xf32>
    %cst_46 = arith.constant 5.000000e-01 : f32
    %151 = vector.broadcast %cst_46 : f32 to vector<2x64xf32>
    %152 = arith.mulf %151, %150 : vector<2x64xf32>
    %cst_47 = arith.constant 5.000000e-01 : f32
    %153 = vector.broadcast %cst_47 : f32 to vector<2x64xf32>
    %154 = arith.addf %152, %153 : vector<2x64xf32>
    %155 = arith.mulf %148, %133 : vector<2x64xf32>
    %156 = arith.mulf %143, %149 : vector<2x64xf32>
    %157 = arith.addf %155, %156 : vector<2x64xf32>
    %158 = math.tanh %157 : vector<2x64xf32>
    %159 = arith.mulf %154, %158 : vector<2x64xf32>
    %cst_48 = arith.constant dense<0.000000e+00> : vector<2x256xf32>
    %160 = tpu.matmul %159, %59, %cst_48 {dimension_numbers = #tpu.dot_dimension_numbers<[1], [0], [0], [1], [0, 0, 1, 1], [], []>} : vector<2x64xf32>, vector<64x256xf32>, vector<2x256xf32> -> vector<2x256xf32>
    %161 = arith.addf %49, %160 : vector<2x256xf32>
    %162 = math.tanh %161 : vector<2x256xf32>
    %163 = vector.extract_strided_slice %162 {offsets = [0, 0], sizes = [2, 64], strides = [1, 1]} : vector<2x256xf32> to vector<2x64xf32>
    %cst_49 = arith.constant 5.000000e-01 : f32
    %164 = vector.broadcast %cst_49 : f32 to vector<2x64xf32>
    %165 = arith.mulf %164, %163 : vector<2x64xf32>
    %cst_50 = arith.constant 5.000000e-01 : f32
    %166 = vector.broadcast %cst_50 : f32 to vector<2x64xf32>
    %167 = arith.addf %165, %166 : vector<2x64xf32>
    %168 = vector.extract_strided_slice %162 {offsets = [0, 64], sizes = [2, 64], strides = [1, 1]} : vector<2x256xf32> to vector<2x64xf32>
    %cst_51 = arith.constant 5.000000e-01 : f32
    %169 = vector.broadcast %cst_51 : f32 to vector<2x64xf32>
    %170 = arith.mulf %169, %168 : vector<2x64xf32>
    %cst_52 = arith.constant 5.000000e-01 : f32
    %171 = vector.broadcast %cst_52 : f32 to vector<2x64xf32>
    %172 = arith.addf %170, %171 : vector<2x64xf32>
    %173 = vector.extract_strided_slice %162 {offsets = [0, 128], sizes = [2, 64], strides = [1, 1]} : vector<2x256xf32> to vector<2x64xf32>
    %174 = vector.extract_strided_slice %162 {offsets = [0, 192], sizes = [2, 64], strides = [1, 1]} : vector<2x256xf32> to vector<2x64xf32>
    %cst_53 = arith.constant 5.000000e-01 : f32
    %175 = vector.broadcast %cst_53 : f32 to vector<2x64xf32>
    %176 = arith.mulf %175, %174 : vector<2x64xf32>
    %cst_54 = arith.constant 5.000000e-01 : f32
    %177 = vector.broadcast %cst_54 : f32 to vector<2x64xf32>
    %178 = arith.addf %176, %177 : vector<2x64xf32>
    %179 = arith.mulf %172, %157 : vector<2x64xf32>
    %180 = arith.mulf %167, %173 : vector<2x64xf32>
    %181 = arith.addf %179, %180 : vector<2x64xf32>
    %182 = math.tanh %181 : vector<2x64xf32>
    %183 = arith.mulf %178, %182 : vector<2x64xf32>
    %cst_55 = arith.constant dense<0.000000e+00> : vector<2x256xf32>
    %184 = tpu.matmul %183, %59, %cst_55 {dimension_numbers = #tpu.dot_dimension_numbers<[1], [0], [0], [1], [0, 0, 1, 1], [], []>} : vector<2x64xf32>, vector<64x256xf32>, vector<2x256xf32> -> vector<2x256xf32>
    %185 = arith.addf %52, %184 : vector<2x256xf32>
    %186 = math.tanh %185 : vector<2x256xf32>
    %187 = vector.extract_strided_slice %186 {offsets = [0, 0], sizes = [2, 64], strides = [1, 1]} : vector<2x256xf32> to vector<2x64xf32>
    %cst_56 = arith.constant 5.000000e-01 : f32
    %188 = vector.broadcast %cst_56 : f32 to vector<2x64xf32>
    %189 = arith.mulf %188, %187 : vector<2x64xf32>
    %cst_57 = arith.constant 5.000000e-01 : f32
    %190 = vector.broadcast %cst_57 : f32 to vector<2x64xf32>
    %191 = arith.addf %189, %190 : vector<2x64xf32>
    %192 = vector.extract_strided_slice %186 {offsets = [0, 64], sizes = [2, 64], strides = [1, 1]} : vector<2x256xf32> to vector<2x64xf32>
    %cst_58 = arith.constant 5.000000e-01 : f32
    %193 = vector.broadcast %cst_58 : f32 to vector<2x64xf32>
    %194 = arith.mulf %193, %192 : vector<2x64xf32>
    %cst_59 = arith.constant 5.000000e-01 : f32
    %195 = vector.broadcast %cst_59 : f32 to vector<2x64xf32>
    %196 = arith.addf %194, %195 : vector<2x64xf32>
    %197 = vector.extract_strided_slice %186 {offsets = [0, 128], sizes = [2, 64], strides = [1, 1]} : vector<2x256xf32> to vector<2x64xf32>
    %198 = vector.extract_strided_slice %186 {offsets = [0, 192], sizes = [2, 64], strides = [1, 1]} : vector<2x256xf32> to vector<2x64xf32>
    %cst_60 = arith.constant 5.000000e-01 : f32
    %199 = vector.broadcast %cst_60 : f32 to vector<2x64xf32>
    %200 = arith.mulf %199, %198 : vector<2x64xf32>
    %cst_61 = arith.constant 5.000000e-01 : f32
    %201 = vector.broadcast %cst_61 : f32 to vector<2x64xf32>
    %202 = arith.addf %200, %201 : vector<2x64xf32>
    %203 = arith.mulf %196, %181 : vector<2x64xf32>
    %204 = arith.mulf %191, %197 : vector<2x64xf32>
    %205 = arith.addf %203, %204 : vector<2x64xf32>
    %206 = math.tanh %205 : vector<2x64xf32>
    %207 = arith.mulf %202, %206 : vector<2x64xf32>
    %cst_62 = arith.constant dense<0.000000e+00> : vector<2x256xf32>
    %208 = tpu.matmul %207, %59, %cst_62 {dimension_numbers = #tpu.dot_dimension_numbers<[1], [0], [0], [1], [0, 0, 1, 1], [], []>} : vector<2x64xf32>, vector<64x256xf32>, vector<2x256xf32> -> vector<2x256xf32>
    %209 = arith.addf %55, %208 : vector<2x256xf32>
    %210 = math.tanh %209 : vector<2x256xf32>
    %211 = vector.extract_strided_slice %210 {offsets = [0, 0], sizes = [2, 64], strides = [1, 1]} : vector<2x256xf32> to vector<2x64xf32>
    %cst_63 = arith.constant 5.000000e-01 : f32
    %212 = vector.broadcast %cst_63 : f32 to vector<2x64xf32>
    %213 = arith.mulf %212, %211 : vector<2x64xf32>
    %cst_64 = arith.constant 5.000000e-01 : f32
    %214 = vector.broadcast %cst_64 : f32 to vector<2x64xf32>
    %215 = arith.addf %213, %214 : vector<2x64xf32>
    %216 = vector.extract_strided_slice %210 {offsets = [0, 64], sizes = [2, 64], strides = [1, 1]} : vector<2x256xf32> to vector<2x64xf32>
    %cst_65 = arith.constant 5.000000e-01 : f32
    %217 = vector.broadcast %cst_65 : f32 to vector<2x64xf32>
    %218 = arith.mulf %217, %216 : vector<2x64xf32>
    %cst_66 = arith.constant 5.000000e-01 : f32
    %219 = vector.broadcast %cst_66 : f32 to vector<2x64xf32>
    %220 = arith.addf %218, %219 : vector<2x64xf32>
    %221 = vector.extract_strided_slice %210 {offsets = [0, 128], sizes = [2, 64], strides = [1, 1]} : vector<2x256xf32> to vector<2x64xf32>
    %222 = vector.extract_strided_slice %210 {offsets = [0, 192], sizes = [2, 64], strides = [1, 1]} : vector<2x256xf32> to vector<2x64xf32>
    %cst_67 = arith.constant 5.000000e-01 : f32
    %223 = vector.broadcast %cst_67 : f32 to vector<2x64xf32>
    %224 = arith.mulf %223, %222 : vector<2x64xf32>
    %cst_68 = arith.constant 5.000000e-01 : f32
    %225 = vector.broadcast %cst_68 : f32 to vector<2x64xf32>
    %226 = arith.addf %224, %225 : vector<2x64xf32>
    %227 = arith.mulf %220, %205 : vector<2x64xf32>
    %228 = arith.mulf %215, %221 : vector<2x64xf32>
    %229 = arith.addf %227, %228 : vector<2x64xf32>
    %230 = math.tanh %229 : vector<2x64xf32>
    %231 = arith.mulf %226, %230 : vector<2x64xf32>
    %cst_69 = arith.constant dense<0.000000e+00> : vector<2x256xf32>
    %232 = tpu.matmul %231, %59, %cst_69 {dimension_numbers = #tpu.dot_dimension_numbers<[1], [0], [0], [1], [0, 0, 1, 1], [], []>} : vector<2x64xf32>, vector<64x256xf32>, vector<2x256xf32> -> vector<2x256xf32>
    %233 = arith.addf %58, %232 : vector<2x256xf32>
    %234 = math.tanh %233 : vector<2x256xf32>
    %235 = vector.extract_strided_slice %234 {offsets = [0, 0], sizes = [2, 64], strides = [1, 1]} : vector<2x256xf32> to vector<2x64xf32>
    %cst_70 = arith.constant 5.000000e-01 : f32
    %236 = vector.broadcast %cst_70 : f32 to vector<2x64xf32>
    %237 = arith.mulf %236, %235 : vector<2x64xf32>
    %cst_71 = arith.constant 5.000000e-01 : f32
    %238 = vector.broadcast %cst_71 : f32 to vector<2x64xf32>
    %239 = arith.addf %237, %238 : vector<2x64xf32>
    %240 = vector.extract_strided_slice %234 {offsets = [0, 64], sizes = [2, 64], strides = [1, 1]} : vector<2x256xf32> to vector<2x64xf32>
    %cst_72 = arith.constant 5.000000e-01 : f32
    %241 = vector.broadcast %cst_72 : f32 to vector<2x64xf32>
    %242 = arith.mulf %241, %240 : vector<2x64xf32>
    %cst_73 = arith.constant 5.000000e-01 : f32
    %243 = vector.broadcast %cst_73 : f32 to vector<2x64xf32>
    %244 = arith.addf %242, %243 : vector<2x64xf32>
    %245 = vector.extract_strided_slice %234 {offsets = [0, 128], sizes = [2, 64], strides = [1, 1]} : vector<2x256xf32> to vector<2x64xf32>
    %246 = vector.extract_strided_slice %234 {offsets = [0, 192], sizes = [2, 64], strides = [1, 1]} : vector<2x256xf32> to vector<2x64xf32>
    %cst_74 = arith.constant 5.000000e-01 : f32
    %247 = vector.broadcast %cst_74 : f32 to vector<2x64xf32>
    %248 = arith.mulf %247, %246 : vector<2x64xf32>
    %cst_75 = arith.constant 5.000000e-01 : f32
    %249 = vector.broadcast %cst_75 : f32 to vector<2x64xf32>
    %250 = arith.addf %248, %249 : vector<2x64xf32>
    %251 = arith.mulf %244, %229 : vector<2x64xf32>
    %252 = arith.mulf %239, %245 : vector<2x64xf32>
    %253 = arith.addf %251, %252 : vector<2x64xf32>
    %254 = math.tanh %253 : vector<2x64xf32>
    %255 = arith.mulf %250, %254 : vector<2x64xf32>
    %c0_76 = arith.constant 0 : index
    %c0_77 = arith.constant 0 : index
    %c0_78 = arith.constant 0 : index
    %256 = vector.load %arg13[%c0_76, %c0_77, %c0_78] : memref<2x2x64xf32, #tpu.memory_space<vmem>>, vector<1x2x64xf32>
    %257 = vector.shape_cast %256 : vector<1x2x64xf32> to vector<2x64xf32>
    %258 = vector.shape_cast %255 : vector<2x64xf32> to vector<1x2x64xf32>
    tpu.vector_store %arg13[%c0_76, %c0_77, %c0_78], %258 {strides = array<i32>} : memref<2x2x64xf32, #tpu.memory_space<vmem>>, vector<1x2x64xf32>,
    %c0_79 = arith.constant 0 : index
    %c0_80 = arith.constant 0 : index
    %c0_81 = arith.constant 0 : index
    %259 = vector.load %arg14[%c0_79, %c0_80, %c0_81] : memref<2x2x64xf32, #tpu.memory_space<vmem>>, vector<1x2x64xf32>
    %260 = vector.shape_cast %259 : vector<1x2x64xf32> to vector<2x64xf32>
    %261 = vector.shape_cast %253 : vector<2x64xf32> to vector<1x2x64xf32>
    tpu.vector_store %arg14[%c0_79, %c0_80, %c0_81], %261 {strides = array<i32>} : memref<2x2x64xf32, #tpu.memory_space<vmem>>, vector<1x2x64xf32>,
    %262 = arith.select %21, %255, %87 : vector<2x64xi1>, vector<2x64xf32>
    %c0_82 = arith.constant 0 : index
    %c0_83 = arith.constant 0 : index
    %263 = vector.load %arg15[%c0_82, %c0_83] : memref<16x64xf32, #tpu.memory_space<vmem>>, vector<2x64xf32>
    tpu.vector_store %arg15[%c0_82, %c0_83], %262 {strides = array<i32>} : memref<16x64xf32, #tpu.memory_space<vmem>>, vector<2x64xf32>,
    %264 = arith.select %21, %231, %111 : vector<2x64xi1>, vector<2x64xf32>
    %c2 = arith.constant 2 : index
    %c0_84 = arith.constant 0 : index
    %265 = vector.load %arg15[%c2, %c0_84] : memref<16x64xf32, #tpu.memory_space<vmem>>, vector<2x64xf32>
    tpu.vector_store %arg15[%c2, %c0_84], %264 {strides = array<i32>} : memref<16x64xf32, #tpu.memory_space<vmem>>, vector<2x64xf32>,
    %266 = arith.select %21, %207, %135 : vector<2x64xi1>, vector<2x64xf32>
    %c4 = arith.constant 4 : index
    %c0_85 = arith.constant 0 : index
    %267 = vector.load %arg15[%c4, %c0_85] : memref<16x64xf32, #tpu.memory_space<vmem>>, vector<2x64xf32>
    tpu.vector_store %arg15[%c4, %c0_85], %266 {strides = array<i32>} : memref<16x64xf32, #tpu.memory_space<vmem>>, vector<2x64xf32>,
    %268 = arith.select %21, %183, %159 : vector<2x64xi1>, vector<2x64xf32>
    %c6 = arith.constant 6 : index
    %c0_86 = arith.constant 0 : index
    %269 = vector.load %arg15[%c6, %c0_86] : memref<16x64xf32, #tpu.memory_space<vmem>>, vector<2x64xf32>
    tpu.vector_store %arg15[%c6, %c0_86], %268 {strides = array<i32>} : memref<16x64xf32, #tpu.memory_space<vmem>>, vector<2x64xf32>,
    %270 = arith.select %21, %159, %183 : vector<2x64xi1>, vector<2x64xf32>
    %c8 = arith.constant 8 : index
    %c0_87 = arith.constant 0 : index
    %271 = vector.load %arg15[%c8, %c0_87] : memref<16x64xf32, #tpu.memory_space<vmem>>, vector<2x64xf32>
    tpu.vector_store %arg15[%c8, %c0_87], %270 {strides = array<i32>} : memref<16x64xf32, #tpu.memory_space<vmem>>, vector<2x64xf32>,
    %272 = arith.select %21, %135, %207 : vector<2x64xi1>, vector<2x64xf32>
    %c10 = arith.constant 10 : index
    %c0_88 = arith.constant 0 : index
    %273 = vector.load %arg15[%c10, %c0_88] : memref<16x64xf32, #tpu.memory_space<vmem>>, vector<2x64xf32>
    tpu.vector_store %arg15[%c10, %c0_88], %272 {strides = array<i32>} : memref<16x64xf32, #tpu.memory_space<vmem>>, vector<2x64xf32>,
    %274 = arith.select %21, %111, %231 : vector<2x64xi1>, vector<2x64xf32>
    %c12 = arith.constant 12 : index
    %c0_89 = arith.constant 0 : index
    %275 = vector.load %arg15[%c12, %c0_89] : memref<16x64xf32, #tpu.memory_space<vmem>>, vector<2x64xf32>
    tpu.vector_store %arg15[%c12, %c0_89], %274 {strides = array<i32>} : memref<16x64xf32, #tpu.memory_space<vmem>>, vector<2x64xf32>,
    %276 = arith.select %21, %87, %255 : vector<2x64xi1>, vector<2x64xf32>
    %c14 = arith.constant 14 : index
    %c0_90 = arith.constant 0 : index
    %277 = vector.load %arg15[%c14, %c0_90] : memref<16x64xf32, #tpu.memory_space<vmem>>, vector<2x64xf32>
    tpu.vector_store %arg15[%c14, %c0_90], %276 {strides = array<i32>} : memref<16x64xf32, #tpu.memory_space<vmem>>, vector<2x64xf32>,
    %c0_91 = arith.constant 0 : index
    %c0_92 = arith.constant 0 : index
    %278 = vector.load %arg15[%c0_91, %c0_92] : memref<16x64xf32, #tpu.memory_space<vmem>>, vector<16x64xf32>
    %c0_93 = arith.constant 0 : index
    %c0_94 = arith.constant 0 : index
    %279 = vector.load %arg7[%c0_93, %c0_94] : memref<64x256xf32, #tpu.memory_space<vmem>>, vector<64x256xf32>
    %cst_95 = arith.constant dense<0.000000e+00> : vector<16x256xf32>
    %280 = tpu.matmul %278, %279, %cst_95 {dimension_numbers = #tpu.dot_dimension_numbers<[1], [0], [0], [1], [0, 0, 1, 1], [], []>} : vector<16x64xf32>, vector<64x256xf32>, vector<16x256xf32> -> vector<16x256xf32>
    %c0_96 = arith.constant 0 : index
    %c0_97 = arith.constant 0 : index
    %281 = vector.load %arg9[%c0_96, %c0_97] : memref<1x256xf32, #tpu.memory_space<vmem>>, vector<1x256xf32>
    %282 = vector.broadcast %281 : vector<1x256xf32> to vector<16x256xf32>
    %283 = arith.addf %280, %282 : vector<16x256xf32>
    %284 = vector.extract_strided_slice %283 {offsets = [14, 0], sizes = [2, 256], strides = [1, 1]} : vector<16x256xf32> to vector<2x256xf32>
    %285 = vector.extract_strided_slice %283 {offsets = [0, 0], sizes = [2, 256], strides = [1, 1]} : vector<16x256xf32> to vector<2x256xf32>
    %286 = arith.select %18, %284, %285 : vector<2x256xi1>, vector<2x256xf32>
    %287 = vector.extract_strided_slice %283 {offsets = [12, 0], sizes = [2, 256], strides = [1, 1]} : vector<16x256xf32> to vector<2x256xf32>
    %288 = vector.extract_strided_slice %283 {offsets = [2, 0], sizes = [2, 256], strides = [1, 1]} : vector<16x256xf32> to vector<2x256xf32>
    %289 = arith.select %18, %287, %288 : vector<2x256xi1>, vector<2x256xf32>
    %290 = vector.extract_strided_slice %283 {offsets = [10, 0], sizes = [2, 256], strides = [1, 1]} : vector<16x256xf32> to vector<2x256xf32>
    %291 = vector.extract_strided_slice %283 {offsets = [4, 0], sizes = [2, 256], strides = [1, 1]} : vector<16x256xf32> to vector<2x256xf32>
    %292 = arith.select %18, %290, %291 : vector<2x256xi1>, vector<2x256xf32>
    %293 = vector.extract_strided_slice %283 {offsets = [8, 0], sizes = [2, 256], strides = [1, 1]} : vector<16x256xf32> to vector<2x256xf32>
    %294 = vector.extract_strided_slice %283 {offsets = [6, 0], sizes = [2, 256], strides = [1, 1]} : vector<16x256xf32> to vector<2x256xf32>
    %295 = arith.select %18, %293, %294 : vector<2x256xi1>, vector<2x256xf32>
    %296 = vector.extract_strided_slice %283 {offsets = [6, 0], sizes = [2, 256], strides = [1, 1]} : vector<16x256xf32> to vector<2x256xf32>
    %297 = vector.extract_strided_slice %283 {offsets = [8, 0], sizes = [2, 256], strides = [1, 1]} : vector<16x256xf32> to vector<2x256xf32>
    %298 = arith.select %18, %296, %297 : vector<2x256xi1>, vector<2x256xf32>
    %299 = vector.extract_strided_slice %283 {offsets = [4, 0], sizes = [2, 256], strides = [1, 1]} : vector<16x256xf32> to vector<2x256xf32>
    %300 = vector.extract_strided_slice %283 {offsets = [10, 0], sizes = [2, 256], strides = [1, 1]} : vector<16x256xf32> to vector<2x256xf32>
    %301 = arith.select %18, %299, %300 : vector<2x256xi1>, vector<2x256xf32>
    %302 = vector.extract_strided_slice %283 {offsets = [2, 0], sizes = [2, 256], strides = [1, 1]} : vector<16x256xf32> to vector<2x256xf32>
    %303 = vector.extract_strided_slice %283 {offsets = [12, 0], sizes = [2, 256], strides = [1, 1]} : vector<16x256xf32> to vector<2x256xf32>
    %304 = arith.select %18, %302, %303 : vector<2x256xi1>, vector<2x256xf32>
    %305 = vector.extract_strided_slice %283 {offsets = [0, 0], sizes = [2, 256], strides = [1, 1]} : vector<16x256xf32> to vector<2x256xf32>
    %306 = vector.extract_strided_slice %283 {offsets = [14, 0], sizes = [2, 256], strides = [1, 1]} : vector<16x256xf32> to vector<2x256xf32>
    %307 = arith.select %18, %305, %306 : vector<2x256xi1>, vector<2x256xf32>
    %c0_98 = arith.constant 0 : index
    %c0_99 = arith.constant 0 : index
    %308 = vector.load %arg8[%c0_98, %c0_99] : memref<64x256xf32, #tpu.memory_space<vmem>>, vector<64x256xf32>
    %c1 = arith.constant 1 : index
    %c0_100 = arith.constant 0 : index
    %c0_101 = arith.constant 0 : index
    %309 = vector.load %arg2[%c1, %c0_100, %c0_101] : memref<2x2x64xf32, #tpu.memory_space<vmem>>, vector<1x2x64xf32>
    %310 = vector.shape_cast %309 : vector<1x2x64xf32> to vector<2x64xf32>
    %c1_102 = arith.constant 1 : index
    %c0_103 = arith.constant 0 : index
    %c0_104 = arith.constant 0 : index
    %311 = vector.load %arg3[%c1_102, %c0_103, %c0_104] : memref<2x2x64xf32, #tpu.memory_space<vmem>>, vector<1x2x64xf32>
    %312 = vector.shape_cast %311 : vector<1x2x64xf32> to vector<2x64xf32>
    %cst_105 = arith.constant dense<0.000000e+00> : vector<2x256xf32>
    %313 = tpu.matmul %310, %308, %cst_105 {dimension_numbers = #tpu.dot_dimension_numbers<[1], [0], [0], [1], [0, 0, 1, 1], [], []>} : vector<2x64xf32>, vector<64x256xf32>, vector<2x256xf32> -> vector<2x256xf32>
    %314 = arith.addf %286, %313 : vector<2x256xf32>
    %315 = math.tanh %314 : vector<2x256xf32>
    %316 = vector.extract_strided_slice %315 {offsets = [0, 0], sizes = [2, 64], strides = [1, 1]} : vector<2x256xf32> to vector<2x64xf32>
    %cst_106 = arith.constant 5.000000e-01 : f32
    %317 = vector.broadcast %cst_106 : f32 to vector<2x64xf32>
    %318 = arith.mulf %317, %316 : vector<2x64xf32>
    %cst_107 = arith.constant 5.000000e-01 : f32
    %319 = vector.broadcast %cst_107 : f32 to vector<2x64xf32>
    %320 = arith.addf %318, %319 : vector<2x64xf32>
    %321 = vector.extract_strided_slice %315 {offsets = [0, 64], sizes = [2, 64], strides = [1, 1]} : vector<2x256xf32> to vector<2x64xf32>
    %cst_108 = arith.constant 5.000000e-01 : f32
    %322 = vector.broadcast %cst_108 : f32 to vector<2x64xf32>
    %323 = arith.mulf %322, %321 : vector<2x64xf32>
    %cst_109 = arith.constant 5.000000e-01 : f32
    %324 = vector.broadcast %cst_109 : f32 to vector<2x64xf32>
    %325 = arith.addf %323, %324 : vector<2x64xf32>
    %326 = vector.extract_strided_slice %315 {offsets = [0, 128], sizes = [2, 64], strides = [1, 1]} : vector<2x256xf32> to vector<2x64xf32>
    %327 = vector.extract_strided_slice %315 {offsets = [0, 192], sizes = [2, 64], strides = [1, 1]} : vector<2x256xf32> to vector<2x64xf32>
    %cst_110 = arith.constant 5.000000e-01 : f32
    %328 = vector.broadcast %cst_110 : f32 to vector<2x64xf32>
    %329 = arith.mulf %328, %327 : vector<2x64xf32>
    %cst_111 = arith.constant 5.000000e-01 : f32
    %330 = vector.broadcast %cst_111 : f32 to vector<2x64xf32>
    %331 = arith.addf %329, %330 : vector<2x64xf32>
    %332 = arith.mulf %325, %312 : vector<2x64xf32>
    %333 = arith.mulf %320, %326 : vector<2x64xf32>
    %334 = arith.addf %332, %333 : vector<2x64xf32>
    %335 = math.tanh %334 : vector<2x64xf32>
    %336 = arith.mulf %331, %335 : vector<2x64xf32>
    %cst_112 = arith.constant dense<0.000000e+00> : vector<2x256xf32>
    %337 = tpu.matmul %336, %308, %cst_112 {dimension_numbers = #tpu.dot_dimension_numbers<[1], [0], [0], [1], [0, 0, 1, 1], [], []>} : vector<2x64xf32>, vector<64x256xf32>, vector<2x256xf32> -> vector<2x256xf32>
    %338 = arith.addf %289, %337 : vector<2x256xf32>
    %339 = math.tanh %338 : vector<2x256xf32>
    %340 = vector.extract_strided_slice %339 {offsets = [0, 0], sizes = [2, 64], strides = [1, 1]} : vector<2x256xf32> to vector<2x64xf32>
    %cst_113 = arith.constant 5.000000e-01 : f32
    %341 = vector.broadcast %cst_113 : f32 to vector<2x64xf32>
    %342 = arith.mulf %341, %340 : vector<2x64xf32>
    %cst_114 = arith.constant 5.000000e-01 : f32
    %343 = vector.broadcast %cst_114 : f32 to vector<2x64xf32>
    %344 = arith.addf %342, %343 : vector<2x64xf32>
    %345 = vector.extract_strided_slice %339 {offsets = [0, 64], sizes = [2, 64], strides = [1, 1]} : vector<2x256xf32> to vector<2x64xf32>
    %cst_115 = arith.constant 5.000000e-01 : f32
    %346 = vector.broadcast %cst_115 : f32 to vector<2x64xf32>
    %347 = arith.mulf %346, %345 : vector<2x64xf32>
    %cst_116 = arith.constant 5.000000e-01 : f32
    %348 = vector.broadcast %cst_116 : f32 to vector<2x64xf32>
    %349 = arith.addf %347, %348 : vector<2x64xf32>
    %350 = vector.extract_strided_slice %339 {offsets = [0, 128], sizes = [2, 64], strides = [1, 1]} : vector<2x256xf32> to vector<2x64xf32>
    %351 = vector.extract_strided_slice %339 {offsets = [0, 192], sizes = [2, 64], strides = [1, 1]} : vector<2x256xf32> to vector<2x64xf32>
    %cst_117 = arith.constant 5.000000e-01 : f32
    %352 = vector.broadcast %cst_117 : f32 to vector<2x64xf32>
    %353 = arith.mulf %352, %351 : vector<2x64xf32>
    %cst_118 = arith.constant 5.000000e-01 : f32
    %354 = vector.broadcast %cst_118 : f32 to vector<2x64xf32>
    %355 = arith.addf %353, %354 : vector<2x64xf32>
    %356 = arith.mulf %349, %334 : vector<2x64xf32>
    %357 = arith.mulf %344, %350 : vector<2x64xf32>
    %358 = arith.addf %356, %357 : vector<2x64xf32>
    %359 = math.tanh %358 : vector<2x64xf32>
    %360 = arith.mulf %355, %359 : vector<2x64xf32>
    %cst_119 = arith.constant dense<0.000000e+00> : vector<2x256xf32>
    %361 = tpu.matmul %360, %308, %cst_119 {dimension_numbers = #tpu.dot_dimension_numbers<[1], [0], [0], [1], [0, 0, 1, 1], [], []>} : vector<2x64xf32>, vector<64x256xf32>, vector<2x256xf32> -> vector<2x256xf32>
    %362 = arith.addf %292, %361 : vector<2x256xf32>
    %363 = math.tanh %362 : vector<2x256xf32>
    %364 = vector.extract_strided_slice %363 {offsets = [0, 0], sizes = [2, 64], strides = [1, 1]} : vector<2x256xf32> to vector<2x64xf32>
    %cst_120 = arith.constant 5.000000e-01 : f32
    %365 = vector.broadcast %cst_120 : f32 to vector<2x64xf32>
    %366 = arith.mulf %365, %364 : vector<2x64xf32>
    %cst_121 = arith.constant 5.000000e-01 : f32
    %367 = vector.broadcast %cst_121 : f32 to vector<2x64xf32>
    %368 = arith.addf %366, %367 : vector<2x64xf32>
    %369 = vector.extract_strided_slice %363 {offsets = [0, 64], sizes = [2, 64], strides = [1, 1]} : vector<2x256xf32> to vector<2x64xf32>
    %cst_122 = arith.constant 5.000000e-01 : f32
    %370 = vector.broadcast %cst_122 : f32 to vector<2x64xf32>
    %371 = arith.mulf %370, %369 : vector<2x64xf32>
    %cst_123 = arith.constant 5.000000e-01 : f32
    %372 = vector.broadcast %cst_123 : f32 to vector<2x64xf32>
    %373 = arith.addf %371, %372 : vector<2x64xf32>
    %374 = vector.extract_strided_slice %363 {offsets = [0, 128], sizes = [2, 64], strides = [1, 1]} : vector<2x256xf32> to vector<2x64xf32>
    %375 = vector.extract_strided_slice %363 {offsets = [0, 192], sizes = [2, 64], strides = [1, 1]} : vector<2x256xf32> to vector<2x64xf32>
    %cst_124 = arith.constant 5.000000e-01 : f32
    %376 = vector.broadcast %cst_124 : f32 to vector<2x64xf32>
    %377 = arith.mulf %376, %375 : vector<2x64xf32>
    %cst_125 = arith.constant 5.000000e-01 : f32
    %378 = vector.broadcast %cst_125 : f32 to vector<2x64xf32>
    %379 = arith.addf %377, %378 : vector<2x64xf32>
    %380 = arith.mulf %373, %358 : vector<2x64xf32>
    %381 = arith.mulf %368, %374 : vector<2x64xf32>
    %382 = arith.addf %380, %381 : vector<2x64xf32>
    %383 = math.tanh %382 : vector<2x64xf32>
    %384 = arith.mulf %379, %383 : vector<2x64xf32>
    %cst_126 = arith.constant dense<0.000000e+00> : vector<2x256xf32>
    %385 = tpu.matmul %384, %308, %cst_126 {dimension_numbers = #tpu.dot_dimension_numbers<[1], [0], [0], [1], [0, 0, 1, 1], [], []>} : vector<2x64xf32>, vector<64x256xf32>, vector<2x256xf32> -> vector<2x256xf32>
    %386 = arith.addf %295, %385 : vector<2x256xf32>
    %387 = math.tanh %386 : vector<2x256xf32>
    %388 = vector.extract_strided_slice %387 {offsets = [0, 0], sizes = [2, 64], strides = [1, 1]} : vector<2x256xf32> to vector<2x64xf32>
    %cst_127 = arith.constant 5.000000e-01 : f32
    %389 = vector.broadcast %cst_127 : f32 to vector<2x64xf32>
    %390 = arith.mulf %389, %388 : vector<2x64xf32>
    %cst_128 = arith.constant 5.000000e-01 : f32
    %391 = vector.broadcast %cst_128 : f32 to vector<2x64xf32>
    %392 = arith.addf %390, %391 : vector<2x64xf32>
    %393 = vector.extract_strided_slice %387 {offsets = [0, 64], sizes = [2, 64], strides = [1, 1]} : vector<2x256xf32> to vector<2x64xf32>
    %cst_129 = arith.constant 5.000000e-01 : f32
    %394 = vector.broadcast %cst_129 : f32 to vector<2x64xf32>
    %395 = arith.mulf %394, %393 : vector<2x64xf32>
    %cst_130 = arith.constant 5.000000e-01 : f32
    %396 = vector.broadcast %cst_130 : f32 to vector<2x64xf32>
    %397 = arith.addf %395, %396 : vector<2x64xf32>
    %398 = vector.extract_strided_slice %387 {offsets = [0, 128], sizes = [2, 64], strides = [1, 1]} : vector<2x256xf32> to vector<2x64xf32>
    %399 = vector.extract_strided_slice %387 {offsets = [0, 192], sizes = [2, 64], strides = [1, 1]} : vector<2x256xf32> to vector<2x64xf32>
    %cst_131 = arith.constant 5.000000e-01 : f32
    %400 = vector.broadcast %cst_131 : f32 to vector<2x64xf32>
    %401 = arith.mulf %400, %399 : vector<2x64xf32>
    %cst_132 = arith.constant 5.000000e-01 : f32
    %402 = vector.broadcast %cst_132 : f32 to vector<2x64xf32>
    %403 = arith.addf %401, %402 : vector<2x64xf32>
    %404 = arith.mulf %397, %382 : vector<2x64xf32>
    %405 = arith.mulf %392, %398 : vector<2x64xf32>
    %406 = arith.addf %404, %405 : vector<2x64xf32>
    %407 = math.tanh %406 : vector<2x64xf32>
    %408 = arith.mulf %403, %407 : vector<2x64xf32>
    %cst_133 = arith.constant dense<0.000000e+00> : vector<2x256xf32>
    %409 = tpu.matmul %408, %308, %cst_133 {dimension_numbers = #tpu.dot_dimension_numbers<[1], [0], [0], [1], [0, 0, 1, 1], [], []>} : vector<2x64xf32>, vector<64x256xf32>, vector<2x256xf32> -> vector<2x256xf32>
    %410 = arith.addf %298, %409 : vector<2x256xf32>
    %411 = math.tanh %410 : vector<2x256xf32>
    %412 = vector.extract_strided_slice %411 {offsets = [0, 0], sizes = [2, 64], strides = [1, 1]} : vector<2x256xf32> to vector<2x64xf32>
    %cst_134 = arith.constant 5.000000e-01 : f32
    %413 = vector.broadcast %cst_134 : f32 to vector<2x64xf32>
    %414 = arith.mulf %413, %412 : vector<2x64xf32>
    %cst_135 = arith.constant 5.000000e-01 : f32
    %415 = vector.broadcast %cst_135 : f32 to vector<2x64xf32>
    %416 = arith.addf %414, %415 : vector<2x64xf32>
    %417 = vector.extract_strided_slice %411 {offsets = [0, 64], sizes = [2, 64], strides = [1, 1]} : vector<2x256xf32> to vector<2x64xf32>
    %cst_136 = arith.constant 5.000000e-01 : f32
    %418 = vector.broadcast %cst_136 : f32 to vector<2x64xf32>
    %419 = arith.mulf %418, %417 : vector<2x64xf32>
    %cst_137 = arith.constant 5.000000e-01 : f32
    %420 = vector.broadcast %cst_137 : f32 to vector<2x64xf32>
    %421 = arith.addf %419, %420 : vector<2x64xf32>
    %422 = vector.extract_strided_slice %411 {offsets = [0, 128], sizes = [2, 64], strides = [1, 1]} : vector<2x256xf32> to vector<2x64xf32>
    %423 = vector.extract_strided_slice %411 {offsets = [0, 192], sizes = [2, 64], strides = [1, 1]} : vector<2x256xf32> to vector<2x64xf32>
    %cst_138 = arith.constant 5.000000e-01 : f32
    %424 = vector.broadcast %cst_138 : f32 to vector<2x64xf32>
    %425 = arith.mulf %424, %423 : vector<2x64xf32>
    %cst_139 = arith.constant 5.000000e-01 : f32
    %426 = vector.broadcast %cst_139 : f32 to vector<2x64xf32>
    %427 = arith.addf %425, %426 : vector<2x64xf32>
    %428 = arith.mulf %421, %406 : vector<2x64xf32>
    %429 = arith.mulf %416, %422 : vector<2x64xf32>
    %430 = arith.addf %428, %429 : vector<2x64xf32>
    %431 = math.tanh %430 : vector<2x64xf32>
    %432 = arith.mulf %427, %431 : vector<2x64xf32>
    %cst_140 = arith.constant dense<0.000000e+00> : vector<2x256xf32>
    %433 = tpu.matmul %432, %308, %cst_140 {dimension_numbers = #tpu.dot_dimension_numbers<[1], [0], [0], [1], [0, 0, 1, 1], [], []>} : vector<2x64xf32>, vector<64x256xf32>, vector<2x256xf32> -> vector<2x256xf32>
    %434 = arith.addf %301, %433 : vector<2x256xf32>
    %435 = math.tanh %434 : vector<2x256xf32>
    %436 = vector.extract_strided_slice %435 {offsets = [0, 0], sizes = [2, 64], strides = [1, 1]} : vector<2x256xf32> to vector<2x64xf32>
    %cst_141 = arith.constant 5.000000e-01 : f32
    %437 = vector.broadcast %cst_141 : f32 to vector<2x64xf32>
    %438 = arith.mulf %437, %436 : vector<2x64xf32>
    %cst_142 = arith.constant 5.000000e-01 : f32
    %439 = vector.broadcast %cst_142 : f32 to vector<2x64xf32>
    %440 = arith.addf %438, %439 : vector<2x64xf32>
    %441 = vector.extract_strided_slice %435 {offsets = [0, 64], sizes = [2, 64], strides = [1, 1]} : vector<2x256xf32> to vector<2x64xf32>
    %cst_143 = arith.constant 5.000000e-01 : f32
    %442 = vector.broadcast %cst_143 : f32 to vector<2x64xf32>
    %443 = arith.mulf %442, %441 : vector<2x64xf32>
    %cst_144 = arith.constant 5.000000e-01 : f32
    %444 = vector.broadcast %cst_144 : f32 to vector<2x64xf32>
    %445 = arith.addf %443, %444 : vector<2x64xf32>
    %446 = vector.extract_strided_slice %435 {offsets = [0, 128], sizes = [2, 64], strides = [1, 1]} : vector<2x256xf32> to vector<2x64xf32>
    %447 = vector.extract_strided_slice %435 {offsets = [0, 192], sizes = [2, 64], strides = [1, 1]} : vector<2x256xf32> to vector<2x64xf32>
    %cst_145 = arith.constant 5.000000e-01 : f32
    %448 = vector.broadcast %cst_145 : f32 to vector<2x64xf32>
    %449 = arith.mulf %448, %447 : vector<2x64xf32>
    %cst_146 = arith.constant 5.000000e-01 : f32
    %450 = vector.broadcast %cst_146 : f32 to vector<2x64xf32>
    %451 = arith.addf %449, %450 : vector<2x64xf32>
    %452 = arith.mulf %445, %430 : vector<2x64xf32>
    %453 = arith.mulf %440, %446 : vector<2x64xf32>
    %454 = arith.addf %452, %453 : vector<2x64xf32>
    %455 = math.tanh %454 : vector<2x64xf32>
    %456 = arith.mulf %451, %455 : vector<2x64xf32>
    %cst_147 = arith.constant dense<0.000000e+00> : vector<2x256xf32>
    %457 = tpu.matmul %456, %308, %cst_147 {dimension_numbers = #tpu.dot_dimension_numbers<[1], [0], [0], [1], [0, 0, 1, 1], [], []>} : vector<2x64xf32>, vector<64x256xf32>, vector<2x256xf32> -> vector<2x256xf32>
    %458 = arith.addf %304, %457 : vector<2x256xf32>
    %459 = math.tanh %458 : vector<2x256xf32>
    %460 = vector.extract_strided_slice %459 {offsets = [0, 0], sizes = [2, 64], strides = [1, 1]} : vector<2x256xf32> to vector<2x64xf32>
    %cst_148 = arith.constant 5.000000e-01 : f32
    %461 = vector.broadcast %cst_148 : f32 to vector<2x64xf32>
    %462 = arith.mulf %461, %460 : vector<2x64xf32>
    %cst_149 = arith.constant 5.000000e-01 : f32
    %463 = vector.broadcast %cst_149 : f32 to vector<2x64xf32>
    %464 = arith.addf %462, %463 : vector<2x64xf32>
    %465 = vector.extract_strided_slice %459 {offsets = [0, 64], sizes = [2, 64], strides = [1, 1]} : vector<2x256xf32> to vector<2x64xf32>
    %cst_150 = arith.constant 5.000000e-01 : f32
    %466 = vector.broadcast %cst_150 : f32 to vector<2x64xf32>
    %467 = arith.mulf %466, %465 : vector<2x64xf32>
    %cst_151 = arith.constant 5.000000e-01 : f32
    %468 = vector.broadcast %cst_151 : f32 to vector<2x64xf32>
    %469 = arith.addf %467, %468 : vector<2x64xf32>
    %470 = vector.extract_strided_slice %459 {offsets = [0, 128], sizes = [2, 64], strides = [1, 1]} : vector<2x256xf32> to vector<2x64xf32>
    %471 = vector.extract_strided_slice %459 {offsets = [0, 192], sizes = [2, 64], strides = [1, 1]} : vector<2x256xf32> to vector<2x64xf32>
    %cst_152 = arith.constant 5.000000e-01 : f32
    %472 = vector.broadcast %cst_152 : f32 to vector<2x64xf32>
    %473 = arith.mulf %472, %471 : vector<2x64xf32>
    %cst_153 = arith.constant 5.000000e-01 : f32
    %474 = vector.broadcast %cst_153 : f32 to vector<2x64xf32>
    %475 = arith.addf %473, %474 : vector<2x64xf32>
    %476 = arith.mulf %469, %454 : vector<2x64xf32>
    %477 = arith.mulf %464, %470 : vector<2x64xf32>
    %478 = arith.addf %476, %477 : vector<2x64xf32>
    %479 = math.tanh %478 : vector<2x64xf32>
    %480 = arith.mulf %475, %479 : vector<2x64xf32>
    %cst_154 = arith.constant dense<0.000000e+00> : vector<2x256xf32>
    %481 = tpu.matmul %480, %308, %cst_154 {dimension_numbers = #tpu.dot_dimension_numbers<[1], [0], [0], [1], [0, 0, 1, 1], [], []>} : vector<2x64xf32>, vector<64x256xf32>, vector<2x256xf32> -> vector<2x256xf32>
    %482 = arith.addf %307, %481 : vector<2x256xf32>
    %483 = math.tanh %482 : vector<2x256xf32>
    %484 = vector.extract_strided_slice %483 {offsets = [0, 0], sizes = [2, 64], strides = [1, 1]} : vector<2x256xf32> to vector<2x64xf32>
    %cst_155 = arith.constant 5.000000e-01 : f32
    %485 = vector.broadcast %cst_155 : f32 to vector<2x64xf32>
    %486 = arith.mulf %485, %484 : vector<2x64xf32>
    %cst_156 = arith.constant 5.000000e-01 : f32
    %487 = vector.broadcast %cst_156 : f32 to vector<2x64xf32>
    %488 = arith.addf %486, %487 : vector<2x64xf32>
    %489 = vector.extract_strided_slice %483 {offsets = [0, 64], sizes = [2, 64], strides = [1, 1]} : vector<2x256xf32> to vector<2x64xf32>
    %cst_157 = arith.constant 5.000000e-01 : f32
    %490 = vector.broadcast %cst_157 : f32 to vector<2x64xf32>
    %491 = arith.mulf %490, %489 : vector<2x64xf32>
    %cst_158 = arith.constant 5.000000e-01 : f32
    %492 = vector.broadcast %cst_158 : f32 to vector<2x64xf32>
    %493 = arith.addf %491, %492 : vector<2x64xf32>
    %494 = vector.extract_strided_slice %483 {offsets = [0, 128], sizes = [2, 64], strides = [1, 1]} : vector<2x256xf32> to vector<2x64xf32>
    %495 = vector.extract_strided_slice %483 {offsets = [0, 192], sizes = [2, 64], strides = [1, 1]} : vector<2x256xf32> to vector<2x64xf32>
    %cst_159 = arith.constant 5.000000e-01 : f32
    %496 = vector.broadcast %cst_159 : f32 to vector<2x64xf32>
    %497 = arith.mulf %496, %495 : vector<2x64xf32>
    %cst_160 = arith.constant 5.000000e-01 : f32
    %498 = vector.broadcast %cst_160 : f32 to vector<2x64xf32>
    %499 = arith.addf %497, %498 : vector<2x64xf32>
    %500 = arith.mulf %493, %478 : vector<2x64xf32>
    %501 = arith.mulf %488, %494 : vector<2x64xf32>
    %502 = arith.addf %500, %501 : vector<2x64xf32>
    %503 = math.tanh %502 : vector<2x64xf32>
    %504 = arith.mulf %499, %503 : vector<2x64xf32>
    %c1_161 = arith.constant 1 : index
    %c0_162 = arith.constant 0 : index
    %c0_163 = arith.constant 0 : index
    %505 = vector.load %arg13[%c1_161, %c0_162, %c0_163] : memref<2x2x64xf32, #tpu.memory_space<vmem>>, vector<1x2x64xf32>
    %506 = vector.shape_cast %505 : vector<1x2x64xf32> to vector<2x64xf32>
    %507 = vector.shape_cast %504 : vector<2x64xf32> to vector<1x2x64xf32>
    tpu.vector_store %arg13[%c1_161, %c0_162, %c0_163], %507 {strides = array<i32>} : memref<2x2x64xf32, #tpu.memory_space<vmem>>, vector<1x2x64xf32>,
    %c1_164 = arith.constant 1 : index
    %c0_165 = arith.constant 0 : index
    %c0_166 = arith.constant 0 : index
    %508 = vector.load %arg14[%c1_164, %c0_165, %c0_166] : memref<2x2x64xf32, #tpu.memory_space<vmem>>, vector<1x2x64xf32>
    %509 = vector.shape_cast %508 : vector<1x2x64xf32> to vector<2x64xf32>
    %510 = vector.shape_cast %502 : vector<2x64xf32> to vector<1x2x64xf32>
    tpu.vector_store %arg14[%c1_164, %c0_165, %c0_166], %510 {strides = array<i32>} : memref<2x2x64xf32, #tpu.memory_space<vmem>>, vector<1x2x64xf32>,
    %511 = arith.select %21, %504, %336 : vector<2x64xi1>, vector<2x64xf32>
    %c0_167 = arith.constant 0 : index
    %c0_168 = arith.constant 0 : index
    %512 = vector.load %arg15[%c0_167, %c0_168] : memref<16x64xf32, #tpu.memory_space<vmem>>, vector<2x64xf32>
    tpu.vector_store %arg15[%c0_167, %c0_168], %511 {strides = array<i32>} : memref<16x64xf32, #tpu.memory_space<vmem>>, vector<2x64xf32>,
    %513 = arith.select %21, %480, %360 : vector<2x64xi1>, vector<2x64xf32>
    %c2_169 = arith.constant 2 : index
    %c0_170 = arith.constant 0 : index
    %514 = vector.load %arg15[%c2_169, %c0_170] : memref<16x64xf32, #tpu.memory_space<vmem>>, vector<2x64xf32>
    tpu.vector_store %arg15[%c2_169, %c0_170], %513 {strides = array<i32>} : memref<16x64xf32, #tpu.memory_space<vmem>>, vector<2x64xf32>,
    %515 = arith.select %21, %456, %384 : vector<2x64xi1>, vector<2x64xf32>
    %c4_171 = arith.constant 4 : index
    %c0_172 = arith.constant 0 : index
    %516 = vector.load %arg15[%c4_171, %c0_172] : memref<16x64xf32, #tpu.memory_space<vmem>>, vector<2x64xf32>
    tpu.vector_store %arg15[%c4_171, %c0_172], %515 {strides = array<i32>} : memref<16x64xf32, #tpu.memory_space<vmem>>, vector<2x64xf32>,
    %517 = arith.select %21, %432, %408 : vector<2x64xi1>, vector<2x64xf32>
    %c6_173 = arith.constant 6 : index
    %c0_174 = arith.constant 0 : index
    %518 = vector.load %arg15[%c6_173, %c0_174] : memref<16x64xf32, #tpu.memory_space<vmem>>, vector<2x64xf32>
    tpu.vector_store %arg15[%c6_173, %c0_174], %517 {strides = array<i32>} : memref<16x64xf32, #tpu.memory_space<vmem>>, vector<2x64xf32>,
    %519 = arith.select %21, %408, %432 : vector<2x64xi1>, vector<2x64xf32>
    %c8_175 = arith.constant 8 : index
    %c0_176 = arith.constant 0 : index
    %520 = vector.load %arg15[%c8_175, %c0_176] : memref<16x64xf32, #tpu.memory_space<vmem>>, vector<2x64xf32>
    tpu.vector_store %arg15[%c8_175, %c0_176], %519 {strides = array<i32>} : memref<16x64xf32, #tpu.memory_space<vmem>>, vector<2x64xf32>,
    %521 = arith.select %21, %384, %456 : vector<2x64xi1>, vector<2x64xf32>
    %c10_177 = arith.constant 10 : index
    %c0_178 = arith.constant 0 : index
    %522 = vector.load %arg15[%c10_177, %c0_178] : memref<16x64xf32, #tpu.memory_space<vmem>>, vector<2x64xf32>
    tpu.vector_store %arg15[%c10_177, %c0_178], %521 {strides = array<i32>} : memref<16x64xf32, #tpu.memory_space<vmem>>, vector<2x64xf32>,
    %523 = arith.select %21, %360, %480 : vector<2x64xi1>, vector<2x64xf32>
    %c12_179 = arith.constant 12 : index
    %c0_180 = arith.constant 0 : index
    %524 = vector.load %arg15[%c12_179, %c0_180] : memref<16x64xf32, #tpu.memory_space<vmem>>, vector<2x64xf32>
    tpu.vector_store %arg15[%c12_179, %c0_180], %523 {strides = array<i32>} : memref<16x64xf32, #tpu.memory_space<vmem>>, vector<2x64xf32>,
    %525 = arith.select %21, %336, %504 : vector<2x64xi1>, vector<2x64xf32>
    %c14_181 = arith.constant 14 : index
    %c0_182 = arith.constant 0 : index
    %526 = vector.load %arg15[%c14_181, %c0_182] : memref<16x64xf32, #tpu.memory_space<vmem>>, vector<2x64xf32>
    tpu.vector_store %arg15[%c14_181, %c0_182], %525 {strides = array<i32>} : memref<16x64xf32, #tpu.memory_space<vmem>>, vector<2x64xf32>,
    %c0_183 = arith.constant 0 : index
    %c0_184 = arith.constant 0 : index
    %527 = vector.load %arg11[%c0_183, %c0_184] : memref<1x128xf32, #tpu.memory_space<vmem>>, vector<1x128xf32>
    %c0_185 = arith.constant 0 : index
    %c0_186 = arith.constant 0 : index
    %528 = tpu.strided_load %arg15[%c0_185, %c0_186] {strides = array<i32: 8, 1>} : memref<16x64xf32, #tpu.memory_space<vmem>>, vector<2x64xf32>
    %c0_187 = arith.constant 0 : index
    %c0_188 = arith.constant 0 : index
    %529 = vector.load %arg10[%c0_187, %c0_188] : memref<512x128xf32, #tpu.memory_space<vmem>>, vector<64x128xf32>
    %cst_189 = arith.constant dense<0.000000e+00> : vector<2x128xf32>
    %530 = tpu.matmul %528, %529, %cst_189 {dimension_numbers = #tpu.dot_dimension_numbers<[1], [0], [0], [1], [0, 0, 1, 1], [], []>} : vector<2x64xf32>, vector<64x128xf32>, vector<2x128xf32> -> vector<2x128xf32>
    %531 = vector.broadcast %527 : vector<1x128xf32> to vector<2x128xf32>
    %532 = arith.addf %531, %530 : vector<2x128xf32>
    %c1_190 = arith.constant 1 : index
    %c0_191 = arith.constant 0 : index
    %533 = tpu.strided_load %arg15[%c1_190, %c0_191] {strides = array<i32: 8, 1>} : memref<16x64xf32, #tpu.memory_space<vmem>>, vector<2x64xf32>
    %c64 = arith.constant 64 : index
    %c0_192 = arith.constant 0 : index
    %534 = vector.load %arg10[%c64, %c0_192] : memref<512x128xf32, #tpu.memory_space<vmem>>, vector<64x128xf32>
    %cst_193 = arith.constant dense<0.000000e+00> : vector<2x128xf32>
    %535 = tpu.matmul %533, %534, %cst_193 {dimension_numbers = #tpu.dot_dimension_numbers<[1], [0], [0], [1], [0, 0, 1, 1], [], []>} : vector<2x64xf32>, vector<64x128xf32>, vector<2x128xf32> -> vector<2x128xf32>
    %536 = arith.addf %532, %535 : vector<2x128xf32>
    %c2_194 = arith.constant 2 : index
    %c0_195 = arith.constant 0 : index
    %537 = tpu.strided_load %arg15[%c2_194, %c0_195] {strides = array<i32: 8, 1>} : memref<16x64xf32, #tpu.memory_space<vmem>>, vector<2x64xf32>
    %c128 = arith.constant 128 : index
    %c0_196 = arith.constant 0 : index
    %538 = vector.load %arg10[%c128, %c0_196] : memref<512x128xf32, #tpu.memory_space<vmem>>, vector<64x128xf32>
    %cst_197 = arith.constant dense<0.000000e+00> : vector<2x128xf32>
    %539 = tpu.matmul %537, %538, %cst_197 {dimension_numbers = #tpu.dot_dimension_numbers<[1], [0], [0], [1], [0, 0, 1, 1], [], []>} : vector<2x64xf32>, vector<64x128xf32>, vector<2x128xf32> -> vector<2x128xf32>
    %540 = arith.addf %536, %539 : vector<2x128xf32>
    %c3 = arith.constant 3 : index
    %c0_198 = arith.constant 0 : index
    %541 = tpu.strided_load %arg15[%c3, %c0_198] {strides = array<i32: 8, 1>} : memref<16x64xf32, #tpu.memory_space<vmem>>, vector<2x64xf32>
    %c192 = arith.constant 192 : index
    %c0_199 = arith.constant 0 : index
    %542 = vector.load %arg10[%c192, %c0_199] : memref<512x128xf32, #tpu.memory_space<vmem>>, vector<64x128xf32>
    %cst_200 = arith.constant dense<0.000000e+00> : vector<2x128xf32>
    %543 = tpu.matmul %541, %542, %cst_200 {dimension_numbers = #tpu.dot_dimension_numbers<[1], [0], [0], [1], [0, 0, 1, 1], [], []>} : vector<2x64xf32>, vector<64x128xf32>, vector<2x128xf32> -> vector<2x128xf32>
    %544 = arith.addf %540, %543 : vector<2x128xf32>
    %c4_201 = arith.constant 4 : index
    %c0_202 = arith.constant 0 : index
    %545 = tpu.strided_load %arg15[%c4_201, %c0_202] {strides = array<i32: 8, 1>} : memref<16x64xf32, #tpu.memory_space<vmem>>, vector<2x64xf32>
    %c256 = arith.constant 256 : index
    %c0_203 = arith.constant 0 : index
    %546 = vector.load %arg10[%c256, %c0_203] : memref<512x128xf32, #tpu.memory_space<vmem>>, vector<64x128xf32>
    %cst_204 = arith.constant dense<0.000000e+00> : vector<2x128xf32>
    %547 = tpu.matmul %545, %546, %cst_204 {dimension_numbers = #tpu.dot_dimension_numbers<[1], [0], [0], [1], [0, 0, 1, 1], [], []>} : vector<2x64xf32>, vector<64x128xf32>, vector<2x128xf32> -> vector<2x128xf32>
    %548 = arith.addf %544, %547 : vector<2x128xf32>
    %c5 = arith.constant 5 : index
    %c0_205 = arith.constant 0 : index
    %549 = tpu.strided_load %arg15[%c5, %c0_205] {strides = array<i32: 8, 1>} : memref<16x64xf32, #tpu.memory_space<vmem>>, vector<2x64xf32>
    %c320 = arith.constant 320 : index
    %c0_206 = arith.constant 0 : index
    %550 = vector.load %arg10[%c320, %c0_206] : memref<512x128xf32, #tpu.memory_space<vmem>>, vector<64x128xf32>
    %cst_207 = arith.constant dense<0.000000e+00> : vector<2x128xf32>
    %551 = tpu.matmul %549, %550, %cst_207 {dimension_numbers = #tpu.dot_dimension_numbers<[1], [0], [0], [1], [0, 0, 1, 1], [], []>} : vector<2x64xf32>, vector<64x128xf32>, vector<2x128xf32> -> vector<2x128xf32>
    %552 = arith.addf %548, %551 : vector<2x128xf32>
    %c6_208 = arith.constant 6 : index
    %c0_209 = arith.constant 0 : index
    %553 = tpu.strided_load %arg15[%c6_208, %c0_209] {strides = array<i32: 8, 1>} : memref<16x64xf32, #tpu.memory_space<vmem>>, vector<2x64xf32>
    %c384 = arith.constant 384 : index
    %c0_210 = arith.constant 0 : index
    %554 = vector.load %arg10[%c384, %c0_210] : memref<512x128xf32, #tpu.memory_space<vmem>>, vector<64x128xf32>
    %cst_211 = arith.constant dense<0.000000e+00> : vector<2x128xf32>
    %555 = tpu.matmul %553, %554, %cst_211 {dimension_numbers = #tpu.dot_dimension_numbers<[1], [0], [0], [1], [0, 0, 1, 1], [], []>} : vector<2x64xf32>, vector<64x128xf32>, vector<2x128xf32> -> vector<2x128xf32>
    %556 = arith.addf %552, %555 : vector<2x128xf32>
    %c7 = arith.constant 7 : index
    %c0_212 = arith.constant 0 : index
    %557 = tpu.strided_load %arg15[%c7, %c0_212] {strides = array<i32: 8, 1>} : memref<16x64xf32, #tpu.memory_space<vmem>>, vector<2x64xf32>
    %c448 = arith.constant 448 : index
    %c0_213 = arith.constant 0 : index
    %558 = vector.load %arg10[%c448, %c0_213] : memref<512x128xf32, #tpu.memory_space<vmem>>, vector<64x128xf32>
    %cst_214 = arith.constant dense<0.000000e+00> : vector<2x128xf32>
    %559 = tpu.matmul %557, %558, %cst_214 {dimension_numbers = #tpu.dot_dimension_numbers<[1], [0], [0], [1], [0, 0, 1, 1], [], []>} : vector<2x64xf32>, vector<64x128xf32>, vector<2x128xf32> -> vector<2x128xf32>
    %560 = arith.addf %556, %559 : vector<2x128xf32>
    %c0_215 = arith.constant 0 : index
    %c0_216 = arith.constant 0 : index
    %561 = vector.load %arg12[%c0_215, %c0_216] : memref<2x128xf32, #tpu.memory_space<vmem>>, vector<2x128xf32>
    tpu.vector_store %arg12[%c0_215, %c0_216], %560 {strides = array<i32>} : memref<2x128xf32, #tpu.memory_space<vmem>>, vector<2x128xf32>,
    return
  }
}

</mosaic_0001>

<llo_original>
// kernel: tpu_custom_call.1
$region0: #{tpu_custom_call.1}
  #allocation0 [shape = 'u32[]', space=smem, size = 0x4, offset = 0x4, fixed_abs, tag = 'smem constant byte address 0x4 - core index']
  #allocation1 [shape = 'u32[144,128]{1,0:T(1,128)}', space=vmem, size = 0x12000, scoped, tag = 'internal scratch']
  #allocation2 [shape = 'f32[16,64]{1,0:T(8,128)}', space=vmem, size = 0x2000, scoped, tag = 'scratch operand']
  %s0 = inlined_call_operand.vmem [shape: s32[16,1], index: 0, kind: input, shape index: {}]
  %s1 = inlined_call_operand.vmem [shape: f32[128,16], index: 1, kind: input, shape index: {}]
  %s2 = inlined_call_operand.vmem [shape: f32[2,2,64], index: 2, kind: input, shape index: {}]
  %s3 = inlined_call_operand.vmem [shape: f32[2,2,64], index: 3, kind: input, shape index: {}]
  %s4 = inlined_call_operand.vmem [shape: f32[16,256], index: 4, kind: input, shape index: {}]
  %s5 = inlined_call_operand.vmem [shape: f32[64,256], index: 5, kind: input, shape index: {}]
  %s6 = inlined_call_operand.vmem [shape: f32[1,256], index: 6, kind: input, shape index: {}]
  %s7 = inlined_call_operand.hbm [shape: f32[64,256], index: 7, kind: input, shape index: {}]
  %s8 = inlined_call_operand.hbm [shape: f32[64,256], index: 8, kind: input, shape index: {}]
  %s9 = inlined_call_operand.vmem [shape: f32[1,256], index: 9, kind: input, shape index: {}]
  %s10 = inlined_call_operand.hbm [shape: f32[512,128], index: 10, kind: input, shape index: {}]
  %s11 = inlined_call_operand.vmem [shape: f32[1,128], index: 11, kind: input, shape index: {}]
  %s12 = inlined_call_operand.hbm [shape: f32[2,128], index: 12, kind: output, shape index: {0}]
  %s13 = inlined_call_operand.hbm [shape: f32[2,2,64], index: 13, kind: output, shape index: {1}]
  %s14 = inlined_call_operand.hbm [shape: f32[2,2,64], index: 14, kind: output, shape index: {2}]
  %15 = xla_tuple %s12, %s13, %s14
  %s16 = sld [smem:[#allocation0]]
  $region86: #{tpu_custom_call.1} parent=0
    _
  %s18 = ssub.s32 1, %s16
  %s19 = scalar_select 0, %s18, %s16
  $region1: #{tpu_custom_call.1} parent=0
    #allocation3 [shape = 'u8[65536]{0}', space=vmem, size = 0x10000, scoped, tag = 'input window, operand 7, single buffered']
    #allocation4 [shape = 's32[1]{0}', space=sflag, size = 0x4, scoped, tag = 'scoped memory for tpu_custom_call.1']
    #allocation5 [shape = 's32[1]{0}', space=sflag, size = 0x4, scoped, tag = 'scoped memory for tpu_custom_call.1']
    #allocation6 [shape = 'u8[65536]{0}', space=vmem, size = 0x10000, scoped, tag = 'input window, operand 8, single buffered']
    #allocation7 [shape = 's32[1]{0}', space=sflag, size = 0x4, scoped, tag = 'scoped memory for tpu_custom_call.1']
    #allocation8 [shape = 'u8[262144]{0}', space=vmem, size = 0x40000, scoped, tag = 'input window, operand 10, single buffered']
    #allocation9 [shape = 'u8[1024]{0}', space=vmem, size = 0x400, scoped, tag = 'output window, operand 0, single buffered']
    #allocation10 [shape = 'u8[2048]{0}', space=vmem, size = 0x800, scoped, tag = 'output window, operand 1, single buffered']
    #allocation11 [shape = 's32[1]{0}', space=sflag, size = 0x4, scoped, tag = 'scoped memory for tpu_custom_call.1']
    #allocation12 [shape = 'u8[2048]{0}', space=vmem, size = 0x800, scoped, tag = 'output window, operand 2, single buffered']
    %20 = vsyncpa [#allocation4], 0
    %21 = vsyncpa [#allocation7], 0
    %22 = vsyncpa [#allocation5], 0
    %23 = vsyncpa [#allocation11], 0
    // Predicated region
    $region2: #{tpu_custom_call.1} parent=1 // pred_check
      _
    $region3: #{tpu_custom_call.1} parent=1 // pred_check_branch
      %25 = sbr.rel (0) target = $region5
    $region4: #{tpu_custom_call.1} parent=1 // pred_region
      _
    $region5: #{tpu_custom_call.1} parent=1 // pred_fallthru
      _
    // Predicated region
    $region6: #{tpu_custom_call.1} parent=1 // pred_check
      _
    $region7: #{tpu_custom_call.1} parent=1 // pred_check_branch
      %27 = sbr.rel (0) target = $region9
    $region8: #{tpu_custom_call.1} parent=1 // pred_region
      _
    $region9: #{tpu_custom_call.1} parent=1 // pred_fallthru
      _
    // Predicated region
    $region10: #{tpu_custom_call.1} parent=1 // pred_check
      _
    $region11: #{tpu_custom_call.1} parent=1 // pred_check_branch
      %29 = sbr.rel (0) target = $region13
    $region12: #{tpu_custom_call.1} parent=1 // pred_region
      _
    $region13: #{tpu_custom_call.1} parent=1 // pred_fallthru
      _
    // Predicated region
    $region14: #{tpu_custom_call.1} parent=1 // pred_check
      _
    $region15: #{tpu_custom_call.1} parent=1 // pred_check_branch
      %31 = sbr.rel (0) target = $region17
    $region16: #{tpu_custom_call.1} parent=1 // pred_region
      _
    $region17: #{tpu_custom_call.1} parent=1 // pred_fallthru
      _
    // Predicated region
    $region18: #{tpu_custom_call.1} parent=1 // pred_check
      _
    $region19: #{tpu_custom_call.1} parent=1 // pred_check_branch
      %33 = sbr.rel (0) target = $region21
    $region20: #{tpu_custom_call.1} parent=1 // pred_region
      _
    $region21: #{tpu_custom_call.1} parent=1 // pred_fallthru
      _
    // Predicated region
    $region22: #{tpu_custom_call.1} parent=1 // pred_check
      _
    $region23: #{tpu_custom_call.1} parent=1 // pred_check_branch
      %35 = sbr.rel (0) target = $region25
    $region24: #{tpu_custom_call.1} parent=1 // pred_region
      _
    $region25: #{tpu_custom_call.1} parent=1 // pred_fallthru
      _
    // Predicated region
    $region26: #{tpu_custom_call.1} parent=1 // pred_check
      _
    $region27: #{tpu_custom_call.1} parent=1 // pred_check_branch
      %37 = sbr.rel (0) target = $region29
    $region28: #{tpu_custom_call.1} parent=1 // pred_region
      _
    $region29: #{tpu_custom_call.1} parent=1 // pred_fallthru
      _
    // Predicated region
    $region30: #{tpu_custom_call.1} parent=1 // pred_check
      _
    $region31: #{tpu_custom_call.1} parent=1 // pred_check_branch
      %39 = sbr.rel (0) target = $region33
    $region32: #{tpu_custom_call.1} parent=1 // pred_region
      %s41 = ssub.s32 2048, 2048
      %42 = vsyncadd [#allocation4], %s41
      %s43 = sshll.u32 [#allocation3], 4
      %s44 = int_to_ptr.vmem [resolvable:$true] %s43
      %49 = dma.hbm_to_vmem [thread:$0]  %s7, 2048, %s44, [#allocation4], 256, 256, 16
    $region33: #{tpu_custom_call.1} parent=1 // pred_fallthru
      _
    // Predicated region
    $region34: #{tpu_custom_call.1} parent=1 // pred_check
      _
    $region35: #{tpu_custom_call.1} parent=1 // pred_check_branch
      %51 = sbr.rel (0) target = $region37
    $region36: #{tpu_custom_call.1} parent=1 // pred_region
      %s53 = ssub.s32 2048, 2048
      %54 = vsyncadd [#allocation7], %s53
      %s55 = sshll.u32 [#allocation6], 4
      %s56 = int_to_ptr.vmem [resolvable:$true] %s55
      %61 = dma.hbm_to_vmem [thread:$0]  %s8, 2048, %s56, [#allocation7], 256, 256, 16
    $region37: #{tpu_custom_call.1} parent=1 // pred_fallthru
      _
    // Predicated region
    $region38: #{tpu_custom_call.1} parent=1 // pred_check
      _
    $region39: #{tpu_custom_call.1} parent=1 // pred_check_branch
      %63 = sbr.rel (0) target = $region41
    $region40: #{tpu_custom_call.1} parent=1 // pred_region
      _
    $region41: #{tpu_custom_call.1} parent=1 // pred_fallthru
      _
    // Predicated region
    $region42: #{tpu_custom_call.1} parent=1 // pred_check
      _
    $region43: #{tpu_custom_call.1} parent=1 // pred_check_branch
      %65 = sbr.rel (0) target = $region45
    $region44: #{tpu_custom_call.1} parent=1 // pred_region
      %s67 = ssub.s32 8192, 8192
      %68 = vsyncadd [#allocation7], %s67
      %s69 = sshll.u32 [#allocation8], 4
      %s70 = int_to_ptr.vmem [resolvable:$true] %s69
      %75 = dma.hbm_to_vmem [thread:$0]  %s10, 8192, %s70, [#allocation7], 128, 128, 8
    $region45: #{tpu_custom_call.1} parent=1 // pred_fallthru
      _
    // Predicated region
    $region46: #{tpu_custom_call.1} parent=1 // pred_check
      _
    $region47: #{tpu_custom_call.1} parent=1 // pred_check_branch
      %77 = sbr.rel (0) target = $region49
    $region48: #{tpu_custom_call.1} parent=1 // pred_region
      _
    $region49: #{tpu_custom_call.1} parent=1 // pred_fallthru
      _
    // Predicated region
    $region50: #{tpu_custom_call.1} parent=1 // pred_check
      _
    $region51: #{tpu_custom_call.1} parent=1 // pred_check_branch
      %79 = sbr.rel (0) target = $region53
    $region52: #{tpu_custom_call.1} parent=1 // pred_region
      %80 = dma.done [#allocation4], 2048
    $region53: #{tpu_custom_call.1} parent=1 // pred_fallthru
      _
    // Predicated region
    $region54: #{tpu_custom_call.1} parent=1 // pred_check
      _
    $region55: #{tpu_custom_call.1} parent=1 // pred_check_branch
      %82 = sbr.rel (0) target = $region57
    $region56: #{tpu_custom_call.1} parent=1 // pred_region
      %83 = dma.done [#allocation7], 2048
    $region57: #{tpu_custom_call.1} parent=1 // pred_fallthru
      _
    // Predicated region
    $region58: #{tpu_custom_call.1} parent=1 // pred_check
      _
    $region59: #{tpu_custom_call.1} parent=1 // pred_check_branch
      %85 = sbr.rel (0) target = $region61
    $region60: #{tpu_custom_call.1} parent=1 // pred_region
      %86 = dma.done [#allocation7], 8192
    $region61: #{tpu_custom_call.1} parent=1 // pred_fallthru
      _
    %v87 = vlaneseq
    %v88 = vand.u32 %v87, 127
    %v89 = vadd.s32 %v88, 128
    %vm90 = vcmp.lt.s32.totalorder %v88, 0
    %v91 = vsub.s32 0, %v88
    %v92 = vsel %vm90, %v91, %v88
    %v93 = vshrl.u32 %v92, 6
    %v94 = vand.u32 %v92, 63
    %v95 = vsub.s32 0, %v94
    %v96 = vsel %vm90, %v95, %v94
    %vm97 = vcmp.lt.s32.totalorder %v89, 0
    %v98 = vsub.s32 0, %v89
    %v99 = vsel %vm97, %v98, %v89
    %v100 = vshrl.u32 %v99, 6
    %v101 = vand.u32 %v99, 63
    %v102 = vsub.s32 0, %v101
    %v103 = vsel %vm97, %v102, %v101
    %vm104 = vcmp.ne.s32.totalorder %v96, 0
    %vm105 = vcmp.ne.s32.totalorder %v103, 0
    %vm106 = vcmp.lt.s32.totalorder %v96, 0
    %vm107 = vcmp.lt.s32.totalorder %v103, 0
    %vm108 = vmand %vm106, %vm104
    %vm109 = vmand %vm107, %vm105
    %v110 = vadd.s32 %v96, 64
    %v111 = vadd.s32 %v103, 64
    %v112 = vsel %vm108, %v110, %v96
    %v113 = vsel %vm109, %v111, %v103
    %vm114 = vcmp.ge.s32.totalorder %v112, 32
    %vm115 = vcmp.ge.s32.totalorder %v113, 32
    %vm116 = vcmp.ge.s32.totalorder %v88, 32
    %v117 = vld [vmem:[%s0] sm:$0xff]
    %v118 = vld [vmem:[%s0 + $0x8] sm:$0xff]
    %119 = vset.pattern.permute.xlu0 0
    %120 = vperm.xlu0 %119, %v117
    %v121 = vpop.permute.xlu0 %120
    %122 = vset.pattern.permute.xlu0 0
    %123 = vperm.xlu0 %122, %v118
    %v124 = vpop.permute.xlu0 %123
    %vm125 = vcmp.eq.s32.totalorder %v88, %v121
    %vm126 = vcmp.eq.s32.totalorder %v88, %v124
    %v127 = vsel %vm125, 1, 0
    %v128 = vsel %vm126, 1, 0
    %v129 = vcvt.s32.f32 %v127
    %v130 = vcvt.s32.f32 %v128
    %v131 = vld [vmem:[%s1] sm:$0xff]
    %v132 = vld [vmem:[%s1 + $0x8] sm:$0xff]
    %v133 = vld [vmem:[%s1 + $0x10] sm:$0xff]
    %v134 = vld [vmem:[%s1 + $0x18] sm:$0xff]
    %v135 = vld [vmem:[%s1 + $0x20] sm:$0xff]
    %v136 = vld [vmem:[%s1 + $0x28] sm:$0xff]
    %v137 = vld [vmem:[%s1 + $0x30] sm:$0xff]
    %v138 = vld [vmem:[%s1 + $0x38] sm:$0xff]
    %v139 = vld [vmem:[%s1 + $0x40] sm:$0xff]
    %v140 = vld [vmem:[%s1 + $0x48] sm:$0xff]
    %v141 = vld [vmem:[%s1 + $0x50] sm:$0xff]
    %v142 = vld [vmem:[%s1 + $0x58] sm:$0xff]
    %v143 = vld [vmem:[%s1 + $0x60] sm:$0xff]
    %v144 = vld [vmem:[%s1 + $0x68] sm:$0xff]
    %v145 = vld [vmem:[%s1 + $0x70] sm:$0xff]
    %v146 = vld [vmem:[%s1 + $0x78] sm:$0xff]
    %147 = vmatprep.subr.mxu0 0.0
    %148 = vmatpush1.msra.mxu0 %v131
    %149 = vmatprep.subr.mxu0 0.0
    %150 = vmatpush1.msra.mxu0 %v132
    %151 = vmatprep.subr.mxu0 0.0
    %152 = vmatpush1.msra.mxu0 %v133
    %153 = vmatprep.subr.mxu0 0.0
    %154 = vmatpush1.msra.mxu0 %v134
    %155 = vmatprep.subr.mxu0 0.0
    %156 = vmatpush1.msra.mxu0 %v135
    %157 = vmatprep.subr.mxu0 0.0
    %158 = vmatpush1.msra.mxu0 %v136
    %159 = vmatprep.subr.mxu0 0.0
    %160 = vmatpush1.msra.mxu0 %v137
    %161 = vmatprep.subr.mxu0 0.0
    %162 = vmatpush1.msra.mxu0 %v138
    %163 = vmatprep.subr.mxu0 0.0
    %164 = vmatpush1.msra.mxu0 %v139
    %165 = vmatprep.subr.mxu0 0.0
    %166 = vmatpush1.msra.mxu0 %v140
    %167 = vmatprep.subr.mxu0 0.0
    %168 = vmatpush1.msra.mxu0 %v141
    %169 = vmatprep.subr.mxu0 0.0
    %170 = vmatpush1.msra.mxu0 %v142
    %171 = vmatprep.subr.mxu0 0.0
    %172 = vmatpush1.msra.mxu0 %v143
    %173 = vmatprep.subr.mxu0 0.0
    %174 = vmatpush1.msra.mxu0 %v144
    %175 = vmatprep.subr.mxu0 0.0
    %176 = vmatpush1.msra.mxu0 %v145
    %177 = vmatprep.subr.mxu0 0.0
    %178 = vmatpush1.msra.mxu0 %v146
    %179 = vmatprep.subr.mxu0 0.0
    %180 = vmatpush1.msra.mxu0 0.0
    %181 = vmatprep.subr.mxu0 0.0
    %182 = vmatpush1.msra.mxu0 0.0
    %183 = vmatprep.subr.mxu0 0.0
    %184 = vmatpush1.msra.mxu0 0.0
    %185 = vmatprep.subr.mxu0 0.0
    %186 = vmatpush1.msra.mxu0 0.0
    %187 = vmatprep.subr.mxu0 0.0
    %188 = vmatpush1.msra.mxu0 0.0
    %189 = vmatprep.subr.mxu0 0.0
    %190 = vmatpush1.msra.mxu0 0.0
    %191 = vmatprep.subr.mxu0 0.0
    %192 = vmatpush1.msra.mxu0 0.0
    %193 = vmatprep.subr.mxu0 0.0
    %194 = vmatpush1.msra.mxu0 0.0
    %195 = vmatprep.subr.mxu0 0.0
    %196 = vmatpush1.msra.mxu0 0.0
    %197 = vmatprep.subr.mxu0 0.0
    %198 = vmatpush1.msra.mxu0 0.0
    %199 = vmatprep.subr.mxu0 0.0
    %200 = vmatpush1.msra.mxu0 0.0
    %201 = vmatprep.subr.mxu0 0.0
    %202 = vmatpush1.msra.mxu0 0.0
    %203 = vmatprep.subr.mxu0 0.0
    %204 = vmatpush1.msra.mxu0 0.0
    %205 = vmatprep.subr.mxu0 0.0
    %206 = vmatpush1.msra.mxu0 0.0
    %207 = vmatprep.subr.mxu0 0.0
    %208 = vmatpush1.msra.mxu0 0.0
    %209 = vmatprep.subr.mxu0 0.0
    %210 = vmatpush1.msra.mxu0 0.0
    %211 = vmatprep.mubr.f32.mxu0 0.0
    %212 = vmatmul.mubr.f32.gmra.mrb[0].mxu0 %v129
    %v213 = vpop.f32.mrb[0].mxu0
    %v214 = vadd.f32 0.0, %v213
    %v215 = vpop.f32.mrb[0].mxu0
    %216 = vmatprep.mubr.f32.mxu0 0.0
    %217 = vmatmul.mubr.f32.gmra.mrb[0].mxu0 %v130
    %v218 = vpop.f32.mrb[0].mxu0
    %v219 = vadd.f32 0.0, %v218
    %v220 = vpop.f32.mrb[0].mxu0
    %221 = vdwg.mxu0
    %v222 = vld [vmem:[%s4] sm:$0xff]
    %v223 = vld [vmem:[%s4 + $0x8] sm:$0xff]
    %v224 = vld [vmem:[%s4 + $0x10] sm:$0xff]
    %v225 = vld [vmem:[%s4 + $0x18] sm:$0xff]
    %v226 = vld [vmem:[%s6] sm:$0x3]
    %v228 = vlaneseq
    %v229 = vshrl.u32 %v228, 7
    %v230 = vsub.s32 0, %v229
    %v231 = vrot.slane %v226, %v230
    %v232 = vlaneseq
    %v233 = vshrl.u32 %v232, 7
    %v234 = vsub.s32 1, %v233
    %v235 = vrot.slane %v226, %v234
    %vm238 = vcmask 130048
    %v240 = vsel %vm238, %v214, 0
    %v243 = vsel %vm238, %v219, 0
    %245 = vmatprep.subr.mxu0 %v223
    %246 = vmatpush1.msra.mxu0 %v222
    %247 = vmatprep.subr.mxu0 %v225
    %248 = vmatpush1.msra.mxu0 %v224
    %249 = vmatprep.subr.mxu0 0.0
    %250 = vmatpush1.msra.mxu0 0.0
    %251 = vmatprep.subr.mxu0 0.0
    %252 = vmatpush1.msra.mxu0 0.0
    %253 = vmatprep.subr.mxu0 0.0
    %254 = vmatpush1.msra.mxu0 0.0
    %255 = vmatprep.subr.mxu0 0.0
    %256 = vmatpush1.msra.mxu0 0.0
    %257 = vmatprep.subr.mxu0 0.0
    %258 = vmatpush1.msra.mxu0 0.0
    %259 = vmatprep.subr.mxu0 0.0
    %260 = vmatpush1.msra.mxu0 0.0
    %261 = vmatprep.subr.mxu0 0.0
    %262 = vmatpush1.msra.mxu0 0.0
    %263 = vmatprep.subr.mxu0 0.0
    %264 = vmatpush1.msra.mxu0 0.0
    %265 = vmatprep.subr.mxu0 0.0
    %266 = vmatpush1.msra.mxu0 0.0
    %267 = vmatprep.subr.mxu0 0.0
    %268 = vmatpush1.msra.mxu0 0.0
    %269 = vmatprep.subr.mxu0 0.0
    %270 = vmatpush1.msra.mxu0 0.0
    %271 = vmatprep.subr.mxu0 0.0
    %272 = vmatpush1.msra.mxu0 0.0
    %273 = vmatprep.subr.mxu0 0.0
    %274 = vmatpush1.msra.mxu0 0.0
    %275 = vmatprep.subr.mxu0 0.0
    %276 = vmatpush1.msra.mxu0 0.0
    %277 = vmatprep.subr.mxu0 0.0
    %278 = vmatpush1.msra.mxu0 0.0
    %279 = vmatprep.subr.mxu0 0.0
    %280 = vmatpush1.msra.mxu0 0.0
    %281 = vmatprep.subr.mxu0 0.0
    %282 = vmatpush1.msra.mxu0 0.0
    %283 = vmatprep.subr.mxu0 0.0
    %284 = vmatpush1.msra.mxu0 0.0
    %285 = vmatprep.subr.mxu0 0.0
    %286 = vmatpush1.msra.mxu0 0.0
    %287 = vmatprep.subr.mxu0 0.0
    %288 = vmatpush1.msra.mxu0 0.0
    %289 = vmatprep.subr.mxu0 0.0
    %290 = vmatpush1.msra.mxu0 0.0
    %291 = vmatprep.subr.mxu0 0.0
    %292 = vmatpush1.msra.mxu0 0.0
    %293 = vmatprep.subr.mxu0 0.0
    %294 = vmatpush1.msra.mxu0 0.0
    %295 = vmatprep.subr.mxu0 0.0
    %296 = vmatpush1.msra.mxu0 0.0
    %297 = vmatprep.subr.mxu0 0.0
    %298 = vmatpush1.msra.mxu0 0.0
    %299 = vmatprep.subr.mxu0 0.0
    %300 = vmatpush1.msra.mxu0 0.0
    %301 = vmatprep.subr.mxu0 0.0
    %302 = vmatpush1.msra.mxu0 0.0
    %303 = vmatprep.subr.mxu0 0.0
    %304 = vmatpush1.msra.mxu0 0.0
    %305 = vmatprep.subr.mxu0 0.0
    %306 = vmatpush1.msra.mxu0 0.0
    %307 = vmatprep.subr.mxu0 0.0
    %308 = vmatpush1.msra.mxu0 0.0
    %309 = vmatprep.mubr.f32.mxu0 0.0
    %310 = vmatmul.mubr.f32.gmra.mrb[0].mxu0 %v240
    %v311 = vpop.f32.mrb[0].mxu0
    %v312 = vadd.f32 %v231, %v311
    %v313 = vpop.f32.mrb[0].mxu0
    %v314 = vadd.f32 %v235, %v313
    %315 = vmatprep.mubr.f32.mxu0 0.0
    %316 = vmatmul.mubr.f32.gmra.mrb[0].mxu0 %v243
    %v317 = vpop.f32.mrb[0].mxu0
    %v318 = vadd.f32 %v231, %v317
    %v319 = vpop.f32.mrb[0].mxu0
    %v320 = vadd.f32 %v235, %v319
    %321 = vdwg.mxu0
    %v324 = vrot.slane %v312, 2
    %v325 = vrot.slane %v314, 2
    %v328 = vsel %vm114, %v318, %v324
    %v329 = vsel %vm115, %v320, %v325
    %v330 = vrot.slane %v312, 6
    %v331 = vrot.slane %v314, 6
    %v334 = vsel %vm114, %v318, %v330
    %v335 = vsel %vm115, %v320, %v331
    %v338 = vrot.slane %v318, 2
    %v339 = vrot.slane %v320, 2
    %v342 = vsel %vm114, %v312, %v338
    %v343 = vsel %vm115, %v314, %v339
    %v344 = vrot.slane %v318, 6
    %v345 = vrot.slane %v320, 6
    %v348 = vsel %vm114, %v312, %v344
    %v349 = vsel %vm115, %v314, %v345
    %v350 = vld [vmem:[%s5] sm:$0xff]
    %v351 = vld [vmem:[%s5 + $0x8] sm:$0xff]
    %v352 = vld [vmem:[%s5 + $0x10] sm:$0xff]
    %v353 = vld [vmem:[%s5 + $0x18] sm:$0xff]
    %v354 = vld [vmem:[%s5 + $0x20] sm:$0xff]
    %v355 = vld [vmem:[%s5 + $0x28] sm:$0xff]
    %v356 = vld [vmem:[%s5 + $0x30] sm:$0xff]
    %v357 = vld [vmem:[%s5 + $0x38] sm:$0xff]
    %v358 = vld [vmem:[%s5 + $0x40] sm:$0xff]
    %v359 = vld [vmem:[%s5 + $0x48] sm:$0xff]
    %v360 = vld [vmem:[%s5 + $0x50] sm:$0xff]
    %v361 = vld [vmem:[%s5 + $0x58] sm:$0xff]
    %v362 = vld [vmem:[%s5 + $0x60] sm:$0xff]
    %v363 = vld [vmem:[%s5 + $0x68] sm:$0xff]
    %v364 = vld [vmem:[%s5 + $0x70] sm:$0xff]
    %v365 = vld [vmem:[%s5 + $0x78] sm:$0xff]
    %v366 = vld [vmem:[%s2] sm:$0x3]
    %v367 = vld [vmem:[%s3] sm:$0x3]
    %vm368 = vcmask 523264
    %v370 = vsel %vm368, %v366, 0
    %372 = vmatprep.subr.mxu0 %v351
    %373 = vmatpush1.msra.mxu0 %v350
    %374 = vmatprep.subr.mxu0 %v353
    %375 = vmatpush1.msra.mxu0 %v352
    %376 = vmatprep.subr.mxu0 %v355
    %377 = vmatpush1.msra.mxu0 %v354
    %378 = vmatprep.subr.mxu0 %v357
    %379 = vmatpush1.msra.mxu0 %v356
    %380 = vmatprep.subr.mxu0 %v359
    %381 = vmatpush1.msra.mxu0 %v358
    %382 = vmatprep.subr.mxu0 %v361
    %383 = vmatpush1.msra.mxu0 %v360
    %384 = vmatprep.subr.mxu0 %v363
    %385 = vmatpush1.msra.mxu0 %v362
    %386 = vmatprep.subr.mxu0 %v365
    %387 = vmatpush1.msra.mxu0 %v364
    %388 = vmatprep.subr.mxu0 0.0
    %389 = vmatpush1.msra.mxu0 0.0
    %390 = vmatprep.subr.mxu0 0.0
    %391 = vmatpush1.msra.mxu0 0.0
    %392 = vmatprep.subr.mxu0 0.0
    %393 = vmatpush1.msra.mxu0 0.0
    %394 = vmatprep.subr.mxu0 0.0
    %395 = vmatpush1.msra.mxu0 0.0
    %396 = vmatprep.subr.mxu0 0.0
    %397 = vmatpush1.msra.mxu0 0.0
    %398 = vmatprep.subr.mxu0 0.0
    %399 = vmatpush1.msra.mxu0 0.0
    %400 = vmatprep.subr.mxu0 0.0
    %401 = vmatpush1.msra.mxu0 0.0
    %402 = vmatprep.subr.mxu0 0.0
    %403 = vmatpush1.msra.mxu0 0.0
    %404 = vmatprep.subr.mxu0 0.0
    %405 = vmatpush1.msra.mxu0 0.0
    %406 = vmatprep.subr.mxu0 0.0
    %407 = vmatpush1.msra.mxu0 0.0
    %408 = vmatprep.subr.mxu0 0.0
    %409 = vmatpush1.msra.mxu0 0.0
    %410 = vmatprep.subr.mxu0 0.0
    %411 = vmatpush1.msra.mxu0 0.0
    %412 = vmatprep.subr.mxu0 0.0
    %413 = vmatpush1.msra.mxu0 0.0
    %414 = vmatprep.subr.mxu0 0.0
    %415 = vmatpush1.msra.mxu0 0.0
    %416 = vmatprep.subr.mxu0 0.0
    %417 = vmatpush1.msra.mxu0 0.0
    %418 = vmatprep.subr.mxu0 0.0
    %419 = vmatpush1.msra.mxu0 0.0
    %420 = vmatprep.subr.mxu0 0.0
    %421 = vmatpush1.msra.mxu0 0.0
    %422 = vmatprep.subr.mxu0 0.0
    %423 = vmatpush1.msra.mxu0 0.0
    %424 = vmatprep.subr.mxu0 0.0
    %425 = vmatpush1.msra.mxu0 0.0
    %426 = vmatprep.subr.mxu0 0.0
    %427 = vmatpush1.msra.mxu0 0.0
    %428 = vmatprep.subr.mxu0 0.0
    %429 = vmatpush1.msra.mxu0 0.0
    %430 = vmatprep.subr.mxu0 0.0
    %431 = vmatpush1.msra.mxu0 0.0
    %432 = vmatprep.subr.mxu0 0.0
    %433 = vmatpush1.msra.mxu0 0.0
    %434 = vmatprep.subr.mxu0 0.0
    %435 = vmatpush1.msra.mxu0 0.0
    %436 = vmatprep.mubr.f32.mxu0 0.0
    %437 = vmatmul.mubr.f32.gmra.mrb[0].mxu0 %v370
    %v438 = vpop.f32.mrb[0].mxu0
    %v439 = vadd.f32 0.0, %v438
    %v440 = vpop.f32.mrb[0].mxu0
    %v441 = vadd.f32 0.0, %v440
    %442 = vdwg.mxu0
    %v445 = vrot.slane %v439, 2
    %v446 = vrot.slane %v441, 2
    %v449 = vadd.f32 %v328, %v445
    %v450 = vadd.f32 %v329, %v446
    %v451 = vtanh.pop %v449
    %v452 = vtanh.pop %v450
    %v453 = vmul.f32 %v451, 0.5
    %v454 = vadd.f32 %v453, 0.5
    %v455 = vmul.f32 %v452, 0.5
    %v456 = vadd.f32 %v455, 0.5
    %v458 = vrot.slane %v367, 2
    %459 = vrot.lane.b32.xlu0 %v458, 64
    %v460 = vpop.permute.xlu0 %459
    %v462 = vmul.f32 %v454, %v460
    %v463 = vmul.f32 %v454, %v452
    %465 = vrot.lane.b32.xlu0 %v463, 64
    %v466 = vpop.permute.xlu0 %465
    %v468 = vadd.f32 %v462, %v466
    %v469 = vtanh.pop %v468
    %v470 = vmul.f32 %v456, %v469
    %v472 = vrot.slane %v470, 6
    %473 = vrot.lane.b32.xlu0 %v472, 64
    %v474 = vpop.permute.xlu0 %473
    %v475 = vsel %vm368, %v474, 0
    %477 = vmatprep.subr.mxu0 %v351
    %478 = vmatpush1.msra.mxu0 %v350
    %479 = vmatprep.subr.mxu0 %v353
    %480 = vmatpush1.msra.mxu0 %v352
    %481 = vmatprep.subr.mxu0 %v355
    %482 = vmatpush1.msra.mxu0 %v354
    %483 = vmatprep.subr.mxu0 %v357
    %484 = vmatpush1.msra.mxu0 %v356
    %485 = vmatprep.subr.mxu0 %v359
    %486 = vmatpush1.msra.mxu0 %v358
    %487 = vmatprep.subr.mxu0 %v361
    %488 = vmatpush1.msra.mxu0 %v360
    %489 = vmatprep.subr.mxu0 %v363
    %490 = vmatpush1.msra.mxu0 %v362
    %491 = vmatprep.subr.mxu0 %v365
    %492 = vmatpush1.msra.mxu0 %v364
    %493 = vmatprep.subr.mxu0 0.0
    %494 = vmatpush1.msra.mxu0 0.0
    %495 = vmatprep.subr.mxu0 0.0
    %496 = vmatpush1.msra.mxu0 0.0
    %497 = vmatprep.subr.mxu0 0.0
    %498 = vmatpush1.msra.mxu0 0.0
    %499 = vmatprep.subr.mxu0 0.0
    %500 = vmatpush1.msra.mxu0 0.0
    %501 = vmatprep.subr.mxu0 0.0
    %502 = vmatpush1.msra.mxu0 0.0
    %503 = vmatprep.subr.mxu0 0.0
    %504 = vmatpush1.msra.mxu0 0.0
    %505 = vmatprep.subr.mxu0 0.0
    %506 = vmatpush1.msra.mxu0 0.0
    %507 = vmatprep.subr.mxu0 0.0
    %508 = vmatpush1.msra.mxu0 0.0
    %509 = vmatprep.subr.mxu0 0.0
    %510 = vmatpush1.msra.mxu0 0.0
    %511 = vmatprep.subr.mxu0 0.0
    %512 = vmatpush1.msra.mxu0 0.0
    %513 = vmatprep.subr.mxu0 0.0
    %514 = vmatpush1.msra.mxu0 0.0
    %515 = vmatprep.subr.mxu0 0.0
    %516 = vmatpush1.msra.mxu0 0.0
    %517 = vmatprep.subr.mxu0 0.0
    %518 = vmatpush1.msra.mxu0 0.0
    %519 = vmatprep.subr.mxu0 0.0
    %520 = vmatpush1.msra.mxu0 0.0
    %521 = vmatprep.subr.mxu0 0.0
    %522 = vmatpush1.msra.mxu0 0.0
    %523 = vmatprep.subr.mxu0 0.0
    %524 = vmatpush1.msra.mxu0 0.0
    %525 = vmatprep.subr.mxu0 0.0
    %526 = vmatpush1.msra.mxu0 0.0
    %527 = vmatprep.subr.mxu0 0.0
    %528 = vmatpush1.msra.mxu0 0.0
    %529 = vmatprep.subr.mxu0 0.0
    %530 = vmatpush1.msra.mxu0 0.0
    %531 = vmatprep.subr.mxu0 0.0
    %532 = vmatpush1.msra.mxu0 0.0
    %533 = vmatprep.subr.mxu0 0.0
    %534 = vmatpush1.msra.mxu0 0.0
    %535 = vmatprep.subr.mxu0 0.0
    %536 = vmatpush1.msra.mxu0 0.0
    %537 = vmatprep.subr.mxu0 0.0
    %538 = vmatpush1.msra.mxu0 0.0
    %539 = vmatprep.subr.mxu0 0.0
    %540 = vmatpush1.msra.mxu0 0.0
    %541 = vmatprep.mubr.f32.mxu0 0.0
    %542 = vmatmul.mubr.f32.gmra.mrb[0].mxu0 %v475
    %v543 = vpop.f32.mrb[0].mxu0
    %v544 = vadd.f32 0.0, %v543
    %v545 = vpop.f32.mrb[0].mxu0
    %v546 = vadd.f32 0.0, %v545
    %547 = vdwg.mxu0
    %v550 = vrot.slane %v544, 4
    %v551 = vrot.slane %v546, 4
    %v554 = vadd.f32 %v334, %v550
    %v555 = vadd.f32 %v335, %v551
    %v556 = vtanh.pop %v554
    %v557 = vtanh.pop %v555
    %v558 = vmul.f32 %v556, 0.5
    %v559 = vadd.f32 %v558, 0.5
    %v560 = vmul.f32 %v557, 0.5
    %v561 = vadd.f32 %v560, 0.5
    %v563 = vrot.slane %v468, 2
    %v565 = vmul.f32 %v559, %v563
    %v566 = vmul.f32 %v559, %v557
    %568 = vrot.lane.b32.xlu0 %v566, 64
    %v569 = vpop.permute.xlu0 %568
    %v571 = vadd.f32 %v565, %v569
    %v572 = vtanh.pop %v571
    %v573 = vmul.f32 %v561, %v572
    %v575 = vrot.slane %v573, 4
    %576 = vrot.lane.b32.xlu0 %v575, 64
    %v577 = vpop.permute.xlu0 %576
    %v578 = vsel %vm368, %v577, 0
    %580 = vmatprep.subr.mxu0 %v351
    %581 = vmatpush1.msra.mxu0 %v350
    %582 = vmatprep.subr.mxu0 %v353
    %583 = vmatpush1.msra.mxu0 %v352
    %584 = vmatprep.subr.mxu0 %v355
    %585 = vmatpush1.msra.mxu0 %v354
    %586 = vmatprep.subr.mxu0 %v357
    %587 = vmatpush1.msra.mxu0 %v356
    %588 = vmatprep.subr.mxu0 %v359
    %589 = vmatpush1.msra.mxu0 %v358
    %590 = vmatprep.subr.mxu0 %v361
    %591 = vmatpush1.msra.mxu0 %v360
    %592 = vmatprep.subr.mxu0 %v363
    %593 = vmatpush1.msra.mxu0 %v362
    %594 = vmatprep.subr.mxu0 %v365
    %595 = vmatpush1.msra.mxu0 %v364
    %596 = vmatprep.subr.mxu0 0.0
    %597 = vmatpush1.msra.mxu0 0.0
    %598 = vmatprep.subr.mxu0 0.0
    %599 = vmatpush1.msra.mxu0 0.0
    %600 = vmatprep.subr.mxu0 0.0
    %601 = vmatpush1.msra.mxu0 0.0
    %602 = vmatprep.subr.mxu0 0.0
    %603 = vmatpush1.msra.mxu0 0.0
    %604 = vmatprep.subr.mxu0 0.0
    %605 = vmatpush1.msra.mxu0 0.0
    %606 = vmatprep.subr.mxu0 0.0
    %607 = vmatpush1.msra.mxu0 0.0
    %608 = vmatprep.subr.mxu0 0.0
    %609 = vmatpush1.msra.mxu0 0.0
    %610 = vmatprep.subr.mxu0 0.0
    %611 = vmatpush1.msra.mxu0 0.0
    %612 = vmatprep.subr.mxu0 0.0
    %613 = vmatpush1.msra.mxu0 0.0
    %614 = vmatprep.subr.mxu0 0.0
    %615 = vmatpush1.msra.mxu0 0.0
    %616 = vmatprep.subr.mxu0 0.0
    %617 = vmatpush1.msra.mxu0 0.0
    %618 = vmatprep.subr.mxu0 0.0
    %619 = vmatpush1.msra.mxu0 0.0
    %620 = vmatprep.subr.mxu0 0.0
    %621 = vmatpush1.msra.mxu0 0.0
    %622 = vmatprep.subr.mxu0 0.0
    %623 = vmatpush1.msra.mxu0 0.0
    %624 = vmatprep.subr.mxu0 0.0
    %625 = vmatpush1.msra.mxu0 0.0
    %626 = vmatprep.subr.mxu0 0.0
    %627 = vmatpush1.msra.mxu0 0.0
    %628 = vmatprep.subr.mxu0 0.0
    %629 = vmatpush1.msra.mxu0 0.0
    %630 = vmatprep.subr.mxu0 0.0
    %631 = vmatpush1.msra.mxu0 0.0
    %632 = vmatprep.subr.mxu0 0.0
    %633 = vmatpush1.msra.mxu0 0.0
    %634 = vmatprep.subr.mxu0 0.0
    %635 = vmatpush1.msra.mxu0 0.0
    %636 = vmatprep.subr.mxu0 0.0
    %637 = vmatpush1.msra.mxu0 0.0
    %638 = vmatprep.subr.mxu0 0.0
    %639 = vmatpush1.msra.mxu0 0.0
    %640 = vmatprep.subr.mxu0 0.0
    %641 = vmatpush1.msra.mxu0 0.0
    %642 = vmatprep.subr.mxu0 0.0
    %643 = vmatpush1.msra.mxu0 0.0
    %644 = vmatprep.mubr.f32.mxu0 0.0
    %645 = vmatmul.mubr.f32.gmra.mrb[0].mxu0 %v578
    %v646 = vpop.f32.mrb[0].mxu0
    %v647 = vadd.f32 0.0, %v646
    %v648 = vpop.f32.mrb[0].mxu0
    %v649 = vadd.f32 0.0, %v648
    %650 = vdwg.mxu0
    %v653 = vrot.slane %v647, 6
    %v654 = vrot.slane %v649, 6
    %v657 = vadd.f32 %v328, %v653
    %v658 = vadd.f32 %v329, %v654
    %v659 = vtanh.pop %v657
    %v660 = vtanh.pop %v658
    %v661 = vmul.f32 %v659, 0.5
    %v662 = vadd.f32 %v661, 0.5
    %v663 = vmul.f32 %v660, 0.5
    %v664 = vadd.f32 %v663, 0.5
    %v666 = vrot.slane %v571, 2
    %v668 = vmul.f32 %v662, %v666
    %v669 = vmul.f32 %v662, %v660
    %671 = vrot.lane.b32.xlu0 %v669, 64
    %v672 = vpop.permute.xlu0 %671
    %v674 = vadd.f32 %v668, %v672
    %v675 = vtanh.pop %v674
    %v676 = vmul.f32 %v664, %v675
    %v678 = vrot.slane %v676, 2
    %679 = vrot.lane.b32.xlu0 %v678, 64
    %v680 = vpop.permute.xlu0 %679
    %v681 = vsel %vm368, %v680, 0
    %683 = vmatprep.subr.mxu0 %v351
    %684 = vmatpush1.msra.mxu0 %v350
    %685 = vmatprep.subr.mxu0 %v353
    %686 = vmatpush1.msra.mxu0 %v352
    %687 = vmatprep.subr.mxu0 %v355
    %688 = vmatpush1.msra.mxu0 %v354
    %689 = vmatprep.subr.mxu0 %v357
    %690 = vmatpush1.msra.mxu0 %v356
    %691 = vmatprep.subr.mxu0 %v359
    %692 = vmatpush1.msra.mxu0 %v358
    %693 = vmatprep.subr.mxu0 %v361
    %694 = vmatpush1.msra.mxu0 %v360
    %695 = vmatprep.subr.mxu0 %v363
    %696 = vmatpush1.msra.mxu0 %v362
    %697 = vmatprep.subr.mxu0 %v365
    %698 = vmatpush1.msra.mxu0 %v364
    %699 = vmatprep.subr.mxu0 0.0
    %700 = vmatpush1.msra.mxu0 0.0
    %701 = vmatprep.subr.mxu0 0.0
    %702 = vmatpush1.msra.mxu0 0.0
    %703 = vmatprep.subr.mxu0 0.0
    %704 = vmatpush1.msra.mxu0 0.0
    %705 = vmatprep.subr.mxu0 0.0
    %706 = vmatpush1.msra.mxu0 0.0
    %707 = vmatprep.subr.mxu0 0.0
    %708 = vmatpush1.msra.mxu0 0.0
    %709 = vmatprep.subr.mxu0 0.0
    %710 = vmatpush1.msra.mxu0 0.0
    %711 = vmatprep.subr.mxu0 0.0
    %712 = vmatpush1.msra.mxu0 0.0
    %713 = vmatprep.subr.mxu0 0.0
    %714 = vmatpush1.msra.mxu0 0.0
    %715 = vmatprep.subr.mxu0 0.0
    %716 = vmatpush1.msra.mxu0 0.0
    %717 = vmatprep.subr.mxu0 0.0
    %718 = vmatpush1.msra.mxu0 0.0
    %719 = vmatprep.subr.mxu0 0.0
    %720 = vmatpush1.msra.mxu0 0.0
    %721 = vmatprep.subr.mxu0 0.0
    %722 = vmatpush1.msra.mxu0 0.0
    %723 = vmatprep.subr.mxu0 0.0
    %724 = vmatpush1.msra.mxu0 0.0
    %725 = vmatprep.subr.mxu0 0.0
    %726 = vmatpush1.msra.mxu0 0.0
    %727 = vmatprep.subr.mxu0 0.0
    %728 = vmatpush1.msra.mxu0 0.0
    %729 = vmatprep.subr.mxu0 0.0
    %730 = vmatpush1.msra.mxu0 0.0
    %731 = vmatprep.subr.mxu0 0.0
    %732 = vmatpush1.msra.mxu0 0.0
    %733 = vmatprep.subr.mxu0 0.0
    %734 = vmatpush1.msra.mxu0 0.0
    %735 = vmatprep.subr.mxu0 0.0
    %736 = vmatpush1.msra.mxu0 0.0
    %737 = vmatprep.subr.mxu0 0.0
    %738 = vmatpush1.msra.mxu0 0.0
    %739 = vmatprep.subr.mxu0 0.0
    %740 = vmatpush1.msra.mxu0 0.0
    %741 = vmatprep.subr.mxu0 0.0
    %742 = vmatpush1.msra.mxu0 0.0
    %743 = vmatprep.subr.mxu0 0.0
    %744 = vmatpush1.msra.mxu0 0.0
    %745 = vmatprep.subr.mxu0 0.0
    %746 = vmatpush1.msra.mxu0 0.0
    %747 = vmatprep.mubr.f32.mxu0 0.0
    %748 = vmatmul.mubr.f32.gmra.mrb[0].mxu0 %v681
    %v749 = vpop.f32.mrb[0].mxu0
    %v750 = vadd.f32 0.0, %v749
    %v751 = vpop.f32.mrb[0].mxu0
    %v752 = vadd.f32 0.0, %v751
    %753 = vdwg.mxu0
    %v754 = vadd.f32 %v334, %v750
    %v755 = vadd.f32 %v335, %v752
    %v756 = vtanh.pop %v754
    %v757 = vtanh.pop %v755
    %v758 = vmul.f32 %v756, 0.5
    %v759 = vadd.f32 %v758, 0.5
    %v760 = vmul.f32 %v757, 0.5
    %v761 = vadd.f32 %v760, 0.5
    %v763 = vrot.slane %v674, 2
    %v765 = vmul.f32 %v759, %v763
    %v766 = vmul.f32 %v759, %v757
    %768 = vrot.lane.b32.xlu0 %v766, 64
    %v769 = vpop.permute.xlu0 %768
    %v771 = vadd.f32 %v765, %v769
    %v772 = vtanh.pop %v771
    %v773 = vmul.f32 %v761, %v772
    %775 = vrot.lane.b32.xlu0 %v773, 64
    %v776 = vpop.permute.xlu0 %775
    %v777 = vsel %vm368, %v776, 0
    %779 = vmatprep.subr.mxu0 %v351
    %780 = vmatpush1.msra.mxu0 %v350
    %781 = vmatprep.subr.mxu0 %v353
    %782 = vmatpush1.msra.mxu0 %v352
    %783 = vmatprep.subr.mxu0 %v355
    %784 = vmatpush1.msra.mxu0 %v354
    %785 = vmatprep.subr.mxu0 %v357
    %786 = vmatpush1.msra.mxu0 %v356
    %787 = vmatprep.subr.mxu0 %v359
    %788 = vmatpush1.msra.mxu0 %v358
    %789 = vmatprep.subr.mxu0 %v361
    %790 = vmatpush1.msra.mxu0 %v360
    %791 = vmatprep.subr.mxu0 %v363
    %792 = vmatpush1.msra.mxu0 %v362
    %793 = vmatprep.subr.mxu0 %v365
    %794 = vmatpush1.msra.mxu0 %v364
    %795 = vmatprep.subr.mxu0 0.0
    %796 = vmatpush1.msra.mxu0 0.0
    %797 = vmatprep.subr.mxu0 0.0
    %798 = vmatpush1.msra.mxu0 0.0
    %799 = vmatprep.subr.mxu0 0.0
    %800 = vmatpush1.msra.mxu0 0.0
    %801 = vmatprep.subr.mxu0 0.0
    %802 = vmatpush1.msra.mxu0 0.0
    %803 = vmatprep.subr.mxu0 0.0
    %804 = vmatpush1.msra.mxu0 0.0
    %805 = vmatprep.subr.mxu0 0.0
    %806 = vmatpush1.msra.mxu0 0.0
    %807 = vmatprep.subr.mxu0 0.0
    %808 = vmatpush1.msra.mxu0 0.0
    %809 = vmatprep.subr.mxu0 0.0
    %810 = vmatpush1.msra.mxu0 0.0
    %811 = vmatprep.subr.mxu0 0.0
    %812 = vmatpush1.msra.mxu0 0.0
    %813 = vmatprep.subr.mxu0 0.0
    %814 = vmatpush1.msra.mxu0 0.0
    %815 = vmatprep.subr.mxu0 0.0
    %816 = vmatpush1.msra.mxu0 0.0
    %817 = vmatprep.subr.mxu0 0.0
    %818 = vmatpush1.msra.mxu0 0.0
    %819 = vmatprep.subr.mxu0 0.0
    %820 = vmatpush1.msra.mxu0 0.0
    %821 = vmatprep.subr.mxu0 0.0
    %822 = vmatpush1.msra.mxu0 0.0
    %823 = vmatprep.subr.mxu0 0.0
    %824 = vmatpush1.msra.mxu0 0.0
    %825 = vmatprep.subr.mxu0 0.0
    %826 = vmatpush1.msra.mxu0 0.0
    %827 = vmatprep.subr.mxu0 0.0
    %828 = vmatpush1.msra.mxu0 0.0
    %829 = vmatprep.subr.mxu0 0.0
    %830 = vmatpush1.msra.mxu0 0.0
    %831 = vmatprep.subr.mxu0 0.0
    %832 = vmatpush1.msra.mxu0 0.0
    %833 = vmatprep.subr.mxu0 0.0
    %834 = vmatpush1.msra.mxu0 0.0
    %835 = vmatprep.subr.mxu0 0.0
    %836 = vmatpush1.msra.mxu0 0.0
    %837 = vmatprep.subr.mxu0 0.0
    %838 = vmatpush1.msra.mxu0 0.0
    %839 = vmatprep.subr.mxu0 0.0
    %840 = vmatpush1.msra.mxu0 0.0
    %841 = vmatprep.subr.mxu0 0.0
    %842 = vmatpush1.msra.mxu0 0.0
    %843 = vmatprep.mubr.f32.mxu0 0.0
    %844 = vmatmul.mubr.f32.gmra.mrb[0].mxu0 %v777
    %v845 = vpop.f32.mrb[0].mxu0
    %v846 = vadd.f32 0.0, %v845
    %v847 = vpop.f32.mrb[0].mxu0
    %v848 = vadd.f32 0.0, %v847
    %849 = vdwg.mxu0
    %v852 = vrot.slane %v846, 2
    %v853 = vrot.slane %v848, 2
    %v856 = vadd.f32 %v342, %v852
    %v857 = vadd.f32 %v343, %v853
    %v858 = vtanh.pop %v856
    %v859 = vtanh.pop %v857
    %v860 = vmul.f32 %v858, 0.5
    %v861 = vadd.f32 %v860, 0.5
    %v862 = vmul.f32 %v859, 0.5
    %v863 = vadd.f32 %v862, 0.5
    %v865 = vrot.slane %v771, 2
    %v867 = vmul.f32 %v861, %v865
    %v868 = vmul.f32 %v861, %v859
    %870 = vrot.lane.b32.xlu0 %v868, 64
    %v871 = vpop.permute.xlu0 %870
    %v873 = vadd.f32 %v867, %v871
    %v874 = vtanh.pop %v873
    %v875 = vmul.f32 %v863, %v874
    %v877 = vrot.slane %v875, 6
    %878 = vrot.lane.b32.xlu0 %v877, 64
    %v879 = vpop.permute.xlu0 %878
    %v880 = vsel %vm368, %v879, 0
    %882 = vmatprep.subr.mxu0 %v351
    %883 = vmatpush1.msra.mxu0 %v350
    %884 = vmatprep.subr.mxu0 %v353
    %885 = vmatpush1.msra.mxu0 %v352
    %886 = vmatprep.subr.mxu0 %v355
    %887 = vmatpush1.msra.mxu0 %v354
    %888 = vmatprep.subr.mxu0 %v357
    %889 = vmatpush1.msra.mxu0 %v356
    %890 = vmatprep.subr.mxu0 %v359
    %891 = vmatpush1.msra.mxu0 %v358
    %892 = vmatprep.subr.mxu0 %v361
    %893 = vmatpush1.msra.mxu0 %v360
    %894 = vmatprep.subr.mxu0 %v363
    %895 = vmatpush1.msra.mxu0 %v362
    %896 = vmatprep.subr.mxu0 %v365
    %897 = vmatpush1.msra.mxu0 %v364
    %898 = vmatprep.subr.mxu0 0.0
    %899 = vmatpush1.msra.mxu0 0.0
    %900 = vmatprep.subr.mxu0 0.0
    %901 = vmatpush1.msra.mxu0 0.0
    %902 = vmatprep.subr.mxu0 0.0
    %903 = vmatpush1.msra.mxu0 0.0
    %904 = vmatprep.subr.mxu0 0.0
    %905 = vmatpush1.msra.mxu0 0.0
    %906 = vmatprep.subr.mxu0 0.0
    %907 = vmatpush1.msra.mxu0 0.0
    %908 = vmatprep.subr.mxu0 0.0
    %909 = vmatpush1.msra.mxu0 0.0
    %910 = vmatprep.subr.mxu0 0.0
    %911 = vmatpush1.msra.mxu0 0.0
    %912 = vmatprep.subr.mxu0 0.0
    %913 = vmatpush1.msra.mxu0 0.0
    %914 = vmatprep.subr.mxu0 0.0
    %915 = vmatpush1.msra.mxu0 0.0
    %916 = vmatprep.subr.mxu0 0.0
    %917 = vmatpush1.msra.mxu0 0.0
    %918 = vmatprep.subr.mxu0 0.0
    %919 = vmatpush1.msra.mxu0 0.0
    %920 = vmatprep.subr.mxu0 0.0
    %921 = vmatpush1.msra.mxu0 0.0
    %922 = vmatprep.subr.mxu0 0.0
    %923 = vmatpush1.msra.mxu0 0.0
    %924 = vmatprep.subr.mxu0 0.0
    %925 = vmatpush1.msra.mxu0 0.0
    %926 = vmatprep.subr.mxu0 0.0
    %927 = vmatpush1.msra.mxu0 0.0
    %928 = vmatprep.subr.mxu0 0.0
    %929 = vmatpush1.msra.mxu0 0.0
    %930 = vmatprep.subr.mxu0 0.0
    %931 = vmatpush1.msra.mxu0 0.0
    %932 = vmatprep.subr.mxu0 0.0
    %933 = vmatpush1.msra.mxu0 0.0
    %934 = vmatprep.subr.mxu0 0.0
    %935 = vmatpush1.msra.mxu0 0.0
    %936 = vmatprep.subr.mxu0 0.0
    %937 = vmatpush1.msra.mxu0 0.0
    %938 = vmatprep.subr.mxu0 0.0
    %939 = vmatpush1.msra.mxu0 0.0
    %940 = vmatprep.subr.mxu0 0.0
    %941 = vmatpush1.msra.mxu0 0.0
    %942 = vmatprep.subr.mxu0 0.0
    %943 = vmatpush1.msra.mxu0 0.0
    %944 = vmatprep.subr.mxu0 0.0
    %945 = vmatpush1.msra.mxu0 0.0
    %946 = vmatprep.mubr.f32.mxu0 0.0
    %947 = vmatmul.mubr.f32.gmra.mrb[0].mxu0 %v880
    %v948 = vpop.f32.mrb[0].mxu0
    %v949 = vadd.f32 0.0, %v948
    %v950 = vpop.f32.mrb[0].mxu0
    %v951 = vadd.f32 0.0, %v950
    %952 = vdwg.mxu0
    %v955 = vrot.slane %v949, 4
    %v956 = vrot.slane %v951, 4
    %v959 = vadd.f32 %v348, %v955
    %v960 = vadd.f32 %v349, %v956
    %v961 = vtanh.pop %v959
    %v962 = vtanh.pop %v960
    %v963 = vmul.f32 %v961, 0.5
    %v964 = vadd.f32 %v963, 0.5
    %v965 = vmul.f32 %v962, 0.5
    %v966 = vadd.f32 %v965, 0.5
    %v968 = vrot.slane %v873, 2
    %v970 = vmul.f32 %v964, %v968
    %v971 = vmul.f32 %v964, %v962
    %973 = vrot.lane.b32.xlu0 %v971, 64
    %v974 = vpop.permute.xlu0 %973
    %v976 = vadd.f32 %v970, %v974
    %v977 = vtanh.pop %v976
    %v978 = vmul.f32 %v966, %v977
    %v980 = vrot.slane %v978, 4
    %981 = vrot.lane.b32.xlu0 %v980, 64
    %v982 = vpop.permute.xlu0 %981
    %v983 = vsel %vm368, %v982, 0
    %985 = vmatprep.subr.mxu0 %v351
    %986 = vmatpush1.msra.mxu0 %v350
    %987 = vmatprep.subr.mxu0 %v353
    %988 = vmatpush1.msra.mxu0 %v352
    %989 = vmatprep.subr.mxu0 %v355
    %990 = vmatpush1.msra.mxu0 %v354
    %991 = vmatprep.subr.mxu0 %v357
    %992 = vmatpush1.msra.mxu0 %v356
    %993 = vmatprep.subr.mxu0 %v359
    %994 = vmatpush1.msra.mxu0 %v358
    %995 = vmatprep.subr.mxu0 %v361
    %996 = vmatpush1.msra.mxu0 %v360
    %997 = vmatprep.subr.mxu0 %v363
    %998 = vmatpush1.msra.mxu0 %v362
    %999 = vmatprep.subr.mxu0 %v365
    %1000 = vmatpush1.msra.mxu0 %v364
    %1001 = vmatprep.subr.mxu0 0.0
    %1002 = vmatpush1.msra.mxu0 0.0
    %1003 = vmatprep.subr.mxu0 0.0
    %1004 = vmatpush1.msra.mxu0 0.0
    %1005 = vmatprep.subr.mxu0 0.0
    %1006 = vmatpush1.msra.mxu0 0.0
    %1007 = vmatprep.subr.mxu0 0.0
    %1008 = vmatpush1.msra.mxu0 0.0
    %1009 = vmatprep.subr.mxu0 0.0
    %1010 = vmatpush1.msra.mxu0 0.0
    %1011 = vmatprep.subr.mxu0 0.0
    %1012 = vmatpush1.msra.mxu0 0.0
    %1013 = vmatprep.subr.mxu0 0.0
    %1014 = vmatpush1.msra.mxu0 0.0
    %1015 = vmatprep.subr.mxu0 0.0
    %1016 = vmatpush1.msra.mxu0 0.0
    %1017 = vmatprep.subr.mxu0 0.0
    %1018 = vmatpush1.msra.mxu0 0.0
    %1019 = vmatprep.subr.mxu0 0.0
    %1020 = vmatpush1.msra.mxu0 0.0
    %1021 = vmatprep.subr.mxu0 0.0
    %1022 = vmatpush1.msra.mxu0 0.0
    %1023 = vmatprep.subr.mxu0 0.0
    %1024 = vmatpush1.msra.mxu0 0.0
    %1025 = vmatprep.subr.mxu0 0.0
    %1026 = vmatpush1.msra.mxu0 0.0
    %1027 = vmatprep.subr.mxu0 0.0
    %1028 = vmatpush1.msra.mxu0 0.0
    %1029 = vmatprep.subr.mxu0 0.0
    %1030 = vmatpush1.msra.mxu0 0.0
    %1031 = vmatprep.subr.mxu0 0.0
    %1032 = vmatpush1.msra.mxu0 0.0
    %1033 = vmatprep.subr.mxu0 0.0
    %1034 = vmatpush1.msra.mxu0 0.0
    %1035 = vmatprep.subr.mxu0 0.0
    %1036 = vmatpush1.msra.mxu0 0.0
    %1037 = vmatprep.subr.mxu0 0.0
    %1038 = vmatpush1.msra.mxu0 0.0
    %1039 = vmatprep.subr.mxu0 0.0
    %1040 = vmatpush1.msra.mxu0 0.0
    %1041 = vmatprep.subr.mxu0 0.0
    %1042 = vmatpush1.msra.mxu0 0.0
    %1043 = vmatprep.subr.mxu0 0.0
    %1044 = vmatpush1.msra.mxu0 0.0
    %1045 = vmatprep.subr.mxu0 0.0
    %1046 = vmatpush1.msra.mxu0 0.0
    %1047 = vmatprep.subr.mxu0 0.0
    %1048 = vmatpush1.msra.mxu0 0.0
    %1049 = vmatprep.mubr.f32.mxu0 0.0
    %1050 = vmatmul.mubr.f32.gmra.mrb[0].mxu0 %v983
    %v1051 = vpop.f32.mrb[0].mxu0
    %v1052 = vadd.f32 0.0, %v1051
    %v1053 = vpop.f32.mrb[0].mxu0
    %v1054 = vadd.f32 0.0, %v1053
    %1055 = vdwg.mxu0
    %v1058 = vrot.slane %v1052, 6
    %v1059 = vrot.slane %v1054, 6
    %v1062 = vadd.f32 %v342, %v1058
    %v1063 = vadd.f32 %v343, %v1059
    %v1064 = vtanh.pop %v1062
    %v1065 = vtanh.pop %v1063
    %v1066 = vmul.f32 %v1064, 0.5
    %v1067 = vadd.f32 %v1066, 0.5
    %v1068 = vmul.f32 %v1065, 0.5
    %v1069 = vadd.f32 %v1068, 0.5
    %v1071 = vrot.slane %v976, 2
    %v1073 = vmul.f32 %v1067, %v1071
    %v1074 = vmul.f32 %v1067, %v1065
    %1076 = vrot.lane.b32.xlu0 %v1074, 64
    %v1077 = vpop.permute.xlu0 %1076
    %v1079 = vadd.f32 %v1073, %v1077
    %v1080 = vtanh.pop %v1079
    %v1081 = vmul.f32 %v1069, %v1080
    %v1083 = vrot.slane %v1081, 2
    %1084 = vrot.lane.b32.xlu0 %v1083, 64
    %v1085 = vpop.permute.xlu0 %1084
    %v1086 = vsel %vm368, %v1085, 0
    %1088 = vmatprep.subr.mxu0 %v351
    %1089 = vmatpush1.msra.mxu0 %v350
    %1090 = vmatprep.subr.mxu0 %v353
    %1091 = vmatpush1.msra.mxu0 %v352
    %1092 = vmatprep.subr.mxu0 %v355
    %1093 = vmatpush1.msra.mxu0 %v354
    %1094 = vmatprep.subr.mxu0 %v357
    %1095 = vmatpush1.msra.mxu0 %v356
    %1096 = vmatprep.subr.mxu0 %v359
    %1097 = vmatpush1.msra.mxu0 %v358
    %1098 = vmatprep.subr.mxu0 %v361
    %1099 = vmatpush1.msra.mxu0 %v360
    %1100 = vmatprep.subr.mxu0 %v363
    %1101 = vmatpush1.msra.mxu0 %v362
    %1102 = vmatprep.subr.mxu0 %v365
    %1103 = vmatpush1.msra.mxu0 %v364
    %1104 = vmatprep.subr.mxu0 0.0
    %1105 = vmatpush1.msra.mxu0 0.0
    %1106 = vmatprep.subr.mxu0 0.0
    %1107 = vmatpush1.msra.mxu0 0.0
    %1108 = vmatprep.subr.mxu0 0.0
    %1109 = vmatpush1.msra.mxu0 0.0
    %1110 = vmatprep.subr.mxu0 0.0
    %1111 = vmatpush1.msra.mxu0 0.0
    %1112 = vmatprep.subr.mxu0 0.0
    %1113 = vmatpush1.msra.mxu0 0.0
    %1114 = vmatprep.subr.mxu0 0.0
    %1115 = vmatpush1.msra.mxu0 0.0
    %1116 = vmatprep.subr.mxu0 0.0
    %1117 = vmatpush1.msra.mxu0 0.0
    %1118 = vmatprep.subr.mxu0 0.0
    %1119 = vmatpush1.msra.mxu0 0.0
    %1120 = vmatprep.subr.mxu0 0.0
    %1121 = vmatpush1.msra.mxu0 0.0
    %1122 = vmatprep.subr.mxu0 0.0
    %1123 = vmatpush1.msra.mxu0 0.0
    %1124 = vmatprep.subr.mxu0 0.0
    %1125 = vmatpush1.msra.mxu0 0.0
    %1126 = vmatprep.subr.mxu0 0.0
    %1127 = vmatpush1.msra.mxu0 0.0
    %1128 = vmatprep.subr.mxu0 0.0
    %1129 = vmatpush1.msra.mxu0 0.0
    %1130 = vmatprep.subr.mxu0 0.0
    %1131 = vmatpush1.msra.mxu0 0.0
    %1132 = vmatprep.subr.mxu0 0.0
    %1133 = vmatpush1.msra.mxu0 0.0
    %1134 = vmatprep.subr.mxu0 0.0
    %1135 = vmatpush1.msra.mxu0 0.0
    %1136 = vmatprep.subr.mxu0 0.0
    %1137 = vmatpush1.msra.mxu0 0.0
    %1138 = vmatprep.subr.mxu0 0.0
    %1139 = vmatpush1.msra.mxu0 0.0
    %1140 = vmatprep.subr.mxu0 0.0
    %1141 = vmatpush1.msra.mxu0 0.0
    %1142 = vmatprep.subr.mxu0 0.0
    %1143 = vmatpush1.msra.mxu0 0.0
    %1144 = vmatprep.subr.mxu0 0.0
    %1145 = vmatpush1.msra.mxu0 0.0
    %1146 = vmatprep.subr.mxu0 0.0
    %1147 = vmatpush1.msra.mxu0 0.0
    %1148 = vmatprep.subr.mxu0 0.0
    %1149 = vmatpush1.msra.mxu0 0.0
    %1150 = vmatprep.subr.mxu0 0.0
    %1151 = vmatpush1.msra.mxu0 0.0
    %1152 = vmatprep.mubr.f32.mxu0 0.0
    %1153 = vmatmul.mubr.f32.gmra.mrb[0].mxu0 %v1086
    %v1154 = vpop.f32.mrb[0].mxu0
    %v1155 = vadd.f32 0.0, %v1154
    %v1156 = vpop.f32.mrb[0].mxu0
    %v1157 = vadd.f32 0.0, %v1156
    %1158 = vdwg.mxu0
    %v1159 = vadd.f32 %v348, %v1155
    %v1160 = vadd.f32 %v349, %v1157
    %v1161 = vtanh.pop %v1159
    %v1162 = vtanh.pop %v1160
    %v1163 = vmul.f32 %v1161, 0.5
    %v1164 = vadd.f32 %v1163, 0.5
    %v1165 = vmul.f32 %v1162, 0.5
    %v1166 = vadd.f32 %v1165, 0.5
    %v1168 = vrot.slane %v1079, 2
    %v1170 = vmul.f32 %v1164, %v1168
    %v1171 = vmul.f32 %v1164, %v1162
    %1173 = vrot.lane.b32.xlu0 %v1171, 64
    %v1174 = vpop.permute.xlu0 %1173
    %v1176 = vadd.f32 %v1170, %v1174
    %v1177 = vtanh.pop %v1176
    %v1178 = vmul.f32 %v1166, %v1177
    %1180 = vrot.lane.b32.xlu0 %v1178, 64
    %v1181 = vpop.permute.xlu0 %1180
    %vm1183 = vcmask 517120
    %1184 = vst.msk [vmem:[#allocation10] sm:$0x3] %vm1183, %v1181
    %1186 = vrot.lane.b32.xlu0 %v1176, 64
    %v1187 = vpop.permute.xlu0 %1186
    %1189 = vst.msk [vmem:[#allocation12] sm:$0x3] %vm1183, %v1187
    %v1191 = vsel %vm116, %v1181, %v474
    %1192 = vst.msk [vmem:[#allocation2] sm:$0x3] %vm1183, %v1191
    %v1195 = vsel %vm116, %v1085, %v577
    %1196 = vst.msk [vmem:[#allocation2 + $0x2] sm:$0x3] %vm1183, %v1195
    %v1199 = vsel %vm116, %v982, %v680
    %1200 = vst.msk [vmem:[#allocation2 + $0x4] sm:$0x3] %vm1183, %v1199
    %v1203 = vsel %vm116, %v879, %v776
    %1204 = vst.msk [vmem:[#allocation2 + $0x6] sm:$0x3] %vm1183, %v1203
    %v1205 = vsel %vm116, %v776, %v879
    %1206 = vst.msk [vmem:[#allocation2 + $0x8] sm:$0x3] %vm1183, %v1205
    %v1207 = vsel %vm116, %v680, %v982
    %1208 = vst.msk [vmem:[#allocation2 + $0xa] sm:$0x3] %vm1183, %v1207
    %v1209 = vsel %vm116, %v577, %v1085
    %1210 = vst.msk [vmem:[#allocation2 + $0xc] sm:$0x3] %vm1183, %v1209
    %v1211 = vsel %vm116, %v474, %v1181
    %1212 = vst.msk [vmem:[#allocation2 + $0xe] sm:$0x3] %vm1183, %v1211
    %v1213 = vld [vmem:[#allocation2] sm:$0xff]
    %v1214 = vld [vmem:[#allocation2 + $0x8] sm:$0xff]
    %v1215 = vld [vmem:[#allocation3] sm:$0xff]
    %v1216 = vld [vmem:[#allocation3 + $0x8] sm:$0xff]
    %v1217 = vld [vmem:[#allocation3 + $0x10] sm:$0xff]
    %v1218 = vld [vmem:[#allocation3 + $0x18] sm:$0xff]
    %v1219 = vld [vmem:[#allocation3 + $0x20] sm:$0xff]
    %v1220 = vld [vmem:[#allocation3 + $0x28] sm:$0xff]
    %v1221 = vld [vmem:[#allocation3 + $0x30] sm:$0xff]
    %v1222 = vld [vmem:[#allocation3 + $0x38] sm:$0xff]
    %v1223 = vld [vmem:[#allocation3 + $0x40] sm:$0xff]
    %v1224 = vld [vmem:[#allocation3 + $0x48] sm:$0xff]
    %v1225 = vld [vmem:[#allocation3 + $0x50] sm:$0xff]
    %v1226 = vld [vmem:[#allocation3 + $0x58] sm:$0xff]
    %v1227 = vld [vmem:[#allocation3 + $0x60] sm:$0xff]
    %v1228 = vld [vmem:[#allocation3 + $0x68] sm:$0xff]
    %v1229 = vld [vmem:[#allocation3 + $0x70] sm:$0xff]
    %v1230 = vld [vmem:[#allocation3 + $0x78] sm:$0xff]
    %v1231 = vld [vmem:[%s9] sm:$0x3]
    %v1233 = vlaneseq
    %v1234 = vshrl.u32 %v1233, 7
    %v1235 = vsub.s32 0, %v1234
    %v1236 = vrot.slane %v1231, %v1235
    %v1237 = vlaneseq
    %v1238 = vshrl.u32 %v1237, 7
    %v1239 = vsub.s32 1, %v1238
    %v1240 = vrot.slane %v1231, %v1239
    %v1244 = vsel %vm368, %v1213, 0
    %v1247 = vsel %vm368, %v1214, 0
    %1249 = vmatprep.subr.mxu0 %v1216
    %1250 = vmatpush1.msra.mxu0 %v1215
    %1251 = vmatprep.subr.mxu0 %v1218
    %1252 = vmatpush1.msra.mxu0 %v1217
    %1253 = vmatprep.subr.mxu0 %v1220
    %1254 = vmatpush1.msra.mxu0 %v1219
    %1255 = vmatprep.subr.mxu0 %v1222
    %1256 = vmatpush1.msra.mxu0 %v1221
    %1257 = vmatprep.subr.mxu0 %v1224
    %1258 = vmatpush1.msra.mxu0 %v1223
    %1259 = vmatprep.subr.mxu0 %v1226
    %1260 = vmatpush1.msra.mxu0 %v1225
    %1261 = vmatprep.subr.mxu0 %v1228
    %1262 = vmatpush1.msra.mxu0 %v1227
    %1263 = vmatprep.subr.mxu0 %v1230
    %1264 = vmatpush1.msra.mxu0 %v1229
    %1265 = vmatprep.subr.mxu0 0.0
    %1266 = vmatpush1.msra.mxu0 0.0
    %1267 = vmatprep.subr.mxu0 0.0
    %1268 = vmatpush1.msra.mxu0 0.0
    %1269 = vmatprep.subr.mxu0 0.0
    %1270 = vmatpush1.msra.mxu0 0.0
    %1271 = vmatprep.subr.mxu0 0.0
    %1272 = vmatpush1.msra.mxu0 0.0
    %1273 = vmatprep.subr.mxu0 0.0
    %1274 = vmatpush1.msra.mxu0 0.0
    %1275 = vmatprep.subr.mxu0 0.0
    %1276 = vmatpush1.msra.mxu0 0.0
    %1277 = vmatprep.subr.mxu0 0.0
    %1278 = vmatpush1.msra.mxu0 0.0
    %1279 = vmatprep.subr.mxu0 0.0
    %1280 = vmatpush1.msra.mxu0 0.0
    %1281 = vmatprep.subr.mxu0 0.0
    %1282 = vmatpush1.msra.mxu0 0.0
    %1283 = vmatprep.subr.mxu0 0.0
    %1284 = vmatpush1.msra.mxu0 0.0
    %1285 = vmatprep.subr.mxu0 0.0
    %1286 = vmatpush1.msra.mxu0 0.0
    %1287 = vmatprep.subr.mxu0 0.0
    %1288 = vmatpush1.msra.mxu0 0.0
    %1289 = vmatprep.subr.mxu0 0.0
    %1290 = vmatpush1.msra.mxu0 0.0
    %1291 = vmatprep.subr.mxu0 0.0
    %1292 = vmatpush1.msra.mxu0 0.0
    %1293 = vmatprep.subr.mxu0 0.0
    %1294 = vmatpush1.msra.mxu0 0.0
    %1295 = vmatprep.subr.mxu0 0.0
    %1296 = vmatpush1.msra.mxu0 0.0
    %1297 = vmatprep.subr.mxu0 0.0
    %1298 = vmatpush1.msra.mxu0 0.0
    %1299 = vmatprep.subr.mxu0 0.0
    %1300 = vmatpush1.msra.mxu0 0.0
    %1301 = vmatprep.subr.mxu0 0.0
    %1302 = vmatpush1.msra.mxu0 0.0
    %1303 = vmatprep.subr.mxu0 0.0
    %1304 = vmatpush1.msra.mxu0 0.0
    %1305 = vmatprep.subr.mxu0 0.0
    %1306 = vmatpush1.msra.mxu0 0.0
    %1307 = vmatprep.subr.mxu0 0.0
    %1308 = vmatpush1.msra.mxu0 0.0
    %1309 = vmatprep.subr.mxu0 0.0
    %1310 = vmatpush1.msra.mxu0 0.0
    %1311 = vmatprep.subr.mxu0 0.0
    %1312 = vmatpush1.msra.mxu0 0.0
    %1313 = vmatprep.mubr.f32.mxu0 0.0
    %1314 = vmatmul.mubr.f32.gmra.mrb[0].mxu0 %v1244
    %v1315 = vpop.f32.mrb[0].mxu0
    %v1316 = vadd.f32 %v1236, %v1315
    %v1317 = vpop.f32.mrb[0].mxu0
    %v1318 = vadd.f32 %v1240, %v1317
    %1319 = vmatprep.mubr.f32.mxu0 0.0
    %1320 = vmatmul.mubr.f32.gmra.mrb[0].mxu0 %v1247
    %v1321 = vpop.f32.mrb[0].mxu0
    %v1322 = vadd.f32 %v1236, %v1321
    %v1323 = vpop.f32.mrb[0].mxu0
    %v1324 = vadd.f32 %v1240, %v1323
    %1325 = vdwg.mxu0
    %v1328 = vrot.slane %v1316, 2
    %v1329 = vrot.slane %v1318, 2
    %v1332 = vsel %vm114, %v1322, %v1328
    %v1333 = vsel %vm115, %v1324, %v1329
    %v1334 = vrot.slane %v1316, 6
    %v1335 = vrot.slane %v1318, 6
    %v1338 = vsel %vm114, %v1322, %v1334
    %v1339 = vsel %vm115, %v1324, %v1335
    %v1342 = vrot.slane %v1322, 2
    %v1343 = vrot.slane %v1324, 2
    %v1346 = vsel %vm114, %v1316, %v1342
    %v1347 = vsel %vm115, %v1318, %v1343
    %v1348 = vrot.slane %v1322, 6
    %v1349 = vrot.slane %v1324, 6
    %v1352 = vsel %vm114, %v1316, %v1348
    %v1353 = vsel %vm115, %v1318, %v1349
    %v1354 = vld [vmem:[#allocation6] sm:$0xff]
    %v1355 = vld [vmem:[#allocation6 + $0x8] sm:$0xff]
    %v1356 = vld [vmem:[#allocation6 + $0x10] sm:$0xff]
    %v1357 = vld [vmem:[#allocation6 + $0x18] sm:$0xff]
    %v1358 = vld [vmem:[#allocation6 + $0x20] sm:$0xff]
    %v1359 = vld [vmem:[#allocation6 + $0x28] sm:$0xff]
    %v1360 = vld [vmem:[#allocation6 + $0x30] sm:$0xff]
    %v1361 = vld [vmem:[#allocation6 + $0x38] sm:$0xff]
    %v1362 = vld [vmem:[#allocation6 + $0x40] sm:$0xff]
    %v1363 = vld [vmem:[#allocation6 + $0x48] sm:$0xff]
    %v1364 = vld [vmem:[#allocation6 + $0x50] sm:$0xff]
    %v1365 = vld [vmem:[#allocation6 + $0x58] sm:$0xff]
    %v1366 = vld [vmem:[#allocation6 + $0x60] sm:$0xff]
    %v1367 = vld [vmem:[#allocation6 + $0x68] sm:$0xff]
    %v1368 = vld [vmem:[#allocation6 + $0x70] sm:$0xff]
    %v1369 = vld [vmem:[#allocation6 + $0x78] sm:$0xff]
    %s1370 = scalar_lea.vmem %s2, 2
    %v1371 = vld [vmem:[%s1370] sm:$0x3]
    %s1372 = scalar_lea.vmem %s3, 2
    %v1373 = vld [vmem:[%s1372] sm:$0x3]
    %v1375 = vsel %vm368, %v1371, 0
    %1377 = vmatprep.subr.mxu0 %v1355
    %1378 = vmatpush1.msra.mxu0 %v1354
    %1379 = vmatprep.subr.mxu0 %v1357
    %1380 = vmatpush1.msra.mxu0 %v1356
    %1381 = vmatprep.subr.mxu0 %v1359
    %1382 = vmatpush1.msra.mxu0 %v1358
    %1383 = vmatprep.subr.mxu0 %v1361
    %1384 = vmatpush1.msra.mxu0 %v1360
    %1385 = vmatprep.subr.mxu0 %v1363
    %1386 = vmatpush1.msra.mxu0 %v1362
    %1387 = vmatprep.subr.mxu0 %v1365
    %1388 = vmatpush1.msra.mxu0 %v1364
    %1389 = vmatprep.subr.mxu0 %v1367
    %1390 = vmatpush1.msra.mxu0 %v1366
    %1391 = vmatprep.subr.mxu0 %v1369
    %1392 = vmatpush1.msra.mxu0 %v1368
    %1393 = vmatprep.subr.mxu0 0.0
    %1394 = vmatpush1.msra.mxu0 0.0
    %1395 = vmatprep.subr.mxu0 0.0
    %1396 = vmatpush1.msra.mxu0 0.0
    %1397 = vmatprep.subr.mxu0 0.0
    %1398 = vmatpush1.msra.mxu0 0.0
    %1399 = vmatprep.subr.mxu0 0.0
    %1400 = vmatpush1.msra.mxu0 0.0
    %1401 = vmatprep.subr.mxu0 0.0
    %1402 = vmatpush1.msra.mxu0 0.0
    %1403 = vmatprep.subr.mxu0 0.0
    %1404 = vmatpush1.msra.mxu0 0.0
    %1405 = vmatprep.subr.mxu0 0.0
    %1406 = vmatpush1.msra.mxu0 0.0
    %1407 = vmatprep.subr.mxu0 0.0
    %1408 = vmatpush1.msra.mxu0 0.0
    %1409 = vmatprep.subr.mxu0 0.0
    %1410 = vmatpush1.msra.mxu0 0.0
    %1411 = vmatprep.subr.mxu0 0.0
    %1412 = vmatpush1.msra.mxu0 0.0
    %1413 = vmatprep.subr.mxu0 0.0
    %1414 = vmatpush1.msra.mxu0 0.0
    %1415 = vmatprep.subr.mxu0 0.0
    %1416 = vmatpush1.msra.mxu0 0.0
    %1417 = vmatprep.subr.mxu0 0.0
    %1418 = vmatpush1.msra.mxu0 0.0
    %1419 = vmatprep.subr.mxu0 0.0
    %1420 = vmatpush1.msra.mxu0 0.0
    %1421 = vmatprep.subr.mxu0 0.0
    %1422 = vmatpush1.msra.mxu0 0.0
    %1423 = vmatprep.subr.mxu0 0.0
    %1424 = vmatpush1.msra.mxu0 0.0
    %1425 = vmatprep.subr.mxu0 0.0
    %1426 = vmatpush1.msra.mxu0 0.0
    %1427 = vmatprep.subr.mxu0 0.0
    %1428 = vmatpush1.msra.mxu0 0.0
    %1429 = vmatprep.subr.mxu0 0.0
    %1430 = vmatpush1.msra.mxu0 0.0
    %1431 = vmatprep.subr.mxu0 0.0
    %1432 = vmatpush1.msra.mxu0 0.0
    %1433 = vmatprep.subr.mxu0 0.0
    %1434 = vmatpush1.msra.mxu0 0.0
    %1435 = vmatprep.subr.mxu0 0.0
    %1436 = vmatpush1.msra.mxu0 0.0
    %1437 = vmatprep.subr.mxu0 0.0
    %1438 = vmatpush1.msra.mxu0 0.0
    %1439 = vmatprep.subr.mxu0 0.0
    %1440 = vmatpush1.msra.mxu0 0.0
    %1441 = vmatprep.mubr.f32.mxu0 0.0
    %1442 = vmatmul.mubr.f32.gmra.mrb[0].mxu0 %v1375
    %v1443 = vpop.f32.mrb[0].mxu0
    %v1444 = vadd.f32 0.0, %v1443
    %v1445 = vpop.f32.mrb[0].mxu0
    %v1446 = vadd.f32 0.0, %v1445
    %1447 = vdwg.mxu0
    %v1450 = vrot.slane %v1444, 2
    %v1451 = vrot.slane %v1446, 2
    %v1454 = vadd.f32 %v1332, %v1450
    %v1455 = vadd.f32 %v1333, %v1451
    %v1456 = vtanh.pop %v1454
    %v1457 = vtanh.pop %v1455
    %v1458 = vmul.f32 %v1456, 0.5
    %v1459 = vadd.f32 %v1458, 0.5
    %v1460 = vmul.f32 %v1457, 0.5
    %v1461 = vadd.f32 %v1460, 0.5
    %v1463 = vrot.slane %v1373, 2
    %1464 = vrot.lane.b32.xlu0 %v1463, 64
    %v1465 = vpop.permute.xlu0 %1464
    %v1467 = vmul.f32 %v1459, %v1465
    %v1468 = vmul.f32 %v1459, %v1457
    %1470 = vrot.lane.b32.xlu0 %v1468, 64
    %v1471 = vpop.permute.xlu0 %1470
    %v1473 = vadd.f32 %v1467, %v1471
    %v1474 = vtanh.pop %v1473
    %v1475 = vmul.f32 %v1461, %v1474
    %v1477 = vrot.slane %v1475, 6
    %1478 = vrot.lane.b32.xlu0 %v1477, 64
    %v1479 = vpop.permute.xlu0 %1478
    %v1480 = vsel %vm368, %v1479, 0
    %1482 = vmatprep.subr.mxu0 %v1355
    %1483 = vmatpush1.msra.mxu0 %v1354
    %1484 = vmatprep.subr.mxu0 %v1357
    %1485 = vmatpush1.msra.mxu0 %v1356
    %1486 = vmatprep.subr.mxu0 %v1359
    %1487 = vmatpush1.msra.mxu0 %v1358
    %1488 = vmatprep.subr.mxu0 %v1361
    %1489 = vmatpush1.msra.mxu0 %v1360
    %1490 = vmatprep.subr.mxu0 %v1363
    %1491 = vmatpush1.msra.mxu0 %v1362
    %1492 = vmatprep.subr.mxu0 %v1365
    %1493 = vmatpush1.msra.mxu0 %v1364
    %1494 = vmatprep.subr.mxu0 %v1367
    %1495 = vmatpush1.msra.mxu0 %v1366
    %1496 = vmatprep.subr.mxu0 %v1369
    %1497 = vmatpush1.msra.mxu0 %v1368
    %1498 = vmatprep.subr.mxu0 0.0
    %1499 = vmatpush1.msra.mxu0 0.0
    %1500 = vmatprep.subr.mxu0 0.0
    %1501 = vmatpush1.msra.mxu0 0.0
    %1502 = vmatprep.subr.mxu0 0.0
    %1503 = vmatpush1.msra.mxu0 0.0
    %1504 = vmatprep.subr.mxu0 0.0
    %1505 = vmatpush1.msra.mxu0 0.0
    %1506 = vmatprep.subr.mxu0 0.0
    %1507 = vmatpush1.msra.mxu0 0.0
    %1508 = vmatprep.subr.mxu0 0.0
    %1509 = vmatpush1.msra.mxu0 0.0
    %1510 = vmatprep.subr.mxu0 0.0
    %1511 = vmatpush1.msra.mxu0 0.0
    %1512 = vmatprep.subr.mxu0 0.0
    %1513 = vmatpush1.msra.mxu0 0.0
    %1514 = vmatprep.subr.mxu0 0.0
    %1515 = vmatpush1.msra.mxu0 0.0
    %1516 = vmatprep.subr.mxu0 0.0
    %1517 = vmatpush1.msra.mxu0 0.0
    %1518 = vmatprep.subr.mxu0 0.0
    %1519 = vmatpush1.msra.mxu0 0.0
    %1520 = vmatprep.subr.mxu0 0.0
    %1521 = vmatpush1.msra.mxu0 0.0
    %1522 = vmatprep.subr.mxu0 0.0
    %1523 = vmatpush1.msra.mxu0 0.0
    %1524 = vmatprep.subr.mxu0 0.0
    %1525 = vmatpush1.msra.mxu0 0.0
    %1526 = vmatprep.subr.mxu0 0.0
    %1527 = vmatpush1.msra.mxu0 0.0
    %1528 = vmatprep.subr.mxu0 0.0
    %1529 = vmatpush1.msra.mxu0 0.0
    %1530 = vmatprep.subr.mxu0 0.0
    %1531 = vmatpush1.msra.mxu0 0.0
    %1532 = vmatprep.subr.mxu0 0.0
    %1533 = vmatpush1.msra.mxu0 0.0
    %1534 = vmatprep.subr.mxu0 0.0
    %1535 = vmatpush1.msra.mxu0 0.0
    %1536 = vmatprep.subr.mxu0 0.0
    %1537 = vmatpush1.msra.mxu0 0.0
    %1538 = vmatprep.subr.mxu0 0.0
    %1539 = vmatpush1.msra.mxu0 0.0
    %1540 = vmatprep.subr.mxu0 0.0
    %1541 = vmatpush1.msra.mxu0 0.0
    %1542 = vmatprep.subr.mxu0 0.0
    %1543 = vmatpush1.msra.mxu0 0.0
    %1544 = vmatprep.subr.mxu0 0.0
    %1545 = vmatpush1.msra.mxu0 0.0
    %1546 = vmatprep.mubr.f32.mxu0 0.0
    %1547 = vmatmul.mubr.f32.gmra.mrb[0].mxu0 %v1480
    %v1548 = vpop.f32.mrb[0].mxu0
    %v1549 = vadd.f32 0.0, %v1548
    %v1550 = vpop.f32.mrb[0].mxu0
    %v1551 = vadd.f32 0.0, %v1550
    %1552 = vdwg.mxu0
    %v1555 = vrot.slane %v1549, 4
    %v1556 = vrot.slane %v1551, 4
    %v1559 = vadd.f32 %v1338, %v1555
    %v1560 = vadd.f32 %v1339, %v1556
    %v1561 = vtanh.pop %v1559
    %v1562 = vtanh.pop %v1560
    %v1563 = vmul.f32 %v1561, 0.5
    %v1564 = vadd.f32 %v1563, 0.5
    %v1565 = vmul.f32 %v1562, 0.5
    %v1566 = vadd.f32 %v1565, 0.5
    %v1568 = vrot.slane %v1473, 2
    %v1570 = vmul.f32 %v1564, %v1568
    %v1571 = vmul.f32 %v1564, %v1562
    %1573 = vrot.lane.b32.xlu0 %v1571, 64
    %v1574 = vpop.permute.xlu0 %1573
    %v1576 = vadd.f32 %v1570, %v1574
    %v1577 = vtanh.pop %v1576
    %v1578 = vmul.f32 %v1566, %v1577
    %v1580 = vrot.slane %v1578, 4
    %1581 = vrot.lane.b32.xlu0 %v1580, 64
    %v1582 = vpop.permute.xlu0 %1581
    %v1583 = vsel %vm368, %v1582, 0
    %1585 = vmatprep.subr.mxu0 %v1355
    %1586 = vmatpush1.msra.mxu0 %v1354
    %1587 = vmatprep.subr.mxu0 %v1357
    %1588 = vmatpush1.msra.mxu0 %v1356
    %1589 = vmatprep.subr.mxu0 %v1359
    %1590 = vmatpush1.msra.mxu0 %v1358
    %1591 = vmatprep.subr.mxu0 %v1361
    %1592 = vmatpush1.msra.mxu0 %v1360
    %1593 = vmatprep.subr.mxu0 %v1363
    %1594 = vmatpush1.msra.mxu0 %v1362
    %1595 = vmatprep.subr.mxu0 %v1365
    %1596 = vmatpush1.msra.mxu0 %v1364
    %1597 = vmatprep.subr.mxu0 %v1367
    %1598 = vmatpush1.msra.mxu0 %v1366
    %1599 = vmatprep.subr.mxu0 %v1369
    %1600 = vmatpush1.msra.mxu0 %v1368
    %1601 = vmatprep.subr.mxu0 0.0
    %1602 = vmatpush1.msra.mxu0 0.0
    %1603 = vmatprep.subr.mxu0 0.0
    %1604 = vmatpush1.msra.mxu0 0.0
    %1605 = vmatprep.subr.mxu0 0.0
    %1606 = vmatpush1.msra.mxu0 0.0
    %1607 = vmatprep.subr.mxu0 0.0
    %1608 = vmatpush1.msra.mxu0 0.0
    %1609 = vmatprep.subr.mxu0 0.0
    %1610 = vmatpush1.msra.mxu0 0.0
    %1611 = vmatprep.subr.mxu0 0.0
    %1612 = vmatpush1.msra.mxu0 0.0
    %1613 = vmatprep.subr.mxu0 0.0
    %1614 = vmatpush1.msra.mxu0 0.0
    %1615 = vmatprep.subr.mxu0 0.0
    %1616 = vmatpush1.msra.mxu0 0.0
    %1617 = vmatprep.subr.mxu0 0.0
    %1618 = vmatpush1.msra.mxu0 0.0
    %1619 = vmatprep.subr.mxu0 0.0
    %1620 = vmatpush1.msra.mxu0 0.0
    %1621 = vmatprep.subr.mxu0 0.0
    %1622 = vmatpush1.msra.mxu0 0.0
    %1623 = vmatprep.subr.mxu0 0.0
    %1624 = vmatpush1.msra.mxu0 0.0
    %1625 = vmatprep.subr.mxu0 0.0
    %1626 = vmatpush1.msra.mxu0 0.0
    %1627 = vmatprep.subr.mxu0 0.0
    %1628 = vmatpush1.msra.mxu0 0.0
    %1629 = vmatprep.subr.mxu0 0.0
    %1630 = vmatpush1.msra.mxu0 0.0
    %1631 = vmatprep.subr.mxu0 0.0
    %1632 = vmatpush1.msra.mxu0 0.0
    %1633 = vmatprep.subr.mxu0 0.0
    %1634 = vmatpush1.msra.mxu0 0.0
    %1635 = vmatprep.subr.mxu0 0.0
    %1636 = vmatpush1.msra.mxu0 0.0
    %1637 = vmatprep.subr.mxu0 0.0
    %1638 = vmatpush1.msra.mxu0 0.0
    %1639 = vmatprep.subr.mxu0 0.0
    %1640 = vmatpush1.msra.mxu0 0.0
    %1641 = vmatprep.subr.mxu0 0.0
    %1642 = vmatpush1.msra.mxu0 0.0
    %1643 = vmatprep.subr.mxu0 0.0
    %1644 = vmatpush1.msra.mxu0 0.0
    %1645 = vmatprep.subr.mxu0 0.0
    %1646 = vmatpush1.msra.mxu0 0.0
    %1647 = vmatprep.subr.mxu0 0.0
    %1648 = vmatpush1.msra.mxu0 0.0
    %1649 = vmatprep.mubr.f32.mxu0 0.0
    %1650 = vmatmul.mubr.f32.gmra.mrb[0].mxu0 %v1583
    %v1651 = vpop.f32.mrb[0].mxu0
    %v1652 = vadd.f32 0.0, %v1651
    %v1653 = vpop.f32.mrb[0].mxu0
    %v1654 = vadd.f32 0.0, %v1653
    %1655 = vdwg.mxu0
    %v1658 = vrot.slane %v1652, 6
    %v1659 = vrot.slane %v1654, 6
    %v1662 = vadd.f32 %v1332, %v1658
    %v1663 = vadd.f32 %v1333, %v1659
    %v1664 = vtanh.pop %v1662
    %v1665 = vtanh.pop %v1663
    %v1666 = vmul.f32 %v1664, 0.5
    %v1667 = vadd.f32 %v1666, 0.5
    %v1668 = vmul.f32 %v1665, 0.5
    %v1669 = vadd.f32 %v1668, 0.5
    %v1671 = vrot.slane %v1576, 2
    %v1673 = vmul.f32 %v1667, %v1671
    %v1674 = vmul.f32 %v1667, %v1665
    %1676 = vrot.lane.b32.xlu0 %v1674, 64
    %v1677 = vpop.permute.xlu0 %1676
    %v1679 = vadd.f32 %v1673, %v1677
    %v1680 = vtanh.pop %v1679
    %v1681 = vmul.f32 %v1669, %v1680
    %v1683 = vrot.slane %v1681, 2
    %1684 = vrot.lane.b32.xlu0 %v1683, 64
    %v1685 = vpop.permute.xlu0 %1684
    %v1686 = vsel %vm368, %v1685, 0
    %1688 = vmatprep.subr.mxu0 %v1355
    %1689 = vmatpush1.msra.mxu0 %v1354
    %1690 = vmatprep.subr.mxu0 %v1357
    %1691 = vmatpush1.msra.mxu0 %v1356
    %1692 = vmatprep.subr.mxu0 %v1359
    %1693 = vmatpush1.msra.mxu0 %v1358
    %1694 = vmatprep.subr.mxu0 %v1361
    %1695 = vmatpush1.msra.mxu0 %v1360
    %1696 = vmatprep.subr.mxu0 %v1363
    %1697 = vmatpush1.msra.mxu0 %v1362
    %1698 = vmatprep.subr.mxu0 %v1365
    %1699 = vmatpush1.msra.mxu0 %v1364
    %1700 = vmatprep.subr.mxu0 %v1367
    %1701 = vmatpush1.msra.mxu0 %v1366
    %1702 = vmatprep.subr.mxu0 %v1369
    %1703 = vmatpush1.msra.mxu0 %v1368
    %1704 = vmatprep.subr.mxu0 0.0
    %1705 = vmatpush1.msra.mxu0 0.0
    %1706 = vmatprep.subr.mxu0 0.0
    %1707 = vmatpush1.msra.mxu0 0.0
    %1708 = vmatprep.subr.mxu0 0.0
    %1709 = vmatpush1.msra.mxu0 0.0
    %1710 = vmatprep.subr.mxu0 0.0
    %1711 = vmatpush1.msra.mxu0 0.0
    %1712 = vmatprep.subr.mxu0 0.0
    %1713 = vmatpush1.msra.mxu0 0.0
    %1714 = vmatprep.subr.mxu0 0.0
    %1715 = vmatpush1.msra.mxu0 0.0
    %1716 = vmatprep.subr.mxu0 0.0
    %1717 = vmatpush1.msra.mxu0 0.0
    %1718 = vmatprep.subr.mxu0 0.0
    %1719 = vmatpush1.msra.mxu0 0.0
    %1720 = vmatprep.subr.mxu0 0.0
    %1721 = vmatpush1.msra.mxu0 0.0
    %1722 = vmatprep.subr.mxu0 0.0
    %1723 = vmatpush1.msra.mxu0 0.0
    %1724 = vmatprep.subr.mxu0 0.0
    %1725 = vmatpush1.msra.mxu0 0.0
    %1726 = vmatprep.subr.mxu0 0.0
    %1727 = vmatpush1.msra.mxu0 0.0
    %1728 = vmatprep.subr.mxu0 0.0
    %1729 = vmatpush1.msra.mxu0 0.0
    %1730 = vmatprep.subr.mxu0 0.0
    %1731 = vmatpush1.msra.mxu0 0.0
    %1732 = vmatprep.subr.mxu0 0.0
    %1733 = vmatpush1.msra.mxu0 0.0
    %1734 = vmatprep.subr.mxu0 0.0
    %1735 = vmatpush1.msra.mxu0 0.0
    %1736 = vmatprep.subr.mxu0 0.0
    %1737 = vmatpush1.msra.mxu0 0.0
    %1738 = vmatprep.subr.mxu0 0.0
    %1739 = vmatpush1.msra.mxu0 0.0
    %1740 = vmatprep.subr.mxu0 0.0
    %1741 = vmatpush1.msra.mxu0 0.0
    %1742 = vmatprep.subr.mxu0 0.0
    %1743 = vmatpush1.msra.mxu0 0.0
    %1744 = vmatprep.subr.mxu0 0.0
    %1745 = vmatpush1.msra.mxu0 0.0
    %1746 = vmatprep.subr.mxu0 0.0
    %1747 = vmatpush1.msra.mxu0 0.0
    %1748 = vmatprep.subr.mxu0 0.0
    %1749 = vmatpush1.msra.mxu0 0.0
    %1750 = vmatprep.subr.mxu0 0.0
    %1751 = vmatpush1.msra.mxu0 0.0
    %1752 = vmatprep.mubr.f32.mxu0 0.0
    %1753 = vmatmul.mubr.f32.gmra.mrb[0].mxu0 %v1686
    %v1754 = vpop.f32.mrb[0].mxu0
    %v1755 = vadd.f32 0.0, %v1754
    %v1756 = vpop.f32.mrb[0].mxu0
    %v1757 = vadd.f32 0.0, %v1756
    %1758 = vdwg.mxu0
    %v1759 = vadd.f32 %v1338, %v1755
    %v1760 = vadd.f32 %v1339, %v1757
    %v1761 = vtanh.pop %v1759
    %v1762 = vtanh.pop %v1760
    %v1763 = vmul.f32 %v1761, 0.5
    %v1764 = vadd.f32 %v1763, 0.5
    %v1765 = vmul.f32 %v1762, 0.5
    %v1766 = vadd.f32 %v1765, 0.5
    %v1768 = vrot.slane %v1679, 2
    %v1770 = vmul.f32 %v1764, %v1768
    %v1771 = vmul.f32 %v1764, %v1762
    %1773 = vrot.lane.b32.xlu0 %v1771, 64
    %v1774 = vpop.permute.xlu0 %1773
    %v1776 = vadd.f32 %v1770, %v1774
    %v1777 = vtanh.pop %v1776
    %v1778 = vmul.f32 %v1766, %v1777
    %1780 = vrot.lane.b32.xlu0 %v1778, 64
    %v1781 = vpop.permute.xlu0 %1780
    %v1782 = vsel %vm368, %v1781, 0
    %1784 = vmatprep.subr.mxu0 %v1355
    %1785 = vmatpush1.msra.mxu0 %v1354
    %1786 = vmatprep.subr.mxu0 %v1357
    %1787 = vmatpush1.msra.mxu0 %v1356
    %1788 = vmatprep.subr.mxu0 %v1359
    %1789 = vmatpush1.msra.mxu0 %v1358
    %1790 = vmatprep.subr.mxu0 %v1361
    %1791 = vmatpush1.msra.mxu0 %v1360
    %1792 = vmatprep.subr.mxu0 %v1363
    %1793 = vmatpush1.msra.mxu0 %v1362
    %1794 = vmatprep.subr.mxu0 %v1365
    %1795 = vmatpush1.msra.mxu0 %v1364
    %1796 = vmatprep.subr.mxu0 %v1367
    %1797 = vmatpush1.msra.mxu0 %v1366
    %1798 = vmatprep.subr.mxu0 %v1369
    %1799 = vmatpush1.msra.mxu0 %v1368
    %1800 = vmatprep.subr.mxu0 0.0
    %1801 = vmatpush1.msra.mxu0 0.0
    %1802 = vmatprep.subr.mxu0 0.0
    %1803 = vmatpush1.msra.mxu0 0.0
    %1804 = vmatprep.subr.mxu0 0.0
    %1805 = vmatpush1.msra.mxu0 0.0
    %1806 = vmatprep.subr.mxu0 0.0
    %1807 = vmatpush1.msra.mxu0 0.0
    %1808 = vmatprep.subr.mxu0 0.0
    %1809 = vmatpush1.msra.mxu0 0.0
    %1810 = vmatprep.subr.mxu0 0.0
    %1811 = vmatpush1.msra.mxu0 0.0
    %1812 = vmatprep.subr.mxu0 0.0
    %1813 = vmatpush1.msra.mxu0 0.0
    %1814 = vmatprep.subr.mxu0 0.0
    %1815 = vmatpush1.msra.mxu0 0.0
    %1816 = vmatprep.subr.mxu0 0.0
    %1817 = vmatpush1.msra.mxu0 0.0
    %1818 = vmatprep.subr.mxu0 0.0
    %1819 = vmatpush1.msra.mxu0 0.0
    %1820 = vmatprep.subr.mxu0 0.0
    %1821 = vmatpush1.msra.mxu0 0.0
    %1822 = vmatprep.subr.mxu0 0.0
    %1823 = vmatpush1.msra.mxu0 0.0
    %1824 = vmatprep.subr.mxu0 0.0
    %1825 = vmatpush1.msra.mxu0 0.0
    %1826 = vmatprep.subr.mxu0 0.0
    %1827 = vmatpush1.msra.mxu0 0.0
    %1828 = vmatprep.subr.mxu0 0.0
    %1829 = vmatpush1.msra.mxu0 0.0
    %1830 = vmatprep.subr.mxu0 0.0
    %1831 = vmatpush1.msra.mxu0 0.0
    %1832 = vmatprep.subr.mxu0 0.0
    %1833 = vmatpush1.msra.mxu0 0.0
    %1834 = vmatprep.subr.mxu0 0.0
    %1835 = vmatpush1.msra.mxu0 0.0
    %1836 = vmatprep.subr.mxu0 0.0
    %1837 = vmatpush1.msra.mxu0 0.0
    %1838 = vmatprep.subr.mxu0 0.0
    %1839 = vmatpush1.msra.mxu0 0.0
    %1840 = vmatprep.subr.mxu0 0.0
    %1841 = vmatpush1.msra.mxu0 0.0
    %1842 = vmatprep.subr.mxu0 0.0
    %1843 = vmatpush1.msra.mxu0 0.0
    %1844 = vmatprep.subr.mxu0 0.0
    %1845 = vmatpush1.msra.mxu0 0.0
    %1846 = vmatprep.subr.mxu0 0.0
    %1847 = vmatpush1.msra.mxu0 0.0
    %1848 = vmatprep.mubr.f32.mxu0 0.0
    %1849 = vmatmul.mubr.f32.gmra.mrb[0].mxu0 %v1782
    %v1850 = vpop.f32.mrb[0].mxu0
    %v1851 = vadd.f32 0.0, %v1850
    %v1852 = vpop.f32.mrb[0].mxu0
    %v1853 = vadd.f32 0.0, %v1852
    %1854 = vdwg.mxu0
    %v1857 = vrot.slane %v1851, 2
    %v1858 = vrot.slane %v1853, 2
    %v1861 = vadd.f32 %v1346, %v1857
    %v1862 = vadd.f32 %v1347, %v1858
    %v1863 = vtanh.pop %v1861
    %v1864 = vtanh.pop %v1862
    %v1865 = vmul.f32 %v1863, 0.5
    %v1866 = vadd.f32 %v1865, 0.5
    %v1867 = vmul.f32 %v1864, 0.5
    %v1868 = vadd.f32 %v1867, 0.5
    %v1870 = vrot.slane %v1776, 2
    %v1872 = vmul.f32 %v1866, %v1870
    %v1873 = vmul.f32 %v1866, %v1864
    %1875 = vrot.lane.b32.xlu0 %v1873, 64
    %v1876 = vpop.permute.xlu0 %1875
    %v1878 = vadd.f32 %v1872, %v1876
    %v1879 = vtanh.pop %v1878
    %v1880 = vmul.f32 %v1868, %v1879
    %v1882 = vrot.slane %v1880, 6
    %1883 = vrot.lane.b32.xlu0 %v1882, 64
    %v1884 = vpop.permute.xlu0 %1883
    %v1885 = vsel %vm368, %v1884, 0
    %1887 = vmatprep.subr.mxu0 %v1355
    %1888 = vmatpush1.msra.mxu0 %v1354
    %1889 = vmatprep.subr.mxu0 %v1357
    %1890 = vmatpush1.msra.mxu0 %v1356
    %1891 = vmatprep.subr.mxu0 %v1359
    %1892 = vmatpush1.msra.mxu0 %v1358
    %1893 = vmatprep.subr.mxu0 %v1361
    %1894 = vmatpush1.msra.mxu0 %v1360
    %1895 = vmatprep.subr.mxu0 %v1363
    %1896 = vmatpush1.msra.mxu0 %v1362
    %1897 = vmatprep.subr.mxu0 %v1365
    %1898 = vmatpush1.msra.mxu0 %v1364
    %1899 = vmatprep.subr.mxu0 %v1367
    %1900 = vmatpush1.msra.mxu0 %v1366
    %1901 = vmatprep.subr.mxu0 %v1369
    %1902 = vmatpush1.msra.mxu0 %v1368
    %1903 = vmatprep.subr.mxu0 0.0
    %1904 = vmatpush1.msra.mxu0 0.0
    %1905 = vmatprep.subr.mxu0 0.0
    %1906 = vmatpush1.msra.mxu0 0.0
    %1907 = vmatprep.subr.mxu0 0.0
    %1908 = vmatpush1.msra.mxu0 0.0
    %1909 = vmatprep.subr.mxu0 0.0
    %1910 = vmatpush1.msra.mxu0 0.0
    %1911 = vmatprep.subr.mxu0 0.0
    %1912 = vmatpush1.msra.mxu0 0.0
    %1913 = vmatprep.subr.mxu0 0.0
    %1914 = vmatpush1.msra.mxu0 0.0
    %1915 = vmatprep.subr.mxu0 0.0
    %1916 = vmatpush1.msra.mxu0 0.0
    %1917 = vmatprep.subr.mxu0 0.0
    %1918 = vmatpush1.msra.mxu0 0.0
    %1919 = vmatprep.subr.mxu0 0.0
    %1920 = vmatpush1.msra.mxu0 0.0
    %1921 = vmatprep.subr.mxu0 0.0
    %1922 = vmatpush1.msra.mxu0 0.0
    %1923 = vmatprep.subr.mxu0 0.0
    %1924 = vmatpush1.msra.mxu0 0.0
    %1925 = vmatprep.subr.mxu0 0.0
    %1926 = vmatpush1.msra.mxu0 0.0
    %1927 = vmatprep.subr.mxu0 0.0
    %1928 = vmatpush1.msra.mxu0 0.0
    %1929 = vmatprep.subr.mxu0 0.0
    %1930 = vmatpush1.msra.mxu0 0.0
    %1931 = vmatprep.subr.mxu0 0.0
    %1932 = vmatpush1.msra.mxu0 0.0
    %1933 = vmatprep.subr.mxu0 0.0
    %1934 = vmatpush1.msra.mxu0 0.0
    %1935 = vmatprep.subr.mxu0 0.0
    %1936 = vmatpush1.msra.mxu0 0.0
    %1937 = vmatprep.subr.mxu0 0.0
    %1938 = vmatpush1.msra.mxu0 0.0
    %1939 = vmatprep.subr.mxu0 0.0
    %1940 = vmatpush1.msra.mxu0 0.0
    %1941 = vmatprep.subr.mxu0 0.0
    %1942 = vmatpush1.msra.mxu0 0.0
    %1943 = vmatprep.subr.mxu0 0.0
    %1944 = vmatpush1.msra.mxu0 0.0
    %1945 = vmatprep.subr.mxu0 0.0
    %1946 = vmatpush1.msra.mxu0 0.0
    %1947 = vmatprep.subr.mxu0 0.0
    %1948 = vmatpush1.msra.mxu0 0.0
    %1949 = vmatprep.subr.mxu0 0.0
    %1950 = vmatpush1.msra.mxu0 0.0
    %1951 = vmatprep.mubr.f32.mxu0 0.0
    %1952 = vmatmul.mubr.f32.gmra.mrb[0].mxu0 %v1885
    %v1953 = vpop.f32.mrb[0].mxu0
    %v1954 = vadd.f32 0.0, %v1953
    %v1955 = vpop.f32.mrb[0].mxu0
    %v1956 = vadd.f32 0.0, %v1955
    %1957 = vdwg.mxu0
    %v1960 = vrot.slane %v1954, 4
    %v1961 = vrot.slane %v1956, 4
    %v1964 = vadd.f32 %v1352, %v1960
    %v1965 = vadd.f32 %v1353, %v1961
    %v1966 = vtanh.pop %v1964
    %v1967 = vtanh.pop %v1965
    %v1968 = vmul.f32 %v1966, 0.5
    %v1969 = vadd.f32 %v1968, 0.5
    %v1970 = vmul.f32 %v1967, 0.5
    %v1971 = vadd.f32 %v1970, 0.5
    %v1973 = vrot.slane %v1878, 2
    %v1975 = vmul.f32 %v1969, %v1973
    %v1976 = vmul.f32 %v1969, %v1967
    %1978 = vrot.lane.b32.xlu0 %v1976, 64
    %v1979 = vpop.permute.xlu0 %1978
    %v1981 = vadd.f32 %v1975, %v1979
    %v1982 = vtanh.pop %v1981
    %v1983 = vmul.f32 %v1971, %v1982
    %v1985 = vrot.slane %v1983, 4
    %1986 = vrot.lane.b32.xlu0 %v1985, 64
    %v1987 = vpop.permute.xlu0 %1986
    %v1988 = vsel %vm368, %v1987, 0
    %1990 = vmatprep.subr.mxu0 %v1355
    %1991 = vmatpush1.msra.mxu0 %v1354
    %1992 = vmatprep.subr.mxu0 %v1357
    %1993 = vmatpush1.msra.mxu0 %v1356
    %1994 = vmatprep.subr.mxu0 %v1359
    %1995 = vmatpush1.msra.mxu0 %v1358
    %1996 = vmatprep.subr.mxu0 %v1361
    %1997 = vmatpush1.msra.mxu0 %v1360
    %1998 = vmatprep.subr.mxu0 %v1363
    %1999 = vmatpush1.msra.mxu0 %v1362
    %2000 = vmatprep.subr.mxu0 %v1365
    %2001 = vmatpush1.msra.mxu0 %v1364
    %2002 = vmatprep.subr.mxu0 %v1367
    %2003 = vmatpush1.msra.mxu0 %v1366
    %2004 = vmatprep.subr.mxu0 %v1369
    %2005 = vmatpush1.msra.mxu0 %v1368
    %2006 = vmatprep.subr.mxu0 0.0
    %2007 = vmatpush1.msra.mxu0 0.0
    %2008 = vmatprep.subr.mxu0 0.0
    %2009 = vmatpush1.msra.mxu0 0.0
    %2010 = vmatprep.subr.mxu0 0.0
    %2011 = vmatpush1.msra.mxu0 0.0
    %2012 = vmatprep.subr.mxu0 0.0
    %2013 = vmatpush1.msra.mxu0 0.0
    %2014 = vmatprep.subr.mxu0 0.0
    %2015 = vmatpush1.msra.mxu0 0.0
    %2016 = vmatprep.subr.mxu0 0.0
    %2017 = vmatpush1.msra.mxu0 0.0
    %2018 = vmatprep.subr.mxu0 0.0
    %2019 = vmatpush1.msra.mxu0 0.0
    %2020 = vmatprep.subr.mxu0 0.0
    %2021 = vmatpush1.msra.mxu0 0.0
    %2022 = vmatprep.subr.mxu0 0.0
    %2023 = vmatpush1.msra.mxu0 0.0
    %2024 = vmatprep.subr.mxu0 0.0
    %2025 = vmatpush1.msra.mxu0 0.0
    %2026 = vmatprep.subr.mxu0 0.0
    %2027 = vmatpush1.msra.mxu0 0.0
    %2028 = vmatprep.subr.mxu0 0.0
    %2029 = vmatpush1.msra.mxu0 0.0
    %2030 = vmatprep.subr.mxu0 0.0
    %2031 = vmatpush1.msra.mxu0 0.0
    %2032 = vmatprep.subr.mxu0 0.0
    %2033 = vmatpush1.msra.mxu0 0.0
    %2034 = vmatprep.subr.mxu0 0.0
    %2035 = vmatpush1.msra.mxu0 0.0
    %2036 = vmatprep.subr.mxu0 0.0
    %2037 = vmatpush1.msra.mxu0 0.0
    %2038 = vmatprep.subr.mxu0 0.0
    %2039 = vmatpush1.msra.mxu0 0.0
    %2040 = vmatprep.subr.mxu0 0.0
    %2041 = vmatpush1.msra.mxu0 0.0
    %2042 = vmatprep.subr.mxu0 0.0
    %2043 = vmatpush1.msra.mxu0 0.0
    %2044 = vmatprep.subr.mxu0 0.0
    %2045 = vmatpush1.msra.mxu0 0.0
    %2046 = vmatprep.subr.mxu0 0.0
    %2047 = vmatpush1.msra.mxu0 0.0
    %2048 = vmatprep.subr.mxu0 0.0
    %2049 = vmatpush1.msra.mxu0 0.0
    %2050 = vmatprep.subr.mxu0 0.0
    %2051 = vmatpush1.msra.mxu0 0.0
    %2052 = vmatprep.subr.mxu0 0.0
    %2053 = vmatpush1.msra.mxu0 0.0
    %2054 = vmatprep.mubr.f32.mxu0 0.0
    %2055 = vmatmul.mubr.f32.gmra.mrb[0].mxu0 %v1988
    %v2056 = vpop.f32.mrb[0].mxu0
    %v2057 = vadd.f32 0.0, %v2056
    %v2058 = vpop.f32.mrb[0].mxu0
    %v2059 = vadd.f32 0.0, %v2058
    %2060 = vdwg.mxu0
    %v2063 = vrot.slane %v2057, 6
    %v2064 = vrot.slane %v2059, 6
    %v2067 = vadd.f32 %v1346, %v2063
    %v2068 = vadd.f32 %v1347, %v2064
    %v2069 = vtanh.pop %v2067
    %v2070 = vtanh.pop %v2068
    %v2071 = vmul.f32 %v2069, 0.5
    %v2072 = vadd.f32 %v2071, 0.5
    %v2073 = vmul.f32 %v2070, 0.5
    %v2074 = vadd.f32 %v2073, 0.5
    %v2076 = vrot.slane %v1981, 2
    %v2078 = vmul.f32 %v2072, %v2076
    %v2079 = vmul.f32 %v2072, %v2070
    %2081 = vrot.lane.b32.xlu0 %v2079, 64
    %v2082 = vpop.permute.xlu0 %2081
    %v2084 = vadd.f32 %v2078, %v2082
    %v2085 = vtanh.pop %v2084
    %v2086 = vmul.f32 %v2074, %v2085
    %v2088 = vrot.slane %v2086, 2
    %2089 = vrot.lane.b32.xlu0 %v2088, 64
    %v2090 = vpop.permute.xlu0 %2089
    %v2091 = vsel %vm368, %v2090, 0
    %2093 = vmatprep.subr.mxu0 %v1355
    %2094 = vmatpush1.msra.mxu0 %v1354
    %2095 = vmatprep.subr.mxu0 %v1357
    %2096 = vmatpush1.msra.mxu0 %v1356
    %2097 = vmatprep.subr.mxu0 %v1359
    %2098 = vmatpush1.msra.mxu0 %v1358
    %2099 = vmatprep.subr.mxu0 %v1361
    %2100 = vmatpush1.msra.mxu0 %v1360
    %2101 = vmatprep.subr.mxu0 %v1363
    %2102 = vmatpush1.msra.mxu0 %v1362
    %2103 = vmatprep.subr.mxu0 %v1365
    %2104 = vmatpush1.msra.mxu0 %v1364
    %2105 = vmatprep.subr.mxu0 %v1367
    %2106 = vmatpush1.msra.mxu0 %v1366
    %2107 = vmatprep.subr.mxu0 %v1369
    %2108 = vmatpush1.msra.mxu0 %v1368
    %2109 = vmatprep.subr.mxu0 0.0
    %2110 = vmatpush1.msra.mxu0 0.0
    %2111 = vmatprep.subr.mxu0 0.0
    %2112 = vmatpush1.msra.mxu0 0.0
    %2113 = vmatprep.subr.mxu0 0.0
    %2114 = vmatpush1.msra.mxu0 0.0
    %2115 = vmatprep.subr.mxu0 0.0
    %2116 = vmatpush1.msra.mxu0 0.0
    %2117 = vmatprep.subr.mxu0 0.0
    %2118 = vmatpush1.msra.mxu0 0.0
    %2119 = vmatprep.subr.mxu0 0.0
    %2120 = vmatpush1.msra.mxu0 0.0
    %2121 = vmatprep.subr.mxu0 0.0
    %2122 = vmatpush1.msra.mxu0 0.0
    %2123 = vmatprep.subr.mxu0 0.0
    %2124 = vmatpush1.msra.mxu0 0.0
    %2125 = vmatprep.subr.mxu0 0.0
    %2126 = vmatpush1.msra.mxu0 0.0
    %2127 = vmatprep.subr.mxu0 0.0
    %2128 = vmatpush1.msra.mxu0 0.0
    %2129 = vmatprep.subr.mxu0 0.0
    %2130 = vmatpush1.msra.mxu0 0.0
    %2131 = vmatprep.subr.mxu0 0.0
    %2132 = vmatpush1.msra.mxu0 0.0
    %2133 = vmatprep.subr.mxu0 0.0
    %2134 = vmatpush1.msra.mxu0 0.0
    %2135 = vmatprep.subr.mxu0 0.0
    %2136 = vmatpush1.msra.mxu0 0.0
    %2137 = vmatprep.subr.mxu0 0.0
    %2138 = vmatpush1.msra.mxu0 0.0
    %2139 = vmatprep.subr.mxu0 0.0
    %2140 = vmatpush1.msra.mxu0 0.0
    %2141 = vmatprep.subr.mxu0 0.0
    %2142 = vmatpush1.msra.mxu0 0.0
    %2143 = vmatprep.subr.mxu0 0.0
    %2144 = vmatpush1.msra.mxu0 0.0
    %2145 = vmatprep.subr.mxu0 0.0
    %2146 = vmatpush1.msra.mxu0 0.0
    %2147 = vmatprep.subr.mxu0 0.0
    %2148 = vmatpush1.msra.mxu0 0.0
    %2149 = vmatprep.subr.mxu0 0.0
    %2150 = vmatpush1.msra.mxu0 0.0
    %2151 = vmatprep.subr.mxu0 0.0
    %2152 = vmatpush1.msra.mxu0 0.0
    %2153 = vmatprep.subr.mxu0 0.0
    %2154 = vmatpush1.msra.mxu0 0.0
    %2155 = vmatprep.subr.mxu0 0.0
    %2156 = vmatpush1.msra.mxu0 0.0
    %2157 = vmatprep.mubr.f32.mxu0 0.0
    %2158 = vmatmul.mubr.f32.gmra.mrb[0].mxu0 %v2091
    %v2159 = vpop.f32.mrb[0].mxu0
    %v2160 = vadd.f32 0.0, %v2159
    %v2161 = vpop.f32.mrb[0].mxu0
    %v2162 = vadd.f32 0.0, %v2161
    %2163 = vdwg.mxu0
    %v2164 = vadd.f32 %v1352, %v2160
    %v2165 = vadd.f32 %v1353, %v2162
    %v2166 = vtanh.pop %v2164
    %v2167 = vtanh.pop %v2165
    %v2168 = vmul.f32 %v2166, 0.5
    %v2169 = vadd.f32 %v2168, 0.5
    %v2170 = vmul.f32 %v2167, 0.5
    %v2171 = vadd.f32 %v2170, 0.5
    %v2173 = vrot.slane %v2084, 2
    %v2175 = vmul.f32 %v2169, %v2173
    %v2176 = vmul.f32 %v2169, %v2167
    %2178 = vrot.lane.b32.xlu0 %v2176, 64
    %v2179 = vpop.permute.xlu0 %2178
    %v2181 = vadd.f32 %v2175, %v2179
    %v2182 = vtanh.pop %v2181
    %v2183 = vmul.f32 %v2171, %v2182
    %2185 = vrot.lane.b32.xlu0 %v2183, 64
    %v2186 = vpop.permute.xlu0 %2185
    %s2188 = scalar_lea.vmem [#allocation10], 2
    %2189 = vst.msk [vmem:[%s2188] sm:$0x3] %vm1183, %v2186
    %2191 = vrot.lane.b32.xlu0 %v2181, 64
    %v2192 = vpop.permute.xlu0 %2191
    %s2194 = scalar_lea.vmem [#allocation12], 2
    %2195 = vst.msk [vmem:[%s2194] sm:$0x3] %vm1183, %v2192
    %v2197 = vsel %vm116, %v2186, %v1479
    %2198 = vst.msk [vmem:[#allocation2] sm:$0x3] %vm1183, %v2197
    %v2201 = vsel %vm116, %v2090, %v1582
    %2202 = vst.msk [vmem:[#allocation2 + $0x2] sm:$0x3] %vm1183, %v2201
    %v2205 = vsel %vm116, %v1987, %v1685
    %2206 = vst.msk [vmem:[#allocation2 + $0x4] sm:$0x3] %vm1183, %v2205
    %v2209 = vsel %vm116, %v1884, %v1781
    %2210 = vst.msk [vmem:[#allocation2 + $0x6] sm:$0x3] %vm1183, %v2209
    %v2211 = vsel %vm116, %v1781, %v1884
    %2212 = vst.msk [vmem:[#allocation2 + $0x8] sm:$0x3] %vm1183, %v2211
    %v2213 = vsel %vm116, %v1685, %v1987
    %2214 = vst.msk [vmem:[#allocation2 + $0xa] sm:$0x3] %vm1183, %v2213
    %v2215 = vsel %vm116, %v1582, %v2090
    %2216 = vst.msk [vmem:[#allocation2 + $0xc] sm:$0x3] %vm1183, %v2215
    %v2217 = vsel %vm116, %v1479, %v2186
    %2218 = vst.msk [vmem:[#allocation2 + $0xe] sm:$0x3] %vm1183, %v2217
    %v2219 = vld [vmem:[%s11] sm:$0x1]
    %v2220 = vld [vmem:[#allocation2] ss:$8 sm:$0x3]
    %v2221 = vld [vmem:[#allocation8] sm:$0xff]
    %v2222 = vld [vmem:[#allocation8 + $0x8] sm:$0xff]
    %v2223 = vld [vmem:[#allocation8 + $0x10] sm:$0xff]
    %v2224 = vld [vmem:[#allocation8 + $0x18] sm:$0xff]
    %v2225 = vld [vmem:[#allocation8 + $0x20] sm:$0xff]
    %v2226 = vld [vmem:[#allocation8 + $0x28] sm:$0xff]
    %v2227 = vld [vmem:[#allocation8 + $0x30] sm:$0xff]
    %v2228 = vld [vmem:[#allocation8 + $0x38] sm:$0xff]
    %v2230 = vsel %vm368, %v2220, 0
    %2232 = vmatprep.subr.mxu0 0.0
    %2233 = vmatpush1.msra.mxu0 %v2221
    %2234 = vmatprep.subr.mxu0 0.0
    %2235 = vmatpush1.msra.mxu0 %v2222
    %2236 = vmatprep.subr.mxu0 0.0
    %2237 = vmatpush1.msra.mxu0 %v2223
    %2238 = vmatprep.subr.mxu0 0.0
    %2239 = vmatpush1.msra.mxu0 %v2224
    %2240 = vmatprep.subr.mxu0 0.0
    %2241 = vmatpush1.msra.mxu0 %v2225
    %2242 = vmatprep.subr.mxu0 0.0
    %2243 = vmatpush1.msra.mxu0 %v2226
    %2244 = vmatprep.subr.mxu0 0.0
    %2245 = vmatpush1.msra.mxu0 %v2227
    %2246 = vmatprep.subr.mxu0 0.0
    %2247 = vmatpush1.msra.mxu0 %v2228
    %2248 = vmatprep.subr.mxu0 0.0
    %2249 = vmatpush1.msra.mxu0 0.0
    %2250 = vmatprep.subr.mxu0 0.0
    %2251 = vmatpush1.msra.mxu0 0.0
    %2252 = vmatprep.subr.mxu0 0.0
    %2253 = vmatpush1.msra.mxu0 0.0
    %2254 = vmatprep.subr.mxu0 0.0
    %2255 = vmatpush1.msra.mxu0 0.0
    %2256 = vmatprep.subr.mxu0 0.0
    %2257 = vmatpush1.msra.mxu0 0.0
    %2258 = vmatprep.subr.mxu0 0.0
    %2259 = vmatpush1.msra.mxu0 0.0
    %2260 = vmatprep.subr.mxu0 0.0
    %2261 = vmatpush1.msra.mxu0 0.0
    %2262 = vmatprep.subr.mxu0 0.0
    %2263 = vmatpush1.msra.mxu0 0.0
    %2264 = vmatprep.subr.mxu0 0.0
    %2265 = vmatpush1.msra.mxu0 0.0
    %2266 = vmatprep.subr.mxu0 0.0
    %2267 = vmatpush1.msra.mxu0 0.0
    %2268 = vmatprep.subr.mxu0 0.0
    %2269 = vmatpush1.msra.mxu0 0.0
    %2270 = vmatprep.subr.mxu0 0.0
    %2271 = vmatpush1.msra.mxu0 0.0
    %2272 = vmatprep.subr.mxu0 0.0
    %2273 = vmatpush1.msra.mxu0 0.0
    %2274 = vmatprep.subr.mxu0 0.0
    %2275 = vmatpush1.msra.mxu0 0.0
    %2276 = vmatprep.subr.mxu0 0.0
    %2277 = vmatpush1.msra.mxu0 0.0
    %2278 = vmatprep.subr.mxu0 0.0
    %2279 = vmatpush1.msra.mxu0 0.0
    %2280 = vmatprep.subr.mxu0 0.0
    %2281 = vmatpush1.msra.mxu0 0.0
    %2282 = vmatprep.subr.mxu0 0.0
    %2283 = vmatpush1.msra.mxu0 0.0
    %2284 = vmatprep.subr.mxu0 0.0
    %2285 = vmatpush1.msra.mxu0 0.0
    %2286 = vmatprep.subr.mxu0 0.0
    %2287 = vmatpush1.msra.mxu0 0.0
    %2288 = vmatprep.subr.mxu0 0.0
    %2289 = vmatpush1.msra.mxu0 0.0
    %2290 = vmatprep.subr.mxu0 0.0
    %2291 = vmatpush1.msra.mxu0 0.0
    %2292 = vmatprep.subr.mxu0 0.0
    %2293 = vmatpush1.msra.mxu0 0.0
    %2294 = vmatprep.subr.mxu0 0.0
    %2295 = vmatpush1.msra.mxu0 0.0
    %2296 = vmatprep.mubr.f32.mxu0 0.0
    %2297 = vmatmul.mubr.f32.gmra.mrb[0].mxu0 %v2230
    %v2298 = vpop.f32.mrb[0].mxu0
    %v2299 = vadd.f32 0.0, %v2298
    %v2300 = vpop.f32.mrb[0].mxu0
    %2301 = vdwg.mxu0
    %v2303 = vlaneseq
    %v2304 = vshrl.u32 %v2303, 7
    %v2305 = vsub.s32 0, %v2304
    %v2306 = vrot.slane %v2219, %v2305
    %v2308 = vadd.f32 %v2306, %v2299
    %s2309 = scalar_lea.vmem [#allocation2], 1
    %v2310 = vld [vmem:[%s2309] ss:$8 sm:$0x3]
    %v2311 = vld [vmem:[#allocation8 + $0x40] sm:$0xff]
    %v2312 = vld [vmem:[#allocation8 + $0x48] sm:$0xff]
    %v2313 = vld [vmem:[#allocation8 + $0x50] sm:$0xff]
    %v2314 = vld [vmem:[#allocation8 + $0x58] sm:$0xff]
    %v2315 = vld [vmem:[#allocation8 + $0x60] sm:$0xff]
    %v2316 = vld [vmem:[#allocation8 + $0x68] sm:$0xff]
    %v2317 = vld [vmem:[#allocation8 + $0x70] sm:$0xff]
    %v2318 = vld [vmem:[#allocation8 + $0x78] sm:$0xff]
    %v2320 = vsel %vm368, %v2310, 0
    %2322 = vmatprep.subr.mxu0 0.0
    %2323 = vmatpush1.msra.mxu0 %v2311
    %2324 = vmatprep.subr.mxu0 0.0
    %2325 = vmatpush1.msra.mxu0 %v2312
    %2326 = vmatprep.subr.mxu0 0.0
    %2327 = vmatpush1.msra.mxu0 %v2313
    %2328 = vmatprep.subr.mxu0 0.0
    %2329 = vmatpush1.msra.mxu0 %v2314
    %2330 = vmatprep.subr.mxu0 0.0
    %2331 = vmatpush1.msra.mxu0 %v2315
    %2332 = vmatprep.subr.mxu0 0.0
    %2333 = vmatpush1.msra.mxu0 %v2316
    %2334 = vmatprep.subr.mxu0 0.0
    %2335 = vmatpush1.msra.mxu0 %v2317
    %2336 = vmatprep.subr.mxu0 0.0
    %2337 = vmatpush1.msra.mxu0 %v2318
    %2338 = vmatprep.subr.mxu0 0.0
    %2339 = vmatpush1.msra.mxu0 0.0
    %2340 = vmatprep.subr.mxu0 0.0
    %2341 = vmatpush1.msra.mxu0 0.0
    %2342 = vmatprep.subr.mxu0 0.0
    %2343 = vmatpush1.msra.mxu0 0.0
    %2344 = vmatprep.subr.mxu0 0.0
    %2345 = vmatpush1.msra.mxu0 0.0
    %2346 = vmatprep.subr.mxu0 0.0
    %2347 = vmatpush1.msra.mxu0 0.0
    %2348 = vmatprep.subr.mxu0 0.0
    %2349 = vmatpush1.msra.mxu0 0.0
    %2350 = vmatprep.subr.mxu0 0.0
    %2351 = vmatpush1.msra.mxu0 0.0
    %2352 = vmatprep.subr.mxu0 0.0
    %2353 = vmatpush1.msra.mxu0 0.0
    %2354 = vmatprep.subr.mxu0 0.0
    %2355 = vmatpush1.msra.mxu0 0.0
    %2356 = vmatprep.subr.mxu0 0.0
    %2357 = vmatpush1.msra.mxu0 0.0
    %2358 = vmatprep.subr.mxu0 0.0
    %2359 = vmatpush1.msra.mxu0 0.0
    %2360 = vmatprep.subr.mxu0 0.0
    %2361 = vmatpush1.msra.mxu0 0.0
    %2362 = vmatprep.subr.mxu0 0.0
    %2363 = vmatpush1.msra.mxu0 0.0
    %2364 = vmatprep.subr.mxu0 0.0
    %2365 = vmatpush1.msra.mxu0 0.0
    %2366 = vmatprep.subr.mxu0 0.0
    %2367 = vmatpush1.msra.mxu0 0.0
    %2368 = vmatprep.subr.mxu0 0.0
    %2369 = vmatpush1.msra.mxu0 0.0
    %2370 = vmatprep.subr.mxu0 0.0
    %2371 = vmatpush1.msra.mxu0 0.0
    %2372 = vmatprep.subr.mxu0 0.0
    %2373 = vmatpush1.msra.mxu0 0.0
    %2374 = vmatprep.subr.mxu0 0.0
    %2375 = vmatpush1.msra.mxu0 0.0
    %2376 = vmatprep.subr.mxu0 0.0
    %2377 = vmatpush1.msra.mxu0 0.0
    %2378 = vmatprep.subr.mxu0 0.0
    %2379 = vmatpush1.msra.mxu0 0.0
    %2380 = vmatprep.subr.mxu0 0.0
    %2381 = vmatpush1.msra.mxu0 0.0
    %2382 = vmatprep.subr.mxu0 0.0
    %2383 = vmatpush1.msra.mxu0 0.0
    %2384 = vmatprep.subr.mxu0 0.0
    %2385 = vmatpush1.msra.mxu0 0.0
    %2386 = vmatprep.mubr.f32.mxu0 0.0
    %2387 = vmatmul.mubr.f32.gmra.mrb[0].mxu0 %v2320
    %v2388 = vpop.f32.mrb[0].mxu0
    %v2389 = vadd.f32 0.0, %v2388
    %v2390 = vpop.f32.mrb[0].mxu0
    %2391 = vdwg.mxu0
    %v2392 = vadd.f32 %v2308, %v2389
    %s2393 = scalar_lea.vmem [#allocation2], 2
    %v2394 = vld [vmem:[%s2393] ss:$8 sm:$0x3]
    %v2395 = vld [vmem:[#allocation8 + $0x80] sm:$0xff]
    %v2396 = vld [vmem:[#allocation8 + $0x88] sm:$0xff]
    %v2397 = vld [vmem:[#allocation8 + $0x90] sm:$0xff]
    %v2398 = vld [vmem:[#allocation8 + $0x98] sm:$0xff]
    %v2399 = vld [vmem:[#allocation8 + $0xa0] sm:$0xff]
    %v2400 = vld [vmem:[#allocation8 + $0xa8] sm:$0xff]
    %v2401 = vld [vmem:[#allocation8 + $0xb0] sm:$0xff]
    %v2402 = vld [vmem:[#allocation8 + $0xb8] sm:$0xff]
    %v2404 = vsel %vm368, %v2394, 0
    %2406 = vmatprep.subr.mxu0 0.0
    %2407 = vmatpush1.msra.mxu0 %v2395
    %2408 = vmatprep.subr.mxu0 0.0
    %2409 = vmatpush1.msra.mxu0 %v2396
    %2410 = vmatprep.subr.mxu0 0.0
    %2411 = vmatpush1.msra.mxu0 %v2397
    %2412 = vmatprep.subr.mxu0 0.0
    %2413 = vmatpush1.msra.mxu0 %v2398
    %2414 = vmatprep.subr.mxu0 0.0
    %2415 = vmatpush1.msra.mxu0 %v2399
    %2416 = vmatprep.subr.mxu0 0.0
    %2417 = vmatpush1.msra.mxu0 %v2400
    %2418 = vmatprep.subr.mxu0 0.0
    %2419 = vmatpush1.msra.mxu0 %v2401
    %2420 = vmatprep.subr.mxu0 0.0
    %2421 = vmatpush1.msra.mxu0 %v2402
    %2422 = vmatprep.subr.mxu0 0.0
    %2423 = vmatpush1.msra.mxu0 0.0
    %2424 = vmatprep.subr.mxu0 0.0
    %2425 = vmatpush1.msra.mxu0 0.0
    %2426 = vmatprep.subr.mxu0 0.0
    %2427 = vmatpush1.msra.mxu0 0.0
    %2428 = vmatprep.subr.mxu0 0.0
    %2429 = vmatpush1.msra.mxu0 0.0
    %2430 = vmatprep.subr.mxu0 0.0
    %2431 = vmatpush1.msra.mxu0 0.0
    %2432 = vmatprep.subr.mxu0 0.0
    %2433 = vmatpush1.msra.mxu0 0.0
    %2434 = vmatprep.subr.mxu0 0.0
    %2435 = vmatpush1.msra.mxu0 0.0
    %2436 = vmatprep.subr.mxu0 0.0
    %2437 = vmatpush1.msra.mxu0 0.0
    %2438 = vmatprep.subr.mxu0 0.0
    %2439 = vmatpush1.msra.mxu0 0.0
    %2440 = vmatprep.subr.mxu0 0.0
    %2441 = vmatpush1.msra.mxu0 0.0
    %2442 = vmatprep.subr.mxu0 0.0
    %2443 = vmatpush1.msra.mxu0 0.0
    %2444 = vmatprep.subr.mxu0 0.0
    %2445 = vmatpush1.msra.mxu0 0.0
    %2446 = vmatprep.subr.mxu0 0.0
    %2447 = vmatpush1.msra.mxu0 0.0
    %2448 = vmatprep.subr.mxu0 0.0
    %2449 = vmatpush1.msra.mxu0 0.0
    %2450 = vmatprep.subr.mxu0 0.0
    %2451 = vmatpush1.msra.mxu0 0.0
    %2452 = vmatprep.subr.mxu0 0.0
    %2453 = vmatpush1.msra.mxu0 0.0
    %2454 = vmatprep.subr.mxu0 0.0
    %2455 = vmatpush1.msra.mxu0 0.0
    %2456 = vmatprep.subr.mxu0 0.0
    %2457 = vmatpush1.msra.mxu0 0.0
    %2458 = vmatprep.subr.mxu0 0.0
    %2459 = vmatpush1.msra.mxu0 0.0
    %2460 = vmatprep.subr.mxu0 0.0
    %2461 = vmatpush1.msra.mxu0 0.0
    %2462 = vmatprep.subr.mxu0 0.0
    %2463 = vmatpush1.msra.mxu0 0.0
    %2464 = vmatprep.subr.mxu0 0.0
    %2465 = vmatpush1.msra.mxu0 0.0
    %2466 = vmatprep.subr.mxu0 0.0
    %2467 = vmatpush1.msra.mxu0 0.0
    %2468 = vmatprep.subr.mxu0 0.0
    %2469 = vmatpush1.msra.mxu0 0.0
    %2470 = vmatprep.mubr.f32.mxu0 0.0
    %2471 = vmatmul.mubr.f32.gmra.mrb[0].mxu0 %v2404
    %v2472 = vpop.f32.mrb[0].mxu0
    %v2473 = vadd.f32 0.0, %v2472
    %v2474 = vpop.f32.mrb[0].mxu0
    %2475 = vdwg.mxu0
    %v2476 = vadd.f32 %v2392, %v2473
    %s2477 = scalar_lea.vmem [#allocation2], 3
    %v2478 = vld [vmem:[%s2477] ss:$8 sm:$0x3]
    %v2479 = vld [vmem:[#allocation8 + $0xc0] sm:$0xff]
    %v2480 = vld [vmem:[#allocation8 + $0xc8] sm:$0xff]
    %v2481 = vld [vmem:[#allocation8 + $0xd0] sm:$0xff]
    %v2482 = vld [vmem:[#allocation8 + $0xd8] sm:$0xff]
    %v2483 = vld [vmem:[#allocation8 + $0xe0] sm:$0xff]
    %v2484 = vld [vmem:[#allocation8 + $0xe8] sm:$0xff]
    %v2485 = vld [vmem:[#allocation8 + $0xf0] sm:$0xff]
    %v2486 = vld [vmem:[#allocation8 + $0xf8] sm:$0xff]
    %v2488 = vsel %vm368, %v2478, 0
    %2490 = vmatprep.subr.mxu0 0.0
    %2491 = vmatpush1.msra.mxu0 %v2479
    %2492 = vmatprep.subr.mxu0 0.0
    %2493 = vmatpush1.msra.mxu0 %v2480
    %2494 = vmatprep.subr.mxu0 0.0
    %2495 = vmatpush1.msra.mxu0 %v2481
    %2496 = vmatprep.subr.mxu0 0.0
    %2497 = vmatpush1.msra.mxu0 %v2482
    %2498 = vmatprep.subr.mxu0 0.0
    %2499 = vmatpush1.msra.mxu0 %v2483
    %2500 = vmatprep.subr.mxu0 0.0
    %2501 = vmatpush1.msra.mxu0 %v2484
    %2502 = vmatprep.subr.mxu0 0.0
    %2503 = vmatpush1.msra.mxu0 %v2485
    %2504 = vmatprep.subr.mxu0 0.0
    %2505 = vmatpush1.msra.mxu0 %v2486
    %2506 = vmatprep.subr.mxu0 0.0
    %2507 = vmatpush1.msra.mxu0 0.0
    %2508 = vmatprep.subr.mxu0 0.0
    %2509 = vmatpush1.msra.mxu0 0.0
    %2510 = vmatprep.subr.mxu0 0.0
    %2511 = vmatpush1.msra.mxu0 0.0
    %2512 = vmatprep.subr.mxu0 0.0
    %2513 = vmatpush1.msra.mxu0 0.0
    %2514 = vmatprep.subr.mxu0 0.0
    %2515 = vmatpush1.msra.mxu0 0.0
    %2516 = vmatprep.subr.mxu0 0.0
    %2517 = vmatpush1.msra.mxu0 0.0
    %2518 = vmatprep.subr.mxu0 0.0
    %2519 = vmatpush1.msra.mxu0 0.0
    %2520 = vmatprep.subr.mxu0 0.0
    %2521 = vmatpush1.msra.mxu0 0.0
    %2522 = vmatprep.subr.mxu0 0.0
    %2523 = vmatpush1.msra.mxu0 0.0
    %2524 = vmatprep.subr.mxu0 0.0
    %2525 = vmatpush1.msra.mxu0 0.0
    %2526 = vmatprep.subr.mxu0 0.0
    %2527 = vmatpush1.msra.mxu0 0.0
    %2528 = vmatprep.subr.mxu0 0.0
    %2529 = vmatpush1.msra.mxu0 0.0
    %2530 = vmatprep.subr.mxu0 0.0
    %2531 = vmatpush1.msra.mxu0 0.0
    %2532 = vmatprep.subr.mxu0 0.0
    %2533 = vmatpush1.msra.mxu0 0.0
    %2534 = vmatprep.subr.mxu0 0.0
    %2535 = vmatpush1.msra.mxu0 0.0
    %2536 = vmatprep.subr.mxu0 0.0
    %2537 = vmatpush1.msra.mxu0 0.0
    %2538 = vmatprep.subr.mxu0 0.0
    %2539 = vmatpush1.msra.mxu0 0.0
    %2540 = vmatprep.subr.mxu0 0.0
    %2541 = vmatpush1.msra.mxu0 0.0
    %2542 = vmatprep.subr.mxu0 0.0
    %2543 = vmatpush1.msra.mxu0 0.0
    %2544 = vmatprep.subr.mxu0 0.0
    %2545 = vmatpush1.msra.mxu0 0.0
    %2546 = vmatprep.subr.mxu0 0.0
    %2547 = vmatpush1.msra.mxu0 0.0
    %2548 = vmatprep.subr.mxu0 0.0
    %2549 = vmatpush1.msra.mxu0 0.0
    %2550 = vmatprep.subr.mxu0 0.0
    %2551 = vmatpush1.msra.mxu0 0.0
    %2552 = vmatprep.subr.mxu0 0.0
    %2553 = vmatpush1.msra.mxu0 0.0
    %2554 = vmatprep.mubr.f32.mxu0 0.0
    %2555 = vmatmul.mubr.f32.gmra.mrb[0].mxu0 %v2488
    %v2556 = vpop.f32.mrb[0].mxu0
    %v2557 = vadd.f32 0.0, %v2556
    %v2558 = vpop.f32.mrb[0].mxu0
    %2559 = vdwg.mxu0
    %v2560 = vadd.f32 %v2476, %v2557
    %s2561 = scalar_lea.vmem [#allocation2], 4
    %v2562 = vld [vmem:[%s2561] ss:$8 sm:$0x3]
    %v2563 = vld [vmem:[#allocation8 + $0x100] sm:$0xff]
    %v2564 = vld [vmem:[#allocation8 + $0x108] sm:$0xff]
    %v2565 = vld [vmem:[#allocation8 + $0x110] sm:$0xff]
    %v2566 = vld [vmem:[#allocation8 + $0x118] sm:$0xff]
    %v2567 = vld [vmem:[#allocation8 + $0x120] sm:$0xff]
    %v2568 = vld [vmem:[#allocation8 + $0x128] sm:$0xff]
    %v2569 = vld [vmem:[#allocation8 + $0x130] sm:$0xff]
    %v2570 = vld [vmem:[#allocation8 + $0x138] sm:$0xff]
    %v2572 = vsel %vm368, %v2562, 0
    %2574 = vmatprep.subr.mxu0 0.0
    %2575 = vmatpush1.msra.mxu0 %v2563
    %2576 = vmatprep.subr.mxu0 0.0
    %2577 = vmatpush1.msra.mxu0 %v2564
    %2578 = vmatprep.subr.mxu0 0.0
    %2579 = vmatpush1.msra.mxu0 %v2565
    %2580 = vmatprep.subr.mxu0 0.0
    %2581 = vmatpush1.msra.mxu0 %v2566
    %2582 = vmatprep.subr.mxu0 0.0
    %2583 = vmatpush1.msra.mxu0 %v2567
    %2584 = vmatprep.subr.mxu0 0.0
    %2585 = vmatpush1.msra.mxu0 %v2568
    %2586 = vmatprep.subr.mxu0 0.0
    %2587 = vmatpush1.msra.mxu0 %v2569
    %2588 = vmatprep.subr.mxu0 0.0
    %2589 = vmatpush1.msra.mxu0 %v2570
    %2590 = vmatprep.subr.mxu0 0.0
    %2591 = vmatpush1.msra.mxu0 0.0
    %2592 = vmatprep.subr.mxu0 0.0
    %2593 = vmatpush1.msra.mxu0 0.0
    %2594 = vmatprep.subr.mxu0 0.0
    %2595 = vmatpush1.msra.mxu0 0.0
    %2596 = vmatprep.subr.mxu0 0.0
    %2597 = vmatpush1.msra.mxu0 0.0
    %2598 = vmatprep.subr.mxu0 0.0
    %2599 = vmatpush1.msra.mxu0 0.0
    %2600 = vmatprep.subr.mxu0 0.0
    %2601 = vmatpush1.msra.mxu0 0.0
    %2602 = vmatprep.subr.mxu0 0.0
    %2603 = vmatpush1.msra.mxu0 0.0
    %2604 = vmatprep.subr.mxu0 0.0
    %2605 = vmatpush1.msra.mxu0 0.0
    %2606 = vmatprep.subr.mxu0 0.0
    %2607 = vmatpush1.msra.mxu0 0.0
    %2608 = vmatprep.subr.mxu0 0.0
    %2609 = vmatpush1.msra.mxu0 0.0
    %2610 = vmatprep.subr.mxu0 0.0
    %2611 = vmatpush1.msra.mxu0 0.0
    %2612 = vmatprep.subr.mxu0 0.0
    %2613 = vmatpush1.msra.mxu0 0.0
    %2614 = vmatprep.subr.mxu0 0.0
    %2615 = vmatpush1.msra.mxu0 0.0
    %2616 = vmatprep.subr.mxu0 0.0
    %2617 = vmatpush1.msra.mxu0 0.0
    %2618 = vmatprep.subr.mxu0 0.0
    %2619 = vmatpush1.msra.mxu0 0.0
    %2620 = vmatprep.subr.mxu0 0.0
    %2621 = vmatpush1.msra.mxu0 0.0
    %2622 = vmatprep.subr.mxu0 0.0
    %2623 = vmatpush1.msra.mxu0 0.0
    %2624 = vmatprep.subr.mxu0 0.0
    %2625 = vmatpush1.msra.mxu0 0.0
    %2626 = vmatprep.subr.mxu0 0.0
    %2627 = vmatpush1.msra.mxu0 0.0
    %2628 = vmatprep.subr.mxu0 0.0
    %2629 = vmatpush1.msra.mxu0 0.0
    %2630 = vmatprep.subr.mxu0 0.0
    %2631 = vmatpush1.msra.mxu0 0.0
    %2632 = vmatprep.subr.mxu0 0.0
    %2633 = vmatpush1.msra.mxu0 0.0
    %2634 = vmatprep.subr.mxu0 0.0
    %2635 = vmatpush1.msra.mxu0 0.0
    %2636 = vmatprep.subr.mxu0 0.0
    %2637 = vmatpush1.msra.mxu0 0.0
    %2638 = vmatprep.mubr.f32.mxu0 0.0
    %2639 = vmatmul.mubr.f32.gmra.mrb[0].mxu0 %v2572
    %v2640 = vpop.f32.mrb[0].mxu0
    %v2641 = vadd.f32 0.0, %v2640
    %v2642 = vpop.f32.mrb[0].mxu0
    %2643 = vdwg.mxu0
    %v2644 = vadd.f32 %v2560, %v2641
    %s2645 = scalar_lea.vmem [#allocation2], 5
    %v2646 = vld [vmem:[%s2645] ss:$8 sm:$0x3]
    %v2647 = vld [vmem:[#allocation8 + $0x140] sm:$0xff]
    %v2648 = vld [vmem:[#allocation8 + $0x148] sm:$0xff]
    %v2649 = vld [vmem:[#allocation8 + $0x150] sm:$0xff]
    %v2650 = vld [vmem:[#allocation8 + $0x158] sm:$0xff]
    %v2651 = vld [vmem:[#allocation8 + $0x160] sm:$0xff]
    %v2652 = vld [vmem:[#allocation8 + $0x168] sm:$0xff]
    %v2653 = vld [vmem:[#allocation8 + $0x170] sm:$0xff]
    %v2654 = vld [vmem:[#allocation8 + $0x178] sm:$0xff]
    %v2656 = vsel %vm368, %v2646, 0
    %2658 = vmatprep.subr.mxu0 0.0
    %2659 = vmatpush1.msra.mxu0 %v2647
    %2660 = vmatprep.subr.mxu0 0.0
    %2661 = vmatpush1.msra.mxu0 %v2648
    %2662 = vmatprep.subr.mxu0 0.0
    %2663 = vmatpush1.msra.mxu0 %v2649
    %2664 = vmatprep.subr.mxu0 0.0
    %2665 = vmatpush1.msra.mxu0 %v2650
    %2666 = vmatprep.subr.mxu0 0.0
    %2667 = vmatpush1.msra.mxu0 %v2651
    %2668 = vmatprep.subr.mxu0 0.0
    %2669 = vmatpush1.msra.mxu0 %v2652
    %2670 = vmatprep.subr.mxu0 0.0
    %2671 = vmatpush1.msra.mxu0 %v2653
    %2672 = vmatprep.subr.mxu0 0.0
    %2673 = vmatpush1.msra.mxu0 %v2654
    %2674 = vmatprep.subr.mxu0 0.0
    %2675 = vmatpush1.msra.mxu0 0.0
    %2676 = vmatprep.subr.mxu0 0.0
    %2677 = vmatpush1.msra.mxu0 0.0
    %2678 = vmatprep.subr.mxu0 0.0
    %2679 = vmatpush1.msra.mxu0 0.0
    %2680 = vmatprep.subr.mxu0 0.0
    %2681 = vmatpush1.msra.mxu0 0.0
    %2682 = vmatprep.subr.mxu0 0.0
    %2683 = vmatpush1.msra.mxu0 0.0
    %2684 = vmatprep.subr.mxu0 0.0
    %2685 = vmatpush1.msra.mxu0 0.0
    %2686 = vmatprep.subr.mxu0 0.0
    %2687 = vmatpush1.msra.mxu0 0.0
    %2688 = vmatprep.subr.mxu0 0.0
    %2689 = vmatpush1.msra.mxu0 0.0
    %2690 = vmatprep.subr.mxu0 0.0
    %2691 = vmatpush1.msra.mxu0 0.0
    %2692 = vmatprep.subr.mxu0 0.0
    %2693 = vmatpush1.msra.mxu0 0.0
    %2694 = vmatprep.subr.mxu0 0.0
    %2695 = vmatpush1.msra.mxu0 0.0
    %2696 = vmatprep.subr.mxu0 0.0
    %2697 = vmatpush1.msra.mxu0 0.0
    %2698 = vmatprep.subr.mxu0 0.0
    %2699 = vmatpush1.msra.mxu0 0.0
    %2700 = vmatprep.subr.mxu0 0.0
    %2701 = vmatpush1.msra.mxu0 0.0
    %2702 = vmatprep.subr.mxu0 0.0
    %2703 = vmatpush1.msra.mxu0 0.0
    %2704 = vmatprep.subr.mxu0 0.0
    %2705 = vmatpush1.msra.mxu0 0.0
    %2706 = vmatprep.subr.mxu0 0.0
    %2707 = vmatpush1.msra.mxu0 0.0
    %2708 = vmatprep.subr.mxu0 0.0
    %2709 = vmatpush1.msra.mxu0 0.0
    %2710 = vmatprep.subr.mxu0 0.0
    %2711 = vmatpush1.msra.mxu0 0.0
    %2712 = vmatprep.subr.mxu0 0.0
    %2713 = vmatpush1.msra.mxu0 0.0
    %2714 = vmatprep.subr.mxu0 0.0
    %2715 = vmatpush1.msra.mxu0 0.0
    %2716 = vmatprep.subr.mxu0 0.0
    %2717 = vmatpush1.msra.mxu0 0.0
    %2718 = vmatprep.subr.mxu0 0.0
    %2719 = vmatpush1.msra.mxu0 0.0
    %2720 = vmatprep.subr.mxu0 0.0
    %2721 = vmatpush1.msra.mxu0 0.0
    %2722 = vmatprep.mubr.f32.mxu0 0.0
    %2723 = vmatmul.mubr.f32.gmra.mrb[0].mxu0 %v2656
    %v2724 = vpop.f32.mrb[0].mxu0
    %v2725 = vadd.f32 0.0, %v2724
    %v2726 = vpop.f32.mrb[0].mxu0
    %2727 = vdwg.mxu0
    %v2728 = vadd.f32 %v2644, %v2725
    %s2729 = scalar_lea.vmem [#allocation2], 6
    %v2730 = vld [vmem:[%s2729] ss:$8 sm:$0x3]
    %v2731 = vld [vmem:[#allocation8 + $0x180] sm:$0xff]
    %v2732 = vld [vmem:[#allocation8 + $0x188] sm:$0xff]
    %v2733 = vld [vmem:[#allocation8 + $0x190] sm:$0xff]
    %v2734 = vld [vmem:[#allocation8 + $0x198] sm:$0xff]
    %v2735 = vld [vmem:[#allocation8 + $0x1a0] sm:$0xff]
    %v2736 = vld [vmem:[#allocation8 + $0x1a8] sm:$0xff]
    %v2737 = vld [vmem:[#allocation8 + $0x1b0] sm:$0xff]
    %v2738 = vld [vmem:[#allocation8 + $0x1b8] sm:$0xff]
    %v2740 = vsel %vm368, %v2730, 0
    %2742 = vmatprep.subr.mxu0 0.0
    %2743 = vmatpush1.msra.mxu0 %v2731
    %2744 = vmatprep.subr.mxu0 0.0
    %2745 = vmatpush1.msra.mxu0 %v2732
    %2746 = vmatprep.subr.mxu0 0.0
    %2747 = vmatpush1.msra.mxu0 %v2733
    %2748 = vmatprep.subr.mxu0 0.0
    %2749 = vmatpush1.msra.mxu0 %v2734
    %2750 = vmatprep.subr.mxu0 0.0
    %2751 = vmatpush1.msra.mxu0 %v2735
    %2752 = vmatprep.subr.mxu0 0.0
    %2753 = vmatpush1.msra.mxu0 %v2736
    %2754 = vmatprep.subr.mxu0 0.0
    %2755 = vmatpush1.msra.mxu0 %v2737
    %2756 = vmatprep.subr.mxu0 0.0
    %2757 = vmatpush1.msra.mxu0 %v2738
    %2758 = vmatprep.subr.mxu0 0.0
    %2759 = vmatpush1.msra.mxu0 0.0
    %2760 = vmatprep.subr.mxu0 0.0
    %2761 = vmatpush1.msra.mxu0 0.0
    %2762 = vmatprep.subr.mxu0 0.0
    %2763 = vmatpush1.msra.mxu0 0.0
    %2764 = vmatprep.subr.mxu0 0.0
    %2765 = vmatpush1.msra.mxu0 0.0
    %2766 = vmatprep.subr.mxu0 0.0
    %2767 = vmatpush1.msra.mxu0 0.0
    %2768 = vmatprep.subr.mxu0 0.0
    %2769 = vmatpush1.msra.mxu0 0.0
    %2770 = vmatprep.subr.mxu0 0.0
    %2771 = vmatpush1.msra.mxu0 0.0
    %2772 = vmatprep.subr.mxu0 0.0
    %2773 = vmatpush1.msra.mxu0 0.0
    %2774 = vmatprep.subr.mxu0 0.0
    %2775 = vmatpush1.msra.mxu0 0.0
    %2776 = vmatprep.subr.mxu0 0.0
    %2777 = vmatpush1.msra.mxu0 0.0
    %2778 = vmatprep.subr.mxu0 0.0
    %2779 = vmatpush1.msra.mxu0 0.0
    %2780 = vmatprep.subr.mxu0 0.0
    %2781 = vmatpush1.msra.mxu0 0.0
    %2782 = vmatprep.subr.mxu0 0.0
    %2783 = vmatpush1.msra.mxu0 0.0
    %2784 = vmatprep.subr.mxu0 0.0
    %2785 = vmatpush1.msra.mxu0 0.0
    %2786 = vmatprep.subr.mxu0 0.0
    %2787 = vmatpush1.msra.mxu0 0.0
    %2788 = vmatprep.subr.mxu0 0.0
    %2789 = vmatpush1.msra.mxu0 0.0
    %2790 = vmatprep.subr.mxu0 0.0
    %2791 = vmatpush1.msra.mxu0 0.0
    %2792 = vmatprep.subr.mxu0 0.0
    %2793 = vmatpush1.msra.mxu0 0.0
    %2794 = vmatprep.subr.mxu0 0.0
    %2795 = vmatpush1.msra.mxu0 0.0
    %2796 = vmatprep.subr.mxu0 0.0
    %2797 = vmatpush1.msra.mxu0 0.0
    %2798 = vmatprep.subr.mxu0 0.0
    %2799 = vmatpush1.msra.mxu0 0.0
    %2800 = vmatprep.subr.mxu0 0.0
    %2801 = vmatpush1.msra.mxu0 0.0
    %2802 = vmatprep.subr.mxu0 0.0
    %2803 = vmatpush1.msra.mxu0 0.0
    %2804 = vmatprep.subr.mxu0 0.0
    %2805 = vmatpush1.msra.mxu0 0.0
    %2806 = vmatprep.mubr.f32.mxu0 0.0
    %2807 = vmatmul.mubr.f32.gmra.mrb[0].mxu0 %v2740
    %v2808 = vpop.f32.mrb[0].mxu0
    %v2809 = vadd.f32 0.0, %v2808
    %v2810 = vpop.f32.mrb[0].mxu0
    %2811 = vdwg.mxu0
    %v2812 = vadd.f32 %v2728, %v2809
    %s2813 = scalar_lea.vmem [#allocation2], 7
    %v2814 = vld [vmem:[%s2813] ss:$8 sm:$0x3]
    %v2815 = vld [vmem:[#allocation8 + $0x1c0] sm:$0xff]
    %v2816 = vld [vmem:[#allocation8 + $0x1c8] sm:$0xff]
    %v2817 = vld [vmem:[#allocation8 + $0x1d0] sm:$0xff]
    %v2818 = vld [vmem:[#allocation8 + $0x1d8] sm:$0xff]
    %v2819 = vld [vmem:[#allocation8 + $0x1e0] sm:$0xff]
    %v2820 = vld [vmem:[#allocation8 + $0x1e8] sm:$0xff]
    %v2821 = vld [vmem:[#allocation8 + $0x1f0] sm:$0xff]
    %v2822 = vld [vmem:[#allocation8 + $0x1f8] sm:$0xff]
    %v2824 = vsel %vm368, %v2814, 0
    %2826 = vmatprep.subr.mxu0 0.0
    %2827 = vmatpush1.msra.mxu0 %v2815
    %2828 = vmatprep.subr.mxu0 0.0
    %2829 = vmatpush1.msra.mxu0 %v2816
    %2830 = vmatprep.subr.mxu0 0.0
    %2831 = vmatpush1.msra.mxu0 %v2817
    %2832 = vmatprep.subr.mxu0 0.0
    %2833 = vmatpush1.msra.mxu0 %v2818
    %2834 = vmatprep.subr.mxu0 0.0
    %2835 = vmatpush1.msra.mxu0 %v2819
    %2836 = vmatprep.subr.mxu0 0.0
    %2837 = vmatpush1.msra.mxu0 %v2820
    %2838 = vmatprep.subr.mxu0 0.0
    %2839 = vmatpush1.msra.mxu0 %v2821
    %2840 = vmatprep.subr.mxu0 0.0
    %2841 = vmatpush1.msra.mxu0 %v2822
    %2842 = vmatprep.subr.mxu0 0.0
    %2843 = vmatpush1.msra.mxu0 0.0
    %2844 = vmatprep.subr.mxu0 0.0
    %2845 = vmatpush1.msra.mxu0 0.0
    %2846 = vmatprep.subr.mxu0 0.0
    %2847 = vmatpush1.msra.mxu0 0.0
    %2848 = vmatprep.subr.mxu0 0.0
    %2849 = vmatpush1.msra.mxu0 0.0
    %2850 = vmatprep.subr.mxu0 0.0
    %2851 = vmatpush1.msra.mxu0 0.0
    %2852 = vmatprep.subr.mxu0 0.0
    %2853 = vmatpush1.msra.mxu0 0.0
    %2854 = vmatprep.subr.mxu0 0.0
    %2855 = vmatpush1.msra.mxu0 0.0
    %2856 = vmatprep.subr.mxu0 0.0
    %2857 = vmatpush1.msra.mxu0 0.0
    %2858 = vmatprep.subr.mxu0 0.0
    %2859 = vmatpush1.msra.mxu0 0.0
    %2860 = vmatprep.subr.mxu0 0.0
    %2861 = vmatpush1.msra.mxu0 0.0
    %2862 = vmatprep.subr.mxu0 0.0
    %2863 = vmatpush1.msra.mxu0 0.0
    %2864 = vmatprep.subr.mxu0 0.0
    %2865 = vmatpush1.msra.mxu0 0.0
    %2866 = vmatprep.subr.mxu0 0.0
    %2867 = vmatpush1.msra.mxu0 0.0
    %2868 = vmatprep.subr.mxu0 0.0
    %2869 = vmatpush1.msra.mxu0 0.0
    %2870 = vmatprep.subr.mxu0 0.0
    %2871 = vmatpush1.msra.mxu0 0.0
    %2872 = vmatprep.subr.mxu0 0.0
    %2873 = vmatpush1.msra.mxu0 0.0
    %2874 = vmatprep.subr.mxu0 0.0
    %2875 = vmatpush1.msra.mxu0 0.0
    %2876 = vmatprep.subr.mxu0 0.0
    %2877 = vmatpush1.msra.mxu0 0.0
    %2878 = vmatprep.subr.mxu0 0.0
    %2879 = vmatpush1.msra.mxu0 0.0
    %2880 = vmatprep.subr.mxu0 0.0
    %2881 = vmatpush1.msra.mxu0 0.0
    %2882 = vmatprep.subr.mxu0 0.0
    %2883 = vmatpush1.msra.mxu0 0.0
    %2884 = vmatprep.subr.mxu0 0.0
    %2885 = vmatpush1.msra.mxu0 0.0
    %2886 = vmatprep.subr.mxu0 0.0
    %2887 = vmatpush1.msra.mxu0 0.0
    %2888 = vmatprep.subr.mxu0 0.0
    %2889 = vmatpush1.msra.mxu0 0.0
    %2890 = vmatprep.mubr.f32.mxu0 0.0
    %2891 = vmatmul.mubr.f32.gmra.mrb[0].mxu0 %v2824
    %v2892 = vpop.f32.mrb[0].mxu0
    %v2893 = vadd.f32 0.0, %v2892
    %v2894 = vpop.f32.mrb[0].mxu0
    %2895 = vdwg.mxu0
    %v2896 = vadd.f32 %v2812, %v2893
    %2897 = vst [vmem:[#allocation9] sm:$0x3] %v2896
    // Predicated region
    $region62: #{tpu_custom_call.1} parent=1 // pred_check
      _
    $region63: #{tpu_custom_call.1} parent=1 // pred_check_branch
      %2899 = sbr.rel (0) target = $region65
    $region64: #{tpu_custom_call.1} parent=1 // pred_region
      %s2901 = ssub.s32 32, 32
      %2902 = vsyncadd [#allocation5], %s2901
      %s2904 = sshll.u32 [#allocation9], 4
      %s2905 = int_to_ptr.vmem [resolvable:$true] %s2904
      %2907 = dma.vmem_to_hbm [thread:$0]  %s2905, 32, %s12, [#allocation5]
    $region65: #{tpu_custom_call.1} parent=1 // pred_fallthru
      _
    // Predicated region
    $region66: #{tpu_custom_call.1} parent=1 // pred_check
      _
    $region67: #{tpu_custom_call.1} parent=1 // pred_check_branch
      %2909 = sbr.rel (0) target = $region69
    $region68: #{tpu_custom_call.1} parent=1 // pred_region
      %s2911 = ssub.s32 64, 64
      %2912 = vsyncadd [#allocation11], %s2911
      %s2913 = sshll.u32 [#allocation10], 4
      %s2914 = int_to_ptr.vmem [resolvable:$true] %s2913
      %2919 = dma.vmem_to_hbm [thread:$0]  %s2914, 64, %s13, [#allocation11], 32, 32, 2
    $region69: #{tpu_custom_call.1} parent=1 // pred_fallthru
      _
    // Predicated region
    $region70: #{tpu_custom_call.1} parent=1 // pred_check
      _
    $region71: #{tpu_custom_call.1} parent=1 // pred_check_branch
      %2921 = sbr.rel (0) target = $region73
    $region72: #{tpu_custom_call.1} parent=1 // pred_region
      %s2923 = ssub.s32 64, 64
      %2924 = vsyncadd [#allocation11], %s2923
      %s2925 = sshll.u32 [#allocation12], 4
      %s2926 = int_to_ptr.vmem [resolvable:$true] %s2925
      %2931 = dma.vmem_to_hbm [thread:$0]  %s2926, 64, %s14, [#allocation11], 32, 32, 2
    $region73: #{tpu_custom_call.1} parent=1 // pred_fallthru
      _
    // Predicated region
    $region74: #{tpu_custom_call.1} parent=1 // pred_check
      _
    $region75: #{tpu_custom_call.1} parent=1 // pred_check_branch
      %2933 = sbr.rel (0) target = $region77
    $region76: #{tpu_custom_call.1} parent=1 // pred_region
      %2934 = dma.done [#allocation5], 32
    $region77: #{tpu_custom_call.1} parent=1 // pred_fallthru
      _
    // Predicated region
    $region78: #{tpu_custom_call.1} parent=1 // pred_check
      _
    $region79: #{tpu_custom_call.1} parent=1 // pred_check_branch
      %2936 = sbr.rel (0) target = $region81
    $region80: #{tpu_custom_call.1} parent=1 // pred_region
      %2937 = dma.done [#allocation11], 64
    $region81: #{tpu_custom_call.1} parent=1 // pred_fallthru
      _
    // Predicated region
    $region82: #{tpu_custom_call.1} parent=1 // pred_check
      _
    $region83: #{tpu_custom_call.1} parent=1 // pred_check_branch
      %2939 = sbr.rel (0) target = $region85
    $region84: #{tpu_custom_call.1} parent=1 // pred_region
      %2940 = dma.done [#allocation11], 64
    $region85: #{tpu_custom_call.1} parent=1 // pred_fallthru
      _
    %2941 = vsyncpa [#allocation4], 1
    %2942 = vsyncpa [#allocation7], 1
    %2943 = vsyncpa [#allocation5], 1
    %2944 = vsyncpa [#allocation11], 1

</llo_original>
